<compile_context>
chip_gen: v5e
topology: v5e:2x2
jax: 0.10.0
libtpu: 0.0.40
codegen_flags: <defaults>
</compile_context>

<pallas_src>
import numpy as np
import jax
import jax.numpy as jnp
from jax import lax
from jax.experimental import pallas as pl
from jax.experimental.pallas import tpu as pltpu

# Physics constants from the module's __init__ / forward.
KD = 0.18            # self.kd
G = 9.8015           # self.g
DT = 1e-4            # delta_t
KD_DT = KD * DT      # folded: drag coefficient per step
G_DT = G * DT        # folded: gravity impulse per step
FINAL_Y = 3.0        # self.final_y
BOUNCE_Z = 0.0205    # bounce_check threshold
FLOOR_Z = 0.01985    # post-bounce stop threshold
# bounce_check linear velocity map
BCX, BOX = 0.648819, 0.010491
BCY, BOY = 0.64355, 0.024064
BCZ, BOZ = -0.807392, 0.46811

CHUNK = 8            # predicated steps per while-cond evaluation (review opt #1)


def _make_step(cap, inc_at_top, bpx, bpy, bpz):
    """One fully predicated Euler step.

    State (all scalars):
      (px, py, pz, vx, vy, vz, bounced, cnt, blsq, done, t_re)
    cap         : cnt limit for this phase (10000 or 13000)
    inc_at_top  : phase-2 style loop (`cnt += 1` at the loop top)
    bpx/bpy/bpz : bounce point components (closed over)

    Every update is gated on the incoming `done` flag so that frozen
    (post-stop) steps inside an unrolled chunk are exact no-ops.
    """

    def step(st):
        px, py, pz, vx, vy, vz, bounced, cnt, blsq, done, t_re = st
        not_done = jnp.logical_not(done)

        if inc_at_top:                         # `cnt = cnt + 1` at loop top
            cnt = jnp.where(not_done, cnt + 1, cnt)
        cap_hit = jnp.logical_and(not_done, cnt > cap)   # `if cnt > cap: break`
        active = jnp.logical_and(not_done, jnp.logical_not(cap_hit))

        # |v| for the drag term.  TODO(synk): if the bundle dump shows this
        # sqrt expanding to rsqrt + refinement, switch to vsq * lax.rsqrt(vsq).
        v_value = jnp.sqrt(vx * vx + vy * vy + vz * vz)

        # bounce_check: only before the first bounce, when z < 0.0205
        do_bounce = jnp.logical_and(jnp.logical_not(bounced), pz < BOUNCE_Z)
        bounce = jnp.logical_and(active, do_bounce)
        rest = jnp.logical_and(active, jnp.logical_not(do_bounce))
        stop = jnp.logical_and(
            rest,
            jnp.logical_or(py > FINAL_Y,                       # end_check
                           jnp.logical_and(bounced, pz < FLOOR_Z)))
        integ = jnp.logical_and(rest, jnp.logical_not(stop))

        # update_pos / update_v (maskd == [1,1,1]; the spin term is commented
        # out in the reference module, so only drag + gravity).  Single drag
        # factor shortens the v -> sqrt -> v serial chain.
        drag = 1.0 - KD_DT * v_value
        npx = px + vx * DT
        npy = py + vy * DT
        npz = pz + vz * DT
        nvx = vx * drag
        nvy = vy * drag
        nvz = vz * drag - G_DT

        # squared bounce loss; sqrt deferred until after all loops
        dbx = bpx - px
        dby = bpy - py
        dbz = bpz - pz
        nblsq = dbx * dbx + dby * dby + dbz * dbz

        px = jnp.where(integ, npx, px)
        py = jnp.where(integ, npy, py)
        pz = jnp.where(integ, npz, pz)
        vx = jnp.where(bounce, BCX * vx + BOX, jnp.where(integ, nvx, vx))
        vy = jnp.where(bounce, BCY * vy + BOY, jnp.where(integ, nvy, vy))
        vz = jnp.where(bounce, BCZ * vz + BOZ, jnp.where(integ, nvz, vz))
        blsq = jnp.where(bounce, nblsq, blsq)
        bounced = jnp.logical_or(bounced, bounce)
        cnt = cnt + jnp.where(jnp.logical_or(bounce, integ), 1, 0)
        done = jnp.logical_or(done, jnp.logical_or(cap_hit, stop))
        t_re = jnp.logical_or(t_re, cap_hit)
        return (px, py, pz, vx, vy, vz, bounced, cnt, blsq, done, t_re)

    return step


def _run_phase(st, cap, inc_at_top, bpx, bpy, bpz):
    """Outer while_loop over CHUNK-step unrolled, done-gated inner loops.

    Zero chunks execute when `done` starts True (T_Re-off / already-bounced
    phases cost nothing); the while condition is only checked every CHUNK
    steps, removing the dominant per-iteration branch/predicate stall.
    """
    step = _make_step(cap, inc_at_top, bpx, bpy, bpz)

    def chunk_body(s):
        return lax.fori_loop(0, CHUNK, lambda _, ss: step(ss), s, unroll=True)

    def cond(s):
        return jnp.logical_not(s[9])           # run while not done

    return lax.while_loop(cond, chunk_body, st)


def _sim_kernel(p_ref, out_ref):
    # p_ref: SMEM-resident flat float32[16] parameter block:
    #   [0:3]   initial position (polyfit curve @ index 15)
    #   [3:6]   initial velocity
    #   [6:9]   bounce point (lowest observed z)
    #   [9:12]  gt position (last observation)
    #   [12:15] reset position (first observation, used on T_Re)
    #   [15]    gt time
    px0, py0, pz0 = p_ref[0], p_ref[1], p_ref[2]
    vx0, vy0, vz0 = p_ref[3], p_ref[4], p_ref[5]
    bpx, bpy, bpz = p_ref[6], p_ref[7], p_ref[8]
    gx, gy, gz = p_ref[9], p_ref[10], p_ref[11]
    rx, ry, rz = p_ref[12], p_ref[13], p_ref[14]
    gt_time = p_ref[15]

    f0 = jnp.float32(0.0)
    i0 = jnp.int32(0)
    false = jnp.asarray(False)

    # ---- phase 1: main integration loop (cap 10000; cap hit sets T_Re) ----
    st = (px0, py0, pz0, vx0, vy0, vz0, false, i0, f0, false, false)
    st = _run_phase(st, 10000, False, bpx, bpy, bpz)
    px, py, pz, vx, vy, vz, bounced, cnt, blsq, _, t_re = st

    # ---- phase 2: T_Re restart from the first observed point (cap 13000) ----
    # Zero iterations when T_Re did not trigger (done starts True).
    px = jnp.where(t_re, rx, px)
    py = jnp.where(t_re, ry, py)
    pz = jnp.where(t_re, rz, pz)
    vx = jnp.where(t_re, vx0, vx)
    vy = jnp.where(t_re, vy0, vy)
    vz = jnp.where(t_re, vz0, vz)
    bounced = jnp.where(t_re, False, bounced)
    cnt = jnp.where(t_re, i0, cnt)
    st = (px, py, pz, vx, vy, vz, bounced, cnt, blsq,
          jnp.logical_not(t_re), false)
    st = _run_phase(st, 13000, True, bpx, bpy, bpz)
    px, py, pz, vx, vy, vz, bounced, cnt, blsq, _, _ = st

    # ---- phase 3: `while have_bounced == False:` fallback (y := 2.7) ----
    # Zero iterations when a bounce already happened.
    # TODO(synk): the reference outer while-loop can spin forever when no
    # bounce ever occurs; we execute a single pass of it.
    need = jnp.logical_not(bounced)
    py = jnp.where(need, 2.7, py)
    st = (px, py, pz, vx, vy, vz, bounced, cnt, blsq, bounced, false)
    st = _run_phase(st, 10000, False, bpx, bpy, bpz)
    px, py, pz, vx, vy, vz, bounced, cnt, blsq, _, _ = st

    dhx = px - gx
    dhy = py - gy
    dhz = pz - gz
    out_ref[0] = jnp.sqrt(dhx * dhx + dhy * dhy + dhz * dhz)        # hit_loss
    out_ref[1] = jnp.sqrt(blsq)                                     # bounce_loss
    out_ref[2] = jnp.abs(cnt.astype(jnp.float32) * DT - gt_time)    # |time_loss|


_sim_call = pl.pallas_call(
    _sim_kernel,
    out_shape=jax.ShapeDtypeStruct((3,), jnp.float32),
    in_specs=[pl.BlockSpec(memory_space=pltpu.MemorySpace.SMEM)],
    out_specs=pl.BlockSpec(memory_space=pltpu.MemorySpace.SMEM),
)


def adaptive_para_pingpong(inp):
    """Forward pass of Adaptive_Para_Pingpong.

    inp: (N, 4) float array, columns = (t, x, y, z), N >= 8.
    Returns (hit_loss, bounce_loss, abs(time_loss)) as float32 scalars.
    """
    a = np.asarray(inp, dtype=np.float64)
    t, x, y, z = a[:, 0], a[:, 1], a[:, 2], a[:, 3]

    # bounce point = first minimum of z (strict `<` scan in the reference)
    bid = int(np.argmin(z))
    bounce_point = np.array([x[bid], y[bid], z[bid]])

    poly_dim, sample_nums = 3, 8
    tmp_t = np.linspace(t[0], t[sample_nums - 1], 30)

    # cubic position fits (only index 15 of the predicted curve is used)
    p_x_pre = np.polyval(np.polyfit(t[:sample_nums], x[:sample_nums], poly_dim), tmp_t)
    p_y_pre = np.polyval(np.polyfit(t[:sample_nums], y[:sample_nums], poly_dim), tmp_t)
    p_z_pre = np.polyval(np.polyfit(t[:sample_nums], z[:sample_nums], poly_dim), tmp_t)
    last_pos = np.array([p_x_pre[15], p_y_pre[15], p_z_pre[15]])

    # initial velocities (these override the earlier poly-derivative estimates)
    vx = np.polyfit(t[:8], x[:8], 1)[0]
    vy = np.polyfit(t[:8], y[:8], 1)[0]
    pz_fit = np.polyfit(t[:8], z[:8], 2)
    vz = np.polyval(pz_fit.T[:poly_dim - 1] * np.array(range(2, 0, -1), dtype=float), t[4])
    last_v = np.array([vx, vy, vz])

    # TODO(synk): the wx/wy/wz spin estimation block (with its invalid 3-arg
    # torch.min/torch.max calls) is dead code w.r.t. the dynamics (the spin
    # term in update_v is commented out), so it is skipped here.
    # TODO(synk): the matplotlib Axes3D scatter plot has no Pallas equivalent.

    gt_pos = np.array([x[-1], y[-1], z[-1]])
    gt_time = t[-1]
    reset_pos = np.array([x[0], y[0], z[0]])

    params = np.zeros((16,), dtype=np.float32)
    params[0:3] = last_pos
    params[3:6] = last_v
    params[6:9] = bounce_point
    params[9:12] = gt_pos
    params[12:15] = reset_pos
    params[15] = gt_time

    out = _sim_call(jnp.asarray(params))
    return out[0], out[1], out[2]


if __name__ == "__main__":
    key = jax.random.PRNGKey(0)
    n = 16
    t = jnp.linspace(0.0, 0.45, n)
    # synthetic ping-pong trajectory: drifts in +y toward final_y, falls under g
    x = 0.1 * t
    y = -0.5 + 4.0 * t
    z = 0.30 + 1.0 * t - 0.5 * 9.8015 * t ** 2
    inp = jnp.stack([t, x, y, z], axis=1).astype(jnp.float32)
    noise = 1e-3 * jax.random.normal(key, (n, 3), dtype=jnp.float32)
    inp = inp.at[:, 1:].add(noise)

    hit_loss, bounce_loss, time_loss = adaptive_para_pingpong(inp)
    jax.block_until_ready((hit_loss, bounce_loss, time_loss))
    print("KERNEL_OK")
</pallas_src>

<mosaic_0001>
module attributes {stable_mosaic.version = 11 : i64} {
  func.func @_sim_kernel(%arg0: memref<16xf32, #tpu.memory_space<smem>>, %arg1: memref<3xf32, #tpu.memory_space<smem>>) attributes {dimension_semantics = [], scalar_prefetch = 0 : i64, scratch_operands = 0 : i64, tpu.core_type = #tpu.core_type<tc>} {
    %c0 = arith.constant 0 : index
    %0 = memref.load %arg0[%c0] : memref<16xf32, #tpu.memory_space<smem>>
    %c1 = arith.constant 1 : index
    %1 = memref.load %arg0[%c1] : memref<16xf32, #tpu.memory_space<smem>>
    %c2 = arith.constant 2 : index
    %2 = memref.load %arg0[%c2] : memref<16xf32, #tpu.memory_space<smem>>
    %c3 = arith.constant 3 : index
    %3 = memref.load %arg0[%c3] : memref<16xf32, #tpu.memory_space<smem>>
    %c4 = arith.constant 4 : index
    %4 = memref.load %arg0[%c4] : memref<16xf32, #tpu.memory_space<smem>>
    %c5 = arith.constant 5 : index
    %5 = memref.load %arg0[%c5] : memref<16xf32, #tpu.memory_space<smem>>
    %c6 = arith.constant 6 : index
    %6 = memref.load %arg0[%c6] : memref<16xf32, #tpu.memory_space<smem>>
    %c7 = arith.constant 7 : index
    %7 = memref.load %arg0[%c7] : memref<16xf32, #tpu.memory_space<smem>>
    %c8 = arith.constant 8 : index
    %8 = memref.load %arg0[%c8] : memref<16xf32, #tpu.memory_space<smem>>
    %c9 = arith.constant 9 : index
    %9 = memref.load %arg0[%c9] : memref<16xf32, #tpu.memory_space<smem>>
    %c10 = arith.constant 10 : index
    %10 = memref.load %arg0[%c10] : memref<16xf32, #tpu.memory_space<smem>>
    %c11 = arith.constant 11 : index
    %11 = memref.load %arg0[%c11] : memref<16xf32, #tpu.memory_space<smem>>
    %c12 = arith.constant 12 : index
    %12 = memref.load %arg0[%c12] : memref<16xf32, #tpu.memory_space<smem>>
    %c13 = arith.constant 13 : index
    %13 = memref.load %arg0[%c13] : memref<16xf32, #tpu.memory_space<smem>>
    %c14 = arith.constant 14 : index
    %14 = memref.load %arg0[%c14] : memref<16xf32, #tpu.memory_space<smem>>
    %c15 = arith.constant 15 : index
    %15 = memref.load %arg0[%c15] : memref<16xf32, #tpu.memory_space<smem>>
    %false = arith.constant false
    %c0_i32 = arith.constant 0 : i32
    %cst = arith.constant 0.000000e+00 : f32
    %false_0 = arith.constant false
    %false_1 = arith.constant false
    %16:11 = scf.while (%arg2 = %0, %arg3 = %1, %arg4 = %2, %arg5 = %3, %arg6 = %4, %arg7 = %5, %arg8 = %false, %arg9 = %c0_i32, %arg10 = %cst, %arg11 = %false_0, %arg12 = %false_1) : (f32, f32, f32, f32, f32, f32, i1, i32, f32, i1, i1) -> (f32, f32, f32, f32, f32, f32, i1, i32, f32, i1, i1) {
      %true_12 = arith.constant true
      %47 = arith.xori %arg11, %true_12 : i1
      scf.condition(%47) %arg2, %arg3, %arg4, %arg5, %arg6, %arg7, %arg8, %arg9, %arg10, %arg11, %arg12 : f32, f32, f32, f32, f32, f32, i1, i32, f32, i1, i1
    } do {
    ^bb0(%arg2: f32, %arg3: f32, %arg4: f32, %arg5: f32, %arg6: f32, %arg7: f32, %arg8: i1, %arg9: i32, %arg10: f32, %arg11: i1, %arg12: i1):
      %c0_i32_12 = arith.constant 0 : i32
      %true_13 = arith.constant true
      %47 = arith.xori %arg11, %true_13 : i1
      %c10000_i32 = arith.constant 10000 : i32
      %48 = arith.cmpi sgt, %arg9, %c10000_i32 : i32
      %49 = arith.andi %47, %48 : i1
      %true_14 = arith.constant true
      %50 = arith.xori %49, %true_14 : i1
      %51 = arith.andi %47, %50 : i1
      %52 = arith.mulf %arg5, %arg5 : f32
      %53 = arith.mulf %arg6, %arg6 : f32
      %54 = arith.addf %52, %53 : f32
      %55 = arith.mulf %arg7, %arg7 : f32
      %56 = arith.addf %54, %55 : f32
      %57 = math.sqrt %56 : f32
      %true_15 = arith.constant true
      %58 = arith.xori %arg8, %true_15 : i1
      %cst_16 = arith.constant 2.050000e-02 : f32
      %59 = arith.cmpf olt, %arg4, %cst_16 : f32
      %60 = arith.andi %58, %59 : i1
      %61 = arith.andi %51, %60 : i1
      %true_17 = arith.constant true
      %62 = arith.xori %60, %true_17 : i1
      %63 = arith.andi %51, %62 : i1
      %cst_18 = arith.constant 3.000000e+00 : f32
      %64 = arith.cmpf ogt, %arg3, %cst_18 : f32
      %cst_19 = arith.constant 1.985000e-02 : f32
      %65 = arith.cmpf olt, %arg4, %cst_19 : f32
      %66 = arith.andi %arg8, %65 : i1
      %67 = arith.ori %64, %66 : i1
      %68 = arith.andi %63, %67 : i1
      %true_20 = arith.constant true
      %69 = arith.xori %68, %true_20 : i1
      %70 = arith.andi %63, %69 : i1
      %cst_21 = arith.constant 1.800000e-05 : f32
      %71 = arith.mulf %cst_21, %57 : f32
      %cst_22 = arith.constant 1.000000e+00 : f32
      %72 = arith.subf %cst_22, %71 : f32
      %cst_23 = arith.constant 9.99999974E-5 : f32
      %73 = arith.mulf %arg5, %cst_23 : f32
      %74 = arith.addf %arg2, %73 : f32
      %cst_24 = arith.constant 9.99999974E-5 : f32
      %75 = arith.mulf %arg6, %cst_24 : f32
      %76 = arith.addf %arg3, %75 : f32
      %cst_25 = arith.constant 9.99999974E-5 : f32
      %77 = arith.mulf %arg7, %cst_25 : f32
      %78 = arith.addf %arg4, %77 : f32
      %79 = arith.mulf %arg5, %72 : f32
      %80 = arith.mulf %arg6, %72 : f32
      %81 = arith.mulf %arg7, %72 : f32
      %cst_26 = arith.constant 9.80149954E-4 : f32
      %82 = arith.subf %81, %cst_26 : f32
      %83 = arith.subf %6, %arg2 : f32
      %84 = arith.subf %7, %arg3 : f32
      %85 = arith.subf %8, %arg4 : f32
      %86 = arith.mulf %83, %83 : f32
      %87 = arith.mulf %84, %84 : f32
      %88 = arith.addf %86, %87 : f32
      %89 = arith.mulf %85, %85 : f32
      %90 = arith.addf %88, %89 : f32
      %91 = arith.select %70, %74, %arg2 : f32
      %92 = arith.select %70, %76, %arg3 : f32
      %93 = arith.select %70, %78, %arg4 : f32
      %cst_27 = arith.constant 6.488190e-01 : f32
      %94 = arith.mulf %cst_27, %arg5 : f32
      %cst_28 = arith.constant 1.049100e-02 : f32
      %95 = arith.addf %94, %cst_28 : f32
      %96 = arith.select %70, %79, %arg5 : f32
      %97 = arith.select %61, %95, %96 : f32
      %cst_29 = arith.constant 0.643549978 : f32
      %98 = arith.mulf %cst_29, %arg6 : f32
      %cst_30 = arith.constant 2.406400e-02 : f32
      %99 = arith.addf %98, %cst_30 : f32
      %100 = arith.select %70, %80, %arg6 : f32
      %101 = arith.select %61, %99, %100 : f32
      %cst_31 = arith.constant -8.073920e-01 : f32
      %102 = arith.mulf %cst_31, %arg7 : f32
      %cst_32 = arith.constant 4.681100e-01 : f32
      %103 = arith.addf %102, %cst_32 : f32
      %104 = arith.select %70, %82, %arg7 : f32
      %105 = arith.select %61, %103, %104 : f32
      %106 = arith.select %61, %90, %arg10 : f32
      %107 = arith.ori %arg8, %61 : i1
      %108 = arith.ori %61, %70 : i1
      %c1_i32 = arith.constant 1 : i32
      %c0_i32_33 = arith.constant 0 : i32
      %109 = arith.select %108, %c1_i32, %c0_i32_33 : i32
      %110 = arith.addi %arg9, %109 : i32
      %111 = arith.ori %49, %68 : i1
      %112 = arith.ori %arg11, %111 : i1
      %113 = arith.ori %arg12, %49 : i1
      %c1_i32_34 = arith.constant 1 : i32
      %true_35 = arith.constant true
      %114 = arith.xori %112, %true_35 : i1
      %c10000_i32_36 = arith.constant 10000 : i32
      %115 = arith.cmpi sgt, %110, %c10000_i32_36 : i32
      %116 = arith.andi %114, %115 : i1
      %true_37 = arith.constant true
      %117 = arith.xori %116, %true_37 : i1
      %118 = arith.andi %114, %117 : i1
      %119 = arith.mulf %97, %97 : f32
      %120 = arith.mulf %101, %101 : f32
      %121 = arith.addf %119, %120 : f32
      %122 = arith.mulf %105, %105 : f32
      %123 = arith.addf %121, %122 : f32
      %124 = math.sqrt %123 : f32
      %true_38 = arith.constant true
      %125 = arith.xori %107, %true_38 : i1
      %cst_39 = arith.constant 2.050000e-02 : f32
      %126 = arith.cmpf olt, %93, %cst_39 : f32
      %127 = arith.andi %125, %126 : i1
      %128 = arith.andi %118, %127 : i1
      %true_40 = arith.constant true
      %129 = arith.xori %127, %true_40 : i1
      %130 = arith.andi %118, %129 : i1
      %cst_41 = arith.constant 3.000000e+00 : f32
      %131 = arith.cmpf ogt, %92, %cst_41 : f32
      %cst_42 = arith.constant 1.985000e-02 : f32
      %132 = arith.cmpf olt, %93, %cst_42 : f32
      %133 = arith.andi %107, %132 : i1
      %134 = arith.ori %131, %133 : i1
      %135 = arith.andi %130, %134 : i1
      %true_43 = arith.constant true
      %136 = arith.xori %135, %true_43 : i1
      %137 = arith.andi %130, %136 : i1
      %cst_44 = arith.constant 1.800000e-05 : f32
      %138 = arith.mulf %cst_44, %124 : f32
      %cst_45 = arith.constant 1.000000e+00 : f32
      %139 = arith.subf %cst_45, %138 : f32
      %cst_46 = arith.constant 9.99999974E-5 : f32
      %140 = arith.mulf %97, %cst_46 : f32
      %141 = arith.addf %91, %140 : f32
      %cst_47 = arith.constant 9.99999974E-5 : f32
      %142 = arith.mulf %101, %cst_47 : f32
      %143 = arith.addf %92, %142 : f32
      %cst_48 = arith.constant 9.99999974E-5 : f32
      %144 = arith.mulf %105, %cst_48 : f32
      %145 = arith.addf %93, %144 : f32
      %146 = arith.mulf %97, %139 : f32
      %147 = arith.mulf %101, %139 : f32
      %148 = arith.mulf %105, %139 : f32
      %cst_49 = arith.constant 9.80149954E-4 : f32
      %149 = arith.subf %148, %cst_49 : f32
      %150 = arith.subf %6, %91 : f32
      %151 = arith.subf %7, %92 : f32
      %152 = arith.subf %8, %93 : f32
      %153 = arith.mulf %150, %150 : f32
      %154 = arith.mulf %151, %151 : f32
      %155 = arith.addf %153, %154 : f32
      %156 = arith.mulf %152, %152 : f32
      %157 = arith.addf %155, %156 : f32
      %158 = arith.select %137, %141, %91 : f32
      %159 = arith.select %137, %143, %92 : f32
      %160 = arith.select %137, %145, %93 : f32
      %cst_50 = arith.constant 6.488190e-01 : f32
      %161 = arith.mulf %cst_50, %97 : f32
      %cst_51 = arith.constant 1.049100e-02 : f32
      %162 = arith.addf %161, %cst_51 : f32
      %163 = arith.select %137, %146, %97 : f32
      %164 = arith.select %128, %162, %163 : f32
      %cst_52 = arith.constant 0.643549978 : f32
      %165 = arith.mulf %cst_52, %101 : f32
      %cst_53 = arith.constant 2.406400e-02 : f32
      %166 = arith.addf %165, %cst_53 : f32
      %167 = arith.select %137, %147, %101 : f32
      %168 = arith.select %128, %166, %167 : f32
      %cst_54 = arith.constant -8.073920e-01 : f32
      %169 = arith.mulf %cst_54, %105 : f32
      %cst_55 = arith.constant 4.681100e-01 : f32
      %170 = arith.addf %169, %cst_55 : f32
      %171 = arith.select %137, %149, %105 : f32
      %172 = arith.select %128, %170, %171 : f32
      %173 = arith.select %128, %157, %106 : f32
      %174 = arith.ori %107, %128 : i1
      %175 = arith.ori %128, %137 : i1
      %c1_i32_56 = arith.constant 1 : i32
      %c0_i32_57 = arith.constant 0 : i32
      %176 = arith.select %175, %c1_i32_56, %c0_i32_57 : i32
      %177 = arith.addi %110, %176 : i32
      %178 = arith.ori %116, %135 : i1
      %179 = arith.ori %112, %178 : i1
      %180 = arith.ori %113, %116 : i1
      %c2_i32 = arith.constant 2 : i32
      %true_58 = arith.constant true
      %181 = arith.xori %179, %true_58 : i1
      %c10000_i32_59 = arith.constant 10000 : i32
      %182 = arith.cmpi sgt, %177, %c10000_i32_59 : i32
      %183 = arith.andi %181, %182 : i1
      %true_60 = arith.constant true
      %184 = arith.xori %183, %true_60 : i1
      %185 = arith.andi %181, %184 : i1
      %186 = arith.mulf %164, %164 : f32
      %187 = arith.mulf %168, %168 : f32
      %188 = arith.addf %186, %187 : f32
      %189 = arith.mulf %172, %172 : f32
      %190 = arith.addf %188, %189 : f32
      %191 = math.sqrt %190 : f32
      %true_61 = arith.constant true
      %192 = arith.xori %174, %true_61 : i1
      %cst_62 = arith.constant 2.050000e-02 : f32
      %193 = arith.cmpf olt, %160, %cst_62 : f32
      %194 = arith.andi %192, %193 : i1
      %195 = arith.andi %185, %194 : i1
      %true_63 = arith.constant true
      %196 = arith.xori %194, %true_63 : i1
      %197 = arith.andi %185, %196 : i1
      %cst_64 = arith.constant 3.000000e+00 : f32
      %198 = arith.cmpf ogt, %159, %cst_64 : f32
      %cst_65 = arith.constant 1.985000e-02 : f32
      %199 = arith.cmpf olt, %160, %cst_65 : f32
      %200 = arith.andi %174, %199 : i1
      %201 = arith.ori %198, %200 : i1
      %202 = arith.andi %197, %201 : i1
      %true_66 = arith.constant true
      %203 = arith.xori %202, %true_66 : i1
      %204 = arith.andi %197, %203 : i1
      %cst_67 = arith.constant 1.800000e-05 : f32
      %205 = arith.mulf %cst_67, %191 : f32
      %cst_68 = arith.constant 1.000000e+00 : f32
      %206 = arith.subf %cst_68, %205 : f32
      %cst_69 = arith.constant 9.99999974E-5 : f32
      %207 = arith.mulf %164, %cst_69 : f32
      %208 = arith.addf %158, %207 : f32
      %cst_70 = arith.constant 9.99999974E-5 : f32
      %209 = arith.mulf %168, %cst_70 : f32
      %210 = arith.addf %159, %209 : f32
      %cst_71 = arith.constant 9.99999974E-5 : f32
      %211 = arith.mulf %172, %cst_71 : f32
      %212 = arith.addf %160, %211 : f32
      %213 = arith.mulf %164, %206 : f32
      %214 = arith.mulf %168, %206 : f32
      %215 = arith.mulf %172, %206 : f32
      %cst_72 = arith.constant 9.80149954E-4 : f32
      %216 = arith.subf %215, %cst_72 : f32
      %217 = arith.subf %6, %158 : f32
      %218 = arith.subf %7, %159 : f32
      %219 = arith.subf %8, %160 : f32
      %220 = arith.mulf %217, %217 : f32
      %221 = arith.mulf %218, %218 : f32
      %222 = arith.addf %220, %221 : f32
      %223 = arith.mulf %219, %219 : f32
      %224 = arith.addf %222, %223 : f32
      %225 = arith.select %204, %208, %158 : f32
      %226 = arith.select %204, %210, %159 : f32
      %227 = arith.select %204, %212, %160 : f32
      %cst_73 = arith.constant 6.488190e-01 : f32
      %228 = arith.mulf %cst_73, %164 : f32
      %cst_74 = arith.constant 1.049100e-02 : f32
      %229 = arith.addf %228, %cst_74 : f32
      %230 = arith.select %204, %213, %164 : f32
      %231 = arith.select %195, %229, %230 : f32
      %cst_75 = arith.constant 0.643549978 : f32
      %232 = arith.mulf %cst_75, %168 : f32
      %cst_76 = arith.constant 2.406400e-02 : f32
      %233 = arith.addf %232, %cst_76 : f32
      %234 = arith.select %204, %214, %168 : f32
      %235 = arith.select %195, %233, %234 : f32
      %cst_77 = arith.constant -8.073920e-01 : f32
      %236 = arith.mulf %cst_77, %172 : f32
      %cst_78 = arith.constant 4.681100e-01 : f32
      %237 = arith.addf %236, %cst_78 : f32
      %238 = arith.select %204, %216, %172 : f32
      %239 = arith.select %195, %237, %238 : f32
      %240 = arith.select %195, %224, %173 : f32
      %241 = arith.ori %174, %195 : i1
      %242 = arith.ori %195, %204 : i1
      %c1_i32_79 = arith.constant 1 : i32
      %c0_i32_80 = arith.constant 0 : i32
      %243 = arith.select %242, %c1_i32_79, %c0_i32_80 : i32
      %244 = arith.addi %177, %243 : i32
      %245 = arith.ori %183, %202 : i1
      %246 = arith.ori %179, %245 : i1
      %247 = arith.ori %180, %183 : i1
      %c3_i32 = arith.constant 3 : i32
      %true_81 = arith.constant true
      %248 = arith.xori %246, %true_81 : i1
      %c10000_i32_82 = arith.constant 10000 : i32
      %249 = arith.cmpi sgt, %244, %c10000_i32_82 : i32
      %250 = arith.andi %248, %249 : i1
      %true_83 = arith.constant true
      %251 = arith.xori %250, %true_83 : i1
      %252 = arith.andi %248, %251 : i1
      %253 = arith.mulf %231, %231 : f32
      %254 = arith.mulf %235, %235 : f32
      %255 = arith.addf %253, %254 : f32
      %256 = arith.mulf %239, %239 : f32
      %257 = arith.addf %255, %256 : f32
      %258 = math.sqrt %257 : f32
      %true_84 = arith.constant true
      %259 = arith.xori %241, %true_84 : i1
      %cst_85 = arith.constant 2.050000e-02 : f32
      %260 = arith.cmpf olt, %227, %cst_85 : f32
      %261 = arith.andi %259, %260 : i1
      %262 = arith.andi %252, %261 : i1
      %true_86 = arith.constant true
      %263 = arith.xori %261, %true_86 : i1
      %264 = arith.andi %252, %263 : i1
      %cst_87 = arith.constant 3.000000e+00 : f32
      %265 = arith.cmpf ogt, %226, %cst_87 : f32
      %cst_88 = arith.constant 1.985000e-02 : f32
      %266 = arith.cmpf olt, %227, %cst_88 : f32
      %267 = arith.andi %241, %266 : i1
      %268 = arith.ori %265, %267 : i1
      %269 = arith.andi %264, %268 : i1
      %true_89 = arith.constant true
      %270 = arith.xori %269, %true_89 : i1
      %271 = arith.andi %264, %270 : i1
      %cst_90 = arith.constant 1.800000e-05 : f32
      %272 = arith.mulf %cst_90, %258 : f32
      %cst_91 = arith.constant 1.000000e+00 : f32
      %273 = arith.subf %cst_91, %272 : f32
      %cst_92 = arith.constant 9.99999974E-5 : f32
      %274 = arith.mulf %231, %cst_92 : f32
      %275 = arith.addf %225, %274 : f32
      %cst_93 = arith.constant 9.99999974E-5 : f32
      %276 = arith.mulf %235, %cst_93 : f32
      %277 = arith.addf %226, %276 : f32
      %cst_94 = arith.constant 9.99999974E-5 : f32
      %278 = arith.mulf %239, %cst_94 : f32
      %279 = arith.addf %227, %278 : f32
      %280 = arith.mulf %231, %273 : f32
      %281 = arith.mulf %235, %273 : f32
      %282 = arith.mulf %239, %273 : f32
      %cst_95 = arith.constant 9.80149954E-4 : f32
      %283 = arith.subf %282, %cst_95 : f32
      %284 = arith.subf %6, %225 : f32
      %285 = arith.subf %7, %226 : f32
      %286 = arith.subf %8, %227 : f32
      %287 = arith.mulf %284, %284 : f32
      %288 = arith.mulf %285, %285 : f32
      %289 = arith.addf %287, %288 : f32
      %290 = arith.mulf %286, %286 : f32
      %291 = arith.addf %289, %290 : f32
      %292 = arith.select %271, %275, %225 : f32
      %293 = arith.select %271, %277, %226 : f32
      %294 = arith.select %271, %279, %227 : f32
      %cst_96 = arith.constant 6.488190e-01 : f32
      %295 = arith.mulf %cst_96, %231 : f32
      %cst_97 = arith.constant 1.049100e-02 : f32
      %296 = arith.addf %295, %cst_97 : f32
      %297 = arith.select %271, %280, %231 : f32
      %298 = arith.select %262, %296, %297 : f32
      %cst_98 = arith.constant 0.643549978 : f32
      %299 = arith.mulf %cst_98, %235 : f32
      %cst_99 = arith.constant 2.406400e-02 : f32
      %300 = arith.addf %299, %cst_99 : f32
      %301 = arith.select %271, %281, %235 : f32
      %302 = arith.select %262, %300, %301 : f32
      %cst_100 = arith.constant -8.073920e-01 : f32
      %303 = arith.mulf %cst_100, %239 : f32
      %cst_101 = arith.constant 4.681100e-01 : f32
      %304 = arith.addf %303, %cst_101 : f32
      %305 = arith.select %271, %283, %239 : f32
      %306 = arith.select %262, %304, %305 : f32
      %307 = arith.select %262, %291, %240 : f32
      %308 = arith.ori %241, %262 : i1
      %309 = arith.ori %262, %271 : i1
      %c1_i32_102 = arith.constant 1 : i32
      %c0_i32_103 = arith.constant 0 : i32
      %310 = arith.select %309, %c1_i32_102, %c0_i32_103 : i32
      %311 = arith.addi %244, %310 : i32
      %312 = arith.ori %250, %269 : i1
      %313 = arith.ori %246, %312 : i1
      %314 = arith.ori %247, %250 : i1
      %c4_i32 = arith.constant 4 : i32
      %true_104 = arith.constant true
      %315 = arith.xori %313, %true_104 : i1
      %c10000_i32_105 = arith.constant 10000 : i32
      %316 = arith.cmpi sgt, %311, %c10000_i32_105 : i32
      %317 = arith.andi %315, %316 : i1
      %true_106 = arith.constant true
      %318 = arith.xori %317, %true_106 : i1
      %319 = arith.andi %315, %318 : i1
      %320 = arith.mulf %298, %298 : f32
      %321 = arith.mulf %302, %302 : f32
      %322 = arith.addf %320, %321 : f32
      %323 = arith.mulf %306, %306 : f32
      %324 = arith.addf %322, %323 : f32
      %325 = math.sqrt %324 : f32
      %true_107 = arith.constant true
      %326 = arith.xori %308, %true_107 : i1
      %cst_108 = arith.constant 2.050000e-02 : f32
      %327 = arith.cmpf olt, %294, %cst_108 : f32
      %328 = arith.andi %326, %327 : i1
      %329 = arith.andi %319, %328 : i1
      %true_109 = arith.constant true
      %330 = arith.xori %328, %true_109 : i1
      %331 = arith.andi %319, %330 : i1
      %cst_110 = arith.constant 3.000000e+00 : f32
      %332 = arith.cmpf ogt, %293, %cst_110 : f32
      %cst_111 = arith.constant 1.985000e-02 : f32
      %333 = arith.cmpf olt, %294, %cst_111 : f32
      %334 = arith.andi %308, %333 : i1
      %335 = arith.ori %332, %334 : i1
      %336 = arith.andi %331, %335 : i1
      %true_112 = arith.constant true
      %337 = arith.xori %336, %true_112 : i1
      %338 = arith.andi %331, %337 : i1
      %cst_113 = arith.constant 1.800000e-05 : f32
      %339 = arith.mulf %cst_113, %325 : f32
      %cst_114 = arith.constant 1.000000e+00 : f32
      %340 = arith.subf %cst_114, %339 : f32
      %cst_115 = arith.constant 9.99999974E-5 : f32
      %341 = arith.mulf %298, %cst_115 : f32
      %342 = arith.addf %292, %341 : f32
      %cst_116 = arith.constant 9.99999974E-5 : f32
      %343 = arith.mulf %302, %cst_116 : f32
      %344 = arith.addf %293, %343 : f32
      %cst_117 = arith.constant 9.99999974E-5 : f32
      %345 = arith.mulf %306, %cst_117 : f32
      %346 = arith.addf %294, %345 : f32
      %347 = arith.mulf %298, %340 : f32
      %348 = arith.mulf %302, %340 : f32
      %349 = arith.mulf %306, %340 : f32
      %cst_118 = arith.constant 9.80149954E-4 : f32
      %350 = arith.subf %349, %cst_118 : f32
      %351 = arith.subf %6, %292 : f32
      %352 = arith.subf %7, %293 : f32
      %353 = arith.subf %8, %294 : f32
      %354 = arith.mulf %351, %351 : f32
      %355 = arith.mulf %352, %352 : f32
      %356 = arith.addf %354, %355 : f32
      %357 = arith.mulf %353, %353 : f32
      %358 = arith.addf %356, %357 : f32
      %359 = arith.select %338, %342, %292 : f32
      %360 = arith.select %338, %344, %293 : f32
      %361 = arith.select %338, %346, %294 : f32
      %cst_119 = arith.constant 6.488190e-01 : f32
      %362 = arith.mulf %cst_119, %298 : f32
      %cst_120 = arith.constant 1.049100e-02 : f32
      %363 = arith.addf %362, %cst_120 : f32
      %364 = arith.select %338, %347, %298 : f32
      %365 = arith.select %329, %363, %364 : f32
      %cst_121 = arith.constant 0.643549978 : f32
      %366 = arith.mulf %cst_121, %302 : f32
      %cst_122 = arith.constant 2.406400e-02 : f32
      %367 = arith.addf %366, %cst_122 : f32
      %368 = arith.select %338, %348, %302 : f32
      %369 = arith.select %329, %367, %368 : f32
      %cst_123 = arith.constant -8.073920e-01 : f32
      %370 = arith.mulf %cst_123, %306 : f32
      %cst_124 = arith.constant 4.681100e-01 : f32
      %371 = arith.addf %370, %cst_124 : f32
      %372 = arith.select %338, %350, %306 : f32
      %373 = arith.select %329, %371, %372 : f32
      %374 = arith.select %329, %358, %307 : f32
      %375 = arith.ori %308, %329 : i1
      %376 = arith.ori %329, %338 : i1
      %c1_i32_125 = arith.constant 1 : i32
      %c0_i32_126 = arith.constant 0 : i32
      %377 = arith.select %376, %c1_i32_125, %c0_i32_126 : i32
      %378 = arith.addi %311, %377 : i32
      %379 = arith.ori %317, %336 : i1
      %380 = arith.ori %313, %379 : i1
      %381 = arith.ori %314, %317 : i1
      %c5_i32 = arith.constant 5 : i32
      %true_127 = arith.constant true
      %382 = arith.xori %380, %true_127 : i1
      %c10000_i32_128 = arith.constant 10000 : i32
      %383 = arith.cmpi sgt, %378, %c10000_i32_128 : i32
      %384 = arith.andi %382, %383 : i1
      %true_129 = arith.constant true
      %385 = arith.xori %384, %true_129 : i1
      %386 = arith.andi %382, %385 : i1
      %387 = arith.mulf %365, %365 : f32
      %388 = arith.mulf %369, %369 : f32
      %389 = arith.addf %387, %388 : f32
      %390 = arith.mulf %373, %373 : f32
      %391 = arith.addf %389, %390 : f32
      %392 = math.sqrt %391 : f32
      %true_130 = arith.constant true
      %393 = arith.xori %375, %true_130 : i1
      %cst_131 = arith.constant 2.050000e-02 : f32
      %394 = arith.cmpf olt, %361, %cst_131 : f32
      %395 = arith.andi %393, %394 : i1
      %396 = arith.andi %386, %395 : i1
      %true_132 = arith.constant true
      %397 = arith.xori %395, %true_132 : i1
      %398 = arith.andi %386, %397 : i1
      %cst_133 = arith.constant 3.000000e+00 : f32
      %399 = arith.cmpf ogt, %360, %cst_133 : f32
      %cst_134 = arith.constant 1.985000e-02 : f32
      %400 = arith.cmpf olt, %361, %cst_134 : f32
      %401 = arith.andi %375, %400 : i1
      %402 = arith.ori %399, %401 : i1
      %403 = arith.andi %398, %402 : i1
      %true_135 = arith.constant true
      %404 = arith.xori %403, %true_135 : i1
      %405 = arith.andi %398, %404 : i1
      %cst_136 = arith.constant 1.800000e-05 : f32
      %406 = arith.mulf %cst_136, %392 : f32
      %cst_137 = arith.constant 1.000000e+00 : f32
      %407 = arith.subf %cst_137, %406 : f32
      %cst_138 = arith.constant 9.99999974E-5 : f32
      %408 = arith.mulf %365, %cst_138 : f32
      %409 = arith.addf %359, %408 : f32
      %cst_139 = arith.constant 9.99999974E-5 : f32
      %410 = arith.mulf %369, %cst_139 : f32
      %411 = arith.addf %360, %410 : f32
      %cst_140 = arith.constant 9.99999974E-5 : f32
      %412 = arith.mulf %373, %cst_140 : f32
      %413 = arith.addf %361, %412 : f32
      %414 = arith.mulf %365, %407 : f32
      %415 = arith.mulf %369, %407 : f32
      %416 = arith.mulf %373, %407 : f32
      %cst_141 = arith.constant 9.80149954E-4 : f32
      %417 = arith.subf %416, %cst_141 : f32
      %418 = arith.subf %6, %359 : f32
      %419 = arith.subf %7, %360 : f32
      %420 = arith.subf %8, %361 : f32
      %421 = arith.mulf %418, %418 : f32
      %422 = arith.mulf %419, %419 : f32
      %423 = arith.addf %421, %422 : f32
      %424 = arith.mulf %420, %420 : f32
      %425 = arith.addf %423, %424 : f32
      %426 = arith.select %405, %409, %359 : f32
      %427 = arith.select %405, %411, %360 : f32
      %428 = arith.select %405, %413, %361 : f32
      %cst_142 = arith.constant 6.488190e-01 : f32
      %429 = arith.mulf %cst_142, %365 : f32
      %cst_143 = arith.constant 1.049100e-02 : f32
      %430 = arith.addf %429, %cst_143 : f32
      %431 = arith.select %405, %414, %365 : f32
      %432 = arith.select %396, %430, %431 : f32
      %cst_144 = arith.constant 0.643549978 : f32
      %433 = arith.mulf %cst_144, %369 : f32
      %cst_145 = arith.constant 2.406400e-02 : f32
      %434 = arith.addf %433, %cst_145 : f32
      %435 = arith.select %405, %415, %369 : f32
      %436 = arith.select %396, %434, %435 : f32
      %cst_146 = arith.constant -8.073920e-01 : f32
      %437 = arith.mulf %cst_146, %373 : f32
      %cst_147 = arith.constant 4.681100e-01 : f32
      %438 = arith.addf %437, %cst_147 : f32
      %439 = arith.select %405, %417, %373 : f32
      %440 = arith.select %396, %438, %439 : f32
      %441 = arith.select %396, %425, %374 : f32
      %442 = arith.ori %375, %396 : i1
      %443 = arith.ori %396, %405 : i1
      %c1_i32_148 = arith.constant 1 : i32
      %c0_i32_149 = arith.constant 0 : i32
      %444 = arith.select %443, %c1_i32_148, %c0_i32_149 : i32
      %445 = arith.addi %378, %444 : i32
      %446 = arith.ori %384, %403 : i1
      %447 = arith.ori %380, %446 : i1
      %448 = arith.ori %381, %384 : i1
      %c6_i32 = arith.constant 6 : i32
      %true_150 = arith.constant true
      %449 = arith.xori %447, %true_150 : i1
      %c10000_i32_151 = arith.constant 10000 : i32
      %450 = arith.cmpi sgt, %445, %c10000_i32_151 : i32
      %451 = arith.andi %449, %450 : i1
      %true_152 = arith.constant true
      %452 = arith.xori %451, %true_152 : i1
      %453 = arith.andi %449, %452 : i1
      %454 = arith.mulf %432, %432 : f32
      %455 = arith.mulf %436, %436 : f32
      %456 = arith.addf %454, %455 : f32
      %457 = arith.mulf %440, %440 : f32
      %458 = arith.addf %456, %457 : f32
      %459 = math.sqrt %458 : f32
      %true_153 = arith.constant true
      %460 = arith.xori %442, %true_153 : i1
      %cst_154 = arith.constant 2.050000e-02 : f32
      %461 = arith.cmpf olt, %428, %cst_154 : f32
      %462 = arith.andi %460, %461 : i1
      %463 = arith.andi %453, %462 : i1
      %true_155 = arith.constant true
      %464 = arith.xori %462, %true_155 : i1
      %465 = arith.andi %453, %464 : i1
      %cst_156 = arith.constant 3.000000e+00 : f32
      %466 = arith.cmpf ogt, %427, %cst_156 : f32
      %cst_157 = arith.constant 1.985000e-02 : f32
      %467 = arith.cmpf olt, %428, %cst_157 : f32
      %468 = arith.andi %442, %467 : i1
      %469 = arith.ori %466, %468 : i1
      %470 = arith.andi %465, %469 : i1
      %true_158 = arith.constant true
      %471 = arith.xori %470, %true_158 : i1
      %472 = arith.andi %465, %471 : i1
      %cst_159 = arith.constant 1.800000e-05 : f32
      %473 = arith.mulf %cst_159, %459 : f32
      %cst_160 = arith.constant 1.000000e+00 : f32
      %474 = arith.subf %cst_160, %473 : f32
      %cst_161 = arith.constant 9.99999974E-5 : f32
      %475 = arith.mulf %432, %cst_161 : f32
      %476 = arith.addf %426, %475 : f32
      %cst_162 = arith.constant 9.99999974E-5 : f32
      %477 = arith.mulf %436, %cst_162 : f32
      %478 = arith.addf %427, %477 : f32
      %cst_163 = arith.constant 9.99999974E-5 : f32
      %479 = arith.mulf %440, %cst_163 : f32
      %480 = arith.addf %428, %479 : f32
      %481 = arith.mulf %432, %474 : f32
      %482 = arith.mulf %436, %474 : f32
      %483 = arith.mulf %440, %474 : f32
      %cst_164 = arith.constant 9.80149954E-4 : f32
      %484 = arith.subf %483, %cst_164 : f32
      %485 = arith.subf %6, %426 : f32
      %486 = arith.subf %7, %427 : f32
      %487 = arith.subf %8, %428 : f32
      %488 = arith.mulf %485, %485 : f32
      %489 = arith.mulf %486, %486 : f32
      %490 = arith.addf %488, %489 : f32
      %491 = arith.mulf %487, %487 : f32
      %492 = arith.addf %490, %491 : f32
      %493 = arith.select %472, %476, %426 : f32
      %494 = arith.select %472, %478, %427 : f32
      %495 = arith.select %472, %480, %428 : f32
      %cst_165 = arith.constant 6.488190e-01 : f32
      %496 = arith.mulf %cst_165, %432 : f32
      %cst_166 = arith.constant 1.049100e-02 : f32
      %497 = arith.addf %496, %cst_166 : f32
      %498 = arith.select %472, %481, %432 : f32
      %499 = arith.select %463, %497, %498 : f32
      %cst_167 = arith.constant 0.643549978 : f32
      %500 = arith.mulf %cst_167, %436 : f32
      %cst_168 = arith.constant 2.406400e-02 : f32
      %501 = arith.addf %500, %cst_168 : f32
      %502 = arith.select %472, %482, %436 : f32
      %503 = arith.select %463, %501, %502 : f32
      %cst_169 = arith.constant -8.073920e-01 : f32
      %504 = arith.mulf %cst_169, %440 : f32
      %cst_170 = arith.constant 4.681100e-01 : f32
      %505 = arith.addf %504, %cst_170 : f32
      %506 = arith.select %472, %484, %440 : f32
      %507 = arith.select %463, %505, %506 : f32
      %508 = arith.select %463, %492, %441 : f32
      %509 = arith.ori %442, %463 : i1
      %510 = arith.ori %463, %472 : i1
      %c1_i32_171 = arith.constant 1 : i32
      %c0_i32_172 = arith.constant 0 : i32
      %511 = arith.select %510, %c1_i32_171, %c0_i32_172 : i32
      %512 = arith.addi %445, %511 : i32
      %513 = arith.ori %451, %470 : i1
      %514 = arith.ori %447, %513 : i1
      %515 = arith.ori %448, %451 : i1
      %c7_i32 = arith.constant 7 : i32
      %true_173 = arith.constant true
      %516 = arith.xori %514, %true_173 : i1
      %c10000_i32_174 = arith.constant 10000 : i32
      %517 = arith.cmpi sgt, %512, %c10000_i32_174 : i32
      %518 = arith.andi %516, %517 : i1
      %true_175 = arith.constant true
      %519 = arith.xori %518, %true_175 : i1
      %520 = arith.andi %516, %519 : i1
      %521 = arith.mulf %499, %499 : f32
      %522 = arith.mulf %503, %503 : f32
      %523 = arith.addf %521, %522 : f32
      %524 = arith.mulf %507, %507 : f32
      %525 = arith.addf %523, %524 : f32
      %526 = math.sqrt %525 : f32
      %true_176 = arith.constant true
      %527 = arith.xori %509, %true_176 : i1
      %cst_177 = arith.constant 2.050000e-02 : f32
      %528 = arith.cmpf olt, %495, %cst_177 : f32
      %529 = arith.andi %527, %528 : i1
      %530 = arith.andi %520, %529 : i1
      %true_178 = arith.constant true
      %531 = arith.xori %529, %true_178 : i1
      %532 = arith.andi %520, %531 : i1
      %cst_179 = arith.constant 3.000000e+00 : f32
      %533 = arith.cmpf ogt, %494, %cst_179 : f32
      %cst_180 = arith.constant 1.985000e-02 : f32
      %534 = arith.cmpf olt, %495, %cst_180 : f32
      %535 = arith.andi %509, %534 : i1
      %536 = arith.ori %533, %535 : i1
      %537 = arith.andi %532, %536 : i1
      %true_181 = arith.constant true
      %538 = arith.xori %537, %true_181 : i1
      %539 = arith.andi %532, %538 : i1
      %cst_182 = arith.constant 1.800000e-05 : f32
      %540 = arith.mulf %cst_182, %526 : f32
      %cst_183 = arith.constant 1.000000e+00 : f32
      %541 = arith.subf %cst_183, %540 : f32
      %cst_184 = arith.constant 9.99999974E-5 : f32
      %542 = arith.mulf %499, %cst_184 : f32
      %543 = arith.addf %493, %542 : f32
      %cst_185 = arith.constant 9.99999974E-5 : f32
      %544 = arith.mulf %503, %cst_185 : f32
      %545 = arith.addf %494, %544 : f32
      %cst_186 = arith.constant 9.99999974E-5 : f32
      %546 = arith.mulf %507, %cst_186 : f32
      %547 = arith.addf %495, %546 : f32
      %548 = arith.mulf %499, %541 : f32
      %549 = arith.mulf %503, %541 : f32
      %550 = arith.mulf %507, %541 : f32
      %cst_187 = arith.constant 9.80149954E-4 : f32
      %551 = arith.subf %550, %cst_187 : f32
      %552 = arith.subf %6, %493 : f32
      %553 = arith.subf %7, %494 : f32
      %554 = arith.subf %8, %495 : f32
      %555 = arith.mulf %552, %552 : f32
      %556 = arith.mulf %553, %553 : f32
      %557 = arith.addf %555, %556 : f32
      %558 = arith.mulf %554, %554 : f32
      %559 = arith.addf %557, %558 : f32
      %560 = arith.select %539, %543, %493 : f32
      %561 = arith.select %539, %545, %494 : f32
      %562 = arith.select %539, %547, %495 : f32
      %cst_188 = arith.constant 6.488190e-01 : f32
      %563 = arith.mulf %cst_188, %499 : f32
      %cst_189 = arith.constant 1.049100e-02 : f32
      %564 = arith.addf %563, %cst_189 : f32
      %565 = arith.select %539, %548, %499 : f32
      %566 = arith.select %530, %564, %565 : f32
      %cst_190 = arith.constant 0.643549978 : f32
      %567 = arith.mulf %cst_190, %503 : f32
      %cst_191 = arith.constant 2.406400e-02 : f32
      %568 = arith.addf %567, %cst_191 : f32
      %569 = arith.select %539, %549, %503 : f32
      %570 = arith.select %530, %568, %569 : f32
      %cst_192 = arith.constant -8.073920e-01 : f32
      %571 = arith.mulf %cst_192, %507 : f32
      %cst_193 = arith.constant 4.681100e-01 : f32
      %572 = arith.addf %571, %cst_193 : f32
      %573 = arith.select %539, %551, %507 : f32
      %574 = arith.select %530, %572, %573 : f32
      %575 = arith.select %530, %559, %508 : f32
      %576 = arith.ori %509, %530 : i1
      %577 = arith.ori %530, %539 : i1
      %c1_i32_194 = arith.constant 1 : i32
      %c0_i32_195 = arith.constant 0 : i32
      %578 = arith.select %577, %c1_i32_194, %c0_i32_195 : i32
      %579 = arith.addi %512, %578 : i32
      %580 = arith.ori %518, %537 : i1
      %581 = arith.ori %514, %580 : i1
      %582 = arith.ori %515, %518 : i1
      %c8_i32 = arith.constant 8 : i32
      scf.yield %560, %561, %562, %566, %570, %574, %576, %579, %575, %581, %582 : f32, f32, f32, f32, f32, f32, i1, i32, f32, i1, i1
    }
    %17 = arith.select %16#10, %12, %16#0 : f32
    %18 = arith.select %16#10, %13, %16#1 : f32
    %19 = arith.select %16#10, %14, %16#2 : f32
    %20 = arith.select %16#10, %3, %16#3 : f32
    %21 = arith.select %16#10, %4, %16#4 : f32
    %22 = arith.select %16#10, %5, %16#5 : f32
    %false_2 = arith.constant false
    %23 = arith.select %16#10, %false_2, %16#6 : i1
    %c0_i32_3 = arith.constant 0 : i32
    %24 = arith.select %16#10, %c0_i32_3, %16#7 : i32
    %true = arith.constant true
    %25 = arith.xori %16#10, %true : i1
    %false_4 = arith.constant false
    %26:11 = scf.while (%arg2 = %17, %arg3 = %18, %arg4 = %19, %arg5 = %20, %arg6 = %21, %arg7 = %22, %arg8 = %23, %arg9 = %24, %arg10 = %16#8, %arg11 = %25, %arg12 = %false_4) : (f32, f32, f32, f32, f32, f32, i1, i32, f32, i1, i1) -> (f32, f32, f32, f32, f32, f32, i1, i32, f32, i1, i1) {
      %true_12 = arith.constant true
      %47 = arith.xori %arg11, %true_12 : i1
      scf.condition(%47) %arg2, %arg3, %arg4, %arg5, %arg6, %arg7, %arg8, %arg9, %arg10, %arg11, %arg12 : f32, f32, f32, f32, f32, f32, i1, i32, f32, i1, i1
    } do {
    ^bb0(%arg2: f32, %arg3: f32, %arg4: f32, %arg5: f32, %arg6: f32, %arg7: f32, %arg8: i1, %arg9: i32, %arg10: f32, %arg11: i1, %arg12: i1):
      %c0_i32_12 = arith.constant 0 : i32
      %true_13 = arith.constant true
      %47 = arith.xori %arg11, %true_13 : i1
      %c1_i32 = arith.constant 1 : i32
      %48 = arith.addi %arg9, %c1_i32 : i32
      %49 = arith.select %47, %48, %arg9 : i32
      %c13000_i32 = arith.constant 13000 : i32
      %50 = arith.cmpi sgt, %49, %c13000_i32 : i32
      %51 = arith.andi %47, %50 : i1
      %true_14 = arith.constant true
      %52 = arith.xori %51, %true_14 : i1
      %53 = arith.andi %47, %52 : i1
      %54 = arith.mulf %arg5, %arg5 : f32
      %55 = arith.mulf %arg6, %arg6 : f32
      %56 = arith.addf %54, %55 : f32
      %57 = arith.mulf %arg7, %arg7 : f32
      %58 = arith.addf %56, %57 : f32
      %59 = math.sqrt %58 : f32
      %true_15 = arith.constant true
      %60 = arith.xori %arg8, %true_15 : i1
      %cst_16 = arith.constant 2.050000e-02 : f32
      %61 = arith.cmpf olt, %arg4, %cst_16 : f32
      %62 = arith.andi %60, %61 : i1
      %63 = arith.andi %53, %62 : i1
      %true_17 = arith.constant true
      %64 = arith.xori %62, %true_17 : i1
      %65 = arith.andi %53, %64 : i1
      %cst_18 = arith.constant 3.000000e+00 : f32
      %66 = arith.cmpf ogt, %arg3, %cst_18 : f32
      %cst_19 = arith.constant 1.985000e-02 : f32
      %67 = arith.cmpf olt, %arg4, %cst_19 : f32
      %68 = arith.andi %arg8, %67 : i1
      %69 = arith.ori %66, %68 : i1
      %70 = arith.andi %65, %69 : i1
      %true_20 = arith.constant true
      %71 = arith.xori %70, %true_20 : i1
      %72 = arith.andi %65, %71 : i1
      %cst_21 = arith.constant 1.800000e-05 : f32
      %73 = arith.mulf %cst_21, %59 : f32
      %cst_22 = arith.constant 1.000000e+00 : f32
      %74 = arith.subf %cst_22, %73 : f32
      %cst_23 = arith.constant 9.99999974E-5 : f32
      %75 = arith.mulf %arg5, %cst_23 : f32
      %76 = arith.addf %arg2, %75 : f32
      %cst_24 = arith.constant 9.99999974E-5 : f32
      %77 = arith.mulf %arg6, %cst_24 : f32
      %78 = arith.addf %arg3, %77 : f32
      %cst_25 = arith.constant 9.99999974E-5 : f32
      %79 = arith.mulf %arg7, %cst_25 : f32
      %80 = arith.addf %arg4, %79 : f32
      %81 = arith.mulf %arg5, %74 : f32
      %82 = arith.mulf %arg6, %74 : f32
      %83 = arith.mulf %arg7, %74 : f32
      %cst_26 = arith.constant 9.80149954E-4 : f32
      %84 = arith.subf %83, %cst_26 : f32
      %85 = arith.subf %6, %arg2 : f32
      %86 = arith.subf %7, %arg3 : f32
      %87 = arith.subf %8, %arg4 : f32
      %88 = arith.mulf %85, %85 : f32
      %89 = arith.mulf %86, %86 : f32
      %90 = arith.addf %88, %89 : f32
      %91 = arith.mulf %87, %87 : f32
      %92 = arith.addf %90, %91 : f32
      %93 = arith.select %72, %76, %arg2 : f32
      %94 = arith.select %72, %78, %arg3 : f32
      %95 = arith.select %72, %80, %arg4 : f32
      %cst_27 = arith.constant 6.488190e-01 : f32
      %96 = arith.mulf %cst_27, %arg5 : f32
      %cst_28 = arith.constant 1.049100e-02 : f32
      %97 = arith.addf %96, %cst_28 : f32
      %98 = arith.select %72, %81, %arg5 : f32
      %99 = arith.select %63, %97, %98 : f32
      %cst_29 = arith.constant 0.643549978 : f32
      %100 = arith.mulf %cst_29, %arg6 : f32
      %cst_30 = arith.constant 2.406400e-02 : f32
      %101 = arith.addf %100, %cst_30 : f32
      %102 = arith.select %72, %82, %arg6 : f32
      %103 = arith.select %63, %101, %102 : f32
      %cst_31 = arith.constant -8.073920e-01 : f32
      %104 = arith.mulf %cst_31, %arg7 : f32
      %cst_32 = arith.constant 4.681100e-01 : f32
      %105 = arith.addf %104, %cst_32 : f32
      %106 = arith.select %72, %84, %arg7 : f32
      %107 = arith.select %63, %105, %106 : f32
      %108 = arith.select %63, %92, %arg10 : f32
      %109 = arith.ori %arg8, %63 : i1
      %110 = arith.ori %63, %72 : i1
      %c1_i32_33 = arith.constant 1 : i32
      %c0_i32_34 = arith.constant 0 : i32
      %111 = arith.select %110, %c1_i32_33, %c0_i32_34 : i32
      %112 = arith.addi %49, %111 : i32
      %113 = arith.ori %51, %70 : i1
      %114 = arith.ori %arg11, %113 : i1
      %115 = arith.ori %arg12, %51 : i1
      %c1_i32_35 = arith.constant 1 : i32
      %true_36 = arith.constant true
      %116 = arith.xori %114, %true_36 : i1
      %c1_i32_37 = arith.constant 1 : i32
      %117 = arith.addi %112, %c1_i32_37 : i32
      %118 = arith.select %116, %117, %112 : i32
      %c13000_i32_38 = arith.constant 13000 : i32
      %119 = arith.cmpi sgt, %118, %c13000_i32_38 : i32
      %120 = arith.andi %116, %119 : i1
      %true_39 = arith.constant true
      %121 = arith.xori %120, %true_39 : i1
      %122 = arith.andi %116, %121 : i1
      %123 = arith.mulf %99, %99 : f32
      %124 = arith.mulf %103, %103 : f32
      %125 = arith.addf %123, %124 : f32
      %126 = arith.mulf %107, %107 : f32
      %127 = arith.addf %125, %126 : f32
      %128 = math.sqrt %127 : f32
      %true_40 = arith.constant true
      %129 = arith.xori %109, %true_40 : i1
      %cst_41 = arith.constant 2.050000e-02 : f32
      %130 = arith.cmpf olt, %95, %cst_41 : f32
      %131 = arith.andi %129, %130 : i1
      %132 = arith.andi %122, %131 : i1
      %true_42 = arith.constant true
      %133 = arith.xori %131, %true_42 : i1
      %134 = arith.andi %122, %133 : i1
      %cst_43 = arith.constant 3.000000e+00 : f32
      %135 = arith.cmpf ogt, %94, %cst_43 : f32
      %cst_44 = arith.constant 1.985000e-02 : f32
      %136 = arith.cmpf olt, %95, %cst_44 : f32
      %137 = arith.andi %109, %136 : i1
      %138 = arith.ori %135, %137 : i1
      %139 = arith.andi %134, %138 : i1
      %true_45 = arith.constant true
      %140 = arith.xori %139, %true_45 : i1
      %141 = arith.andi %134, %140 : i1
      %cst_46 = arith.constant 1.800000e-05 : f32
      %142 = arith.mulf %cst_46, %128 : f32
      %cst_47 = arith.constant 1.000000e+00 : f32
      %143 = arith.subf %cst_47, %142 : f32
      %cst_48 = arith.constant 9.99999974E-5 : f32
      %144 = arith.mulf %99, %cst_48 : f32
      %145 = arith.addf %93, %144 : f32
      %cst_49 = arith.constant 9.99999974E-5 : f32
      %146 = arith.mulf %103, %cst_49 : f32
      %147 = arith.addf %94, %146 : f32
      %cst_50 = arith.constant 9.99999974E-5 : f32
      %148 = arith.mulf %107, %cst_50 : f32
      %149 = arith.addf %95, %148 : f32
      %150 = arith.mulf %99, %143 : f32
      %151 = arith.mulf %103, %143 : f32
      %152 = arith.mulf %107, %143 : f32
      %cst_51 = arith.constant 9.80149954E-4 : f32
      %153 = arith.subf %152, %cst_51 : f32
      %154 = arith.subf %6, %93 : f32
      %155 = arith.subf %7, %94 : f32
      %156 = arith.subf %8, %95 : f32
      %157 = arith.mulf %154, %154 : f32
      %158 = arith.mulf %155, %155 : f32
      %159 = arith.addf %157, %158 : f32
      %160 = arith.mulf %156, %156 : f32
      %161 = arith.addf %159, %160 : f32
      %162 = arith.select %141, %145, %93 : f32
      %163 = arith.select %141, %147, %94 : f32
      %164 = arith.select %141, %149, %95 : f32
      %cst_52 = arith.constant 6.488190e-01 : f32
      %165 = arith.mulf %cst_52, %99 : f32
      %cst_53 = arith.constant 1.049100e-02 : f32
      %166 = arith.addf %165, %cst_53 : f32
      %167 = arith.select %141, %150, %99 : f32
      %168 = arith.select %132, %166, %167 : f32
      %cst_54 = arith.constant 0.643549978 : f32
      %169 = arith.mulf %cst_54, %103 : f32
      %cst_55 = arith.constant 2.406400e-02 : f32
      %170 = arith.addf %169, %cst_55 : f32
      %171 = arith.select %141, %151, %103 : f32
      %172 = arith.select %132, %170, %171 : f32
      %cst_56 = arith.constant -8.073920e-01 : f32
      %173 = arith.mulf %cst_56, %107 : f32
      %cst_57 = arith.constant 4.681100e-01 : f32
      %174 = arith.addf %173, %cst_57 : f32
      %175 = arith.select %141, %153, %107 : f32
      %176 = arith.select %132, %174, %175 : f32
      %177 = arith.select %132, %161, %108 : f32
      %178 = arith.ori %109, %132 : i1
      %179 = arith.ori %132, %141 : i1
      %c1_i32_58 = arith.constant 1 : i32
      %c0_i32_59 = arith.constant 0 : i32
      %180 = arith.select %179, %c1_i32_58, %c0_i32_59 : i32
      %181 = arith.addi %118, %180 : i32
      %182 = arith.ori %120, %139 : i1
      %183 = arith.ori %114, %182 : i1
      %184 = arith.ori %115, %120 : i1
      %c2_i32 = arith.constant 2 : i32
      %true_60 = arith.constant true
      %185 = arith.xori %183, %true_60 : i1
      %c1_i32_61 = arith.constant 1 : i32
      %186 = arith.addi %181, %c1_i32_61 : i32
      %187 = arith.select %185, %186, %181 : i32
      %c13000_i32_62 = arith.constant 13000 : i32
      %188 = arith.cmpi sgt, %187, %c13000_i32_62 : i32
      %189 = arith.andi %185, %188 : i1
      %true_63 = arith.constant true
      %190 = arith.xori %189, %true_63 : i1
      %191 = arith.andi %185, %190 : i1
      %192 = arith.mulf %168, %168 : f32
      %193 = arith.mulf %172, %172 : f32
      %194 = arith.addf %192, %193 : f32
      %195 = arith.mulf %176, %176 : f32
      %196 = arith.addf %194, %195 : f32
      %197 = math.sqrt %196 : f32
      %true_64 = arith.constant true
      %198 = arith.xori %178, %true_64 : i1
      %cst_65 = arith.constant 2.050000e-02 : f32
      %199 = arith.cmpf olt, %164, %cst_65 : f32
      %200 = arith.andi %198, %199 : i1
      %201 = arith.andi %191, %200 : i1
      %true_66 = arith.constant true
      %202 = arith.xori %200, %true_66 : i1
      %203 = arith.andi %191, %202 : i1
      %cst_67 = arith.constant 3.000000e+00 : f32
      %204 = arith.cmpf ogt, %163, %cst_67 : f32
      %cst_68 = arith.constant 1.985000e-02 : f32
      %205 = arith.cmpf olt, %164, %cst_68 : f32
      %206 = arith.andi %178, %205 : i1
      %207 = arith.ori %204, %206 : i1
      %208 = arith.andi %203, %207 : i1
      %true_69 = arith.constant true
      %209 = arith.xori %208, %true_69 : i1
      %210 = arith.andi %203, %209 : i1
      %cst_70 = arith.constant 1.800000e-05 : f32
      %211 = arith.mulf %cst_70, %197 : f32
      %cst_71 = arith.constant 1.000000e+00 : f32
      %212 = arith.subf %cst_71, %211 : f32
      %cst_72 = arith.constant 9.99999974E-5 : f32
      %213 = arith.mulf %168, %cst_72 : f32
      %214 = arith.addf %162, %213 : f32
      %cst_73 = arith.constant 9.99999974E-5 : f32
      %215 = arith.mulf %172, %cst_73 : f32
      %216 = arith.addf %163, %215 : f32
      %cst_74 = arith.constant 9.99999974E-5 : f32
      %217 = arith.mulf %176, %cst_74 : f32
      %218 = arith.addf %164, %217 : f32
      %219 = arith.mulf %168, %212 : f32
      %220 = arith.mulf %172, %212 : f32
      %221 = arith.mulf %176, %212 : f32
      %cst_75 = arith.constant 9.80149954E-4 : f32
      %222 = arith.subf %221, %cst_75 : f32
      %223 = arith.subf %6, %162 : f32
      %224 = arith.subf %7, %163 : f32
      %225 = arith.subf %8, %164 : f32
      %226 = arith.mulf %223, %223 : f32
      %227 = arith.mulf %224, %224 : f32
      %228 = arith.addf %226, %227 : f32
      %229 = arith.mulf %225, %225 : f32
      %230 = arith.addf %228, %229 : f32
      %231 = arith.select %210, %214, %162 : f32
      %232 = arith.select %210, %216, %163 : f32
      %233 = arith.select %210, %218, %164 : f32
      %cst_76 = arith.constant 6.488190e-01 : f32
      %234 = arith.mulf %cst_76, %168 : f32
      %cst_77 = arith.constant 1.049100e-02 : f32
      %235 = arith.addf %234, %cst_77 : f32
      %236 = arith.select %210, %219, %168 : f32
      %237 = arith.select %201, %235, %236 : f32
      %cst_78 = arith.constant 0.643549978 : f32
      %238 = arith.mulf %cst_78, %172 : f32
      %cst_79 = arith.constant 2.406400e-02 : f32
      %239 = arith.addf %238, %cst_79 : f32
      %240 = arith.select %210, %220, %172 : f32
      %241 = arith.select %201, %239, %240 : f32
      %cst_80 = arith.constant -8.073920e-01 : f32
      %242 = arith.mulf %cst_80, %176 : f32
      %cst_81 = arith.constant 4.681100e-01 : f32
      %243 = arith.addf %242, %cst_81 : f32
      %244 = arith.select %210, %222, %176 : f32
      %245 = arith.select %201, %243, %244 : f32
      %246 = arith.select %201, %230, %177 : f32
      %247 = arith.ori %178, %201 : i1
      %248 = arith.ori %201, %210 : i1
      %c1_i32_82 = arith.constant 1 : i32
      %c0_i32_83 = arith.constant 0 : i32
      %249 = arith.select %248, %c1_i32_82, %c0_i32_83 : i32
      %250 = arith.addi %187, %249 : i32
      %251 = arith.ori %189, %208 : i1
      %252 = arith.ori %183, %251 : i1
      %253 = arith.ori %184, %189 : i1
      %c3_i32 = arith.constant 3 : i32
      %true_84 = arith.constant true
      %254 = arith.xori %252, %true_84 : i1
      %c1_i32_85 = arith.constant 1 : i32
      %255 = arith.addi %250, %c1_i32_85 : i32
      %256 = arith.select %254, %255, %250 : i32
      %c13000_i32_86 = arith.constant 13000 : i32
      %257 = arith.cmpi sgt, %256, %c13000_i32_86 : i32
      %258 = arith.andi %254, %257 : i1
      %true_87 = arith.constant true
      %259 = arith.xori %258, %true_87 : i1
      %260 = arith.andi %254, %259 : i1
      %261 = arith.mulf %237, %237 : f32
      %262 = arith.mulf %241, %241 : f32
      %263 = arith.addf %261, %262 : f32
      %264 = arith.mulf %245, %245 : f32
      %265 = arith.addf %263, %264 : f32
      %266 = math.sqrt %265 : f32
      %true_88 = arith.constant true
      %267 = arith.xori %247, %true_88 : i1
      %cst_89 = arith.constant 2.050000e-02 : f32
      %268 = arith.cmpf olt, %233, %cst_89 : f32
      %269 = arith.andi %267, %268 : i1
      %270 = arith.andi %260, %269 : i1
      %true_90 = arith.constant true
      %271 = arith.xori %269, %true_90 : i1
      %272 = arith.andi %260, %271 : i1
      %cst_91 = arith.constant 3.000000e+00 : f32
      %273 = arith.cmpf ogt, %232, %cst_91 : f32
      %cst_92 = arith.constant 1.985000e-02 : f32
      %274 = arith.cmpf olt, %233, %cst_92 : f32
      %275 = arith.andi %247, %274 : i1
      %276 = arith.ori %273, %275 : i1
      %277 = arith.andi %272, %276 : i1
      %true_93 = arith.constant true
      %278 = arith.xori %277, %true_93 : i1
      %279 = arith.andi %272, %278 : i1
      %cst_94 = arith.constant 1.800000e-05 : f32
      %280 = arith.mulf %cst_94, %266 : f32
      %cst_95 = arith.constant 1.000000e+00 : f32
      %281 = arith.subf %cst_95, %280 : f32
      %cst_96 = arith.constant 9.99999974E-5 : f32
      %282 = arith.mulf %237, %cst_96 : f32
      %283 = arith.addf %231, %282 : f32
      %cst_97 = arith.constant 9.99999974E-5 : f32
      %284 = arith.mulf %241, %cst_97 : f32
      %285 = arith.addf %232, %284 : f32
      %cst_98 = arith.constant 9.99999974E-5 : f32
      %286 = arith.mulf %245, %cst_98 : f32
      %287 = arith.addf %233, %286 : f32
      %288 = arith.mulf %237, %281 : f32
      %289 = arith.mulf %241, %281 : f32
      %290 = arith.mulf %245, %281 : f32
      %cst_99 = arith.constant 9.80149954E-4 : f32
      %291 = arith.subf %290, %cst_99 : f32
      %292 = arith.subf %6, %231 : f32
      %293 = arith.subf %7, %232 : f32
      %294 = arith.subf %8, %233 : f32
      %295 = arith.mulf %292, %292 : f32
      %296 = arith.mulf %293, %293 : f32
      %297 = arith.addf %295, %296 : f32
      %298 = arith.mulf %294, %294 : f32
      %299 = arith.addf %297, %298 : f32
      %300 = arith.select %279, %283, %231 : f32
      %301 = arith.select %279, %285, %232 : f32
      %302 = arith.select %279, %287, %233 : f32
      %cst_100 = arith.constant 6.488190e-01 : f32
      %303 = arith.mulf %cst_100, %237 : f32
      %cst_101 = arith.constant 1.049100e-02 : f32
      %304 = arith.addf %303, %cst_101 : f32
      %305 = arith.select %279, %288, %237 : f32
      %306 = arith.select %270, %304, %305 : f32
      %cst_102 = arith.constant 0.643549978 : f32
      %307 = arith.mulf %cst_102, %241 : f32
      %cst_103 = arith.constant 2.406400e-02 : f32
      %308 = arith.addf %307, %cst_103 : f32
      %309 = arith.select %279, %289, %241 : f32
      %310 = arith.select %270, %308, %309 : f32
      %cst_104 = arith.constant -8.073920e-01 : f32
      %311 = arith.mulf %cst_104, %245 : f32
      %cst_105 = arith.constant 4.681100e-01 : f32
      %312 = arith.addf %311, %cst_105 : f32
      %313 = arith.select %279, %291, %245 : f32
      %314 = arith.select %270, %312, %313 : f32
      %315 = arith.select %270, %299, %246 : f32
      %316 = arith.ori %247, %270 : i1
      %317 = arith.ori %270, %279 : i1
      %c1_i32_106 = arith.constant 1 : i32
      %c0_i32_107 = arith.constant 0 : i32
      %318 = arith.select %317, %c1_i32_106, %c0_i32_107 : i32
      %319 = arith.addi %256, %318 : i32
      %320 = arith.ori %258, %277 : i1
      %321 = arith.ori %252, %320 : i1
      %322 = arith.ori %253, %258 : i1
      %c4_i32 = arith.constant 4 : i32
      %true_108 = arith.constant true
      %323 = arith.xori %321, %true_108 : i1
      %c1_i32_109 = arith.constant 1 : i32
      %324 = arith.addi %319, %c1_i32_109 : i32
      %325 = arith.select %323, %324, %319 : i32
      %c13000_i32_110 = arith.constant 13000 : i32
      %326 = arith.cmpi sgt, %325, %c13000_i32_110 : i32
      %327 = arith.andi %323, %326 : i1
      %true_111 = arith.constant true
      %328 = arith.xori %327, %true_111 : i1
      %329 = arith.andi %323, %328 : i1
      %330 = arith.mulf %306, %306 : f32
      %331 = arith.mulf %310, %310 : f32
      %332 = arith.addf %330, %331 : f32
      %333 = arith.mulf %314, %314 : f32
      %334 = arith.addf %332, %333 : f32
      %335 = math.sqrt %334 : f32
      %true_112 = arith.constant true
      %336 = arith.xori %316, %true_112 : i1
      %cst_113 = arith.constant 2.050000e-02 : f32
      %337 = arith.cmpf olt, %302, %cst_113 : f32
      %338 = arith.andi %336, %337 : i1
      %339 = arith.andi %329, %338 : i1
      %true_114 = arith.constant true
      %340 = arith.xori %338, %true_114 : i1
      %341 = arith.andi %329, %340 : i1
      %cst_115 = arith.constant 3.000000e+00 : f32
      %342 = arith.cmpf ogt, %301, %cst_115 : f32
      %cst_116 = arith.constant 1.985000e-02 : f32
      %343 = arith.cmpf olt, %302, %cst_116 : f32
      %344 = arith.andi %316, %343 : i1
      %345 = arith.ori %342, %344 : i1
      %346 = arith.andi %341, %345 : i1
      %true_117 = arith.constant true
      %347 = arith.xori %346, %true_117 : i1
      %348 = arith.andi %341, %347 : i1
      %cst_118 = arith.constant 1.800000e-05 : f32
      %349 = arith.mulf %cst_118, %335 : f32
      %cst_119 = arith.constant 1.000000e+00 : f32
      %350 = arith.subf %cst_119, %349 : f32
      %cst_120 = arith.constant 9.99999974E-5 : f32
      %351 = arith.mulf %306, %cst_120 : f32
      %352 = arith.addf %300, %351 : f32
      %cst_121 = arith.constant 9.99999974E-5 : f32
      %353 = arith.mulf %310, %cst_121 : f32
      %354 = arith.addf %301, %353 : f32
      %cst_122 = arith.constant 9.99999974E-5 : f32
      %355 = arith.mulf %314, %cst_122 : f32
      %356 = arith.addf %302, %355 : f32
      %357 = arith.mulf %306, %350 : f32
      %358 = arith.mulf %310, %350 : f32
      %359 = arith.mulf %314, %350 : f32
      %cst_123 = arith.constant 9.80149954E-4 : f32
      %360 = arith.subf %359, %cst_123 : f32
      %361 = arith.subf %6, %300 : f32
      %362 = arith.subf %7, %301 : f32
      %363 = arith.subf %8, %302 : f32
      %364 = arith.mulf %361, %361 : f32
      %365 = arith.mulf %362, %362 : f32
      %366 = arith.addf %364, %365 : f32
      %367 = arith.mulf %363, %363 : f32
      %368 = arith.addf %366, %367 : f32
      %369 = arith.select %348, %352, %300 : f32
      %370 = arith.select %348, %354, %301 : f32
      %371 = arith.select %348, %356, %302 : f32
      %cst_124 = arith.constant 6.488190e-01 : f32
      %372 = arith.mulf %cst_124, %306 : f32
      %cst_125 = arith.constant 1.049100e-02 : f32
      %373 = arith.addf %372, %cst_125 : f32
      %374 = arith.select %348, %357, %306 : f32
      %375 = arith.select %339, %373, %374 : f32
      %cst_126 = arith.constant 0.643549978 : f32
      %376 = arith.mulf %cst_126, %310 : f32
      %cst_127 = arith.constant 2.406400e-02 : f32
      %377 = arith.addf %376, %cst_127 : f32
      %378 = arith.select %348, %358, %310 : f32
      %379 = arith.select %339, %377, %378 : f32
      %cst_128 = arith.constant -8.073920e-01 : f32
      %380 = arith.mulf %cst_128, %314 : f32
      %cst_129 = arith.constant 4.681100e-01 : f32
      %381 = arith.addf %380, %cst_129 : f32
      %382 = arith.select %348, %360, %314 : f32
      %383 = arith.select %339, %381, %382 : f32
      %384 = arith.select %339, %368, %315 : f32
      %385 = arith.ori %316, %339 : i1
      %386 = arith.ori %339, %348 : i1
      %c1_i32_130 = arith.constant 1 : i32
      %c0_i32_131 = arith.constant 0 : i32
      %387 = arith.select %386, %c1_i32_130, %c0_i32_131 : i32
      %388 = arith.addi %325, %387 : i32
      %389 = arith.ori %327, %346 : i1
      %390 = arith.ori %321, %389 : i1
      %391 = arith.ori %322, %327 : i1
      %c5_i32 = arith.constant 5 : i32
      %true_132 = arith.constant true
      %392 = arith.xori %390, %true_132 : i1
      %c1_i32_133 = arith.constant 1 : i32
      %393 = arith.addi %388, %c1_i32_133 : i32
      %394 = arith.select %392, %393, %388 : i32
      %c13000_i32_134 = arith.constant 13000 : i32
      %395 = arith.cmpi sgt, %394, %c13000_i32_134 : i32
      %396 = arith.andi %392, %395 : i1
      %true_135 = arith.constant true
      %397 = arith.xori %396, %true_135 : i1
      %398 = arith.andi %392, %397 : i1
      %399 = arith.mulf %375, %375 : f32
      %400 = arith.mulf %379, %379 : f32
      %401 = arith.addf %399, %400 : f32
      %402 = arith.mulf %383, %383 : f32
      %403 = arith.addf %401, %402 : f32
      %404 = math.sqrt %403 : f32
      %true_136 = arith.constant true
      %405 = arith.xori %385, %true_136 : i1
      %cst_137 = arith.constant 2.050000e-02 : f32
      %406 = arith.cmpf olt, %371, %cst_137 : f32
      %407 = arith.andi %405, %406 : i1
      %408 = arith.andi %398, %407 : i1
      %true_138 = arith.constant true
      %409 = arith.xori %407, %true_138 : i1
      %410 = arith.andi %398, %409 : i1
      %cst_139 = arith.constant 3.000000e+00 : f32
      %411 = arith.cmpf ogt, %370, %cst_139 : f32
      %cst_140 = arith.constant 1.985000e-02 : f32
      %412 = arith.cmpf olt, %371, %cst_140 : f32
      %413 = arith.andi %385, %412 : i1
      %414 = arith.ori %411, %413 : i1
      %415 = arith.andi %410, %414 : i1
      %true_141 = arith.constant true
      %416 = arith.xori %415, %true_141 : i1
      %417 = arith.andi %410, %416 : i1
      %cst_142 = arith.constant 1.800000e-05 : f32
      %418 = arith.mulf %cst_142, %404 : f32
      %cst_143 = arith.constant 1.000000e+00 : f32
      %419 = arith.subf %cst_143, %418 : f32
      %cst_144 = arith.constant 9.99999974E-5 : f32
      %420 = arith.mulf %375, %cst_144 : f32
      %421 = arith.addf %369, %420 : f32
      %cst_145 = arith.constant 9.99999974E-5 : f32
      %422 = arith.mulf %379, %cst_145 : f32
      %423 = arith.addf %370, %422 : f32
      %cst_146 = arith.constant 9.99999974E-5 : f32
      %424 = arith.mulf %383, %cst_146 : f32
      %425 = arith.addf %371, %424 : f32
      %426 = arith.mulf %375, %419 : f32
      %427 = arith.mulf %379, %419 : f32
      %428 = arith.mulf %383, %419 : f32
      %cst_147 = arith.constant 9.80149954E-4 : f32
      %429 = arith.subf %428, %cst_147 : f32
      %430 = arith.subf %6, %369 : f32
      %431 = arith.subf %7, %370 : f32
      %432 = arith.subf %8, %371 : f32
      %433 = arith.mulf %430, %430 : f32
      %434 = arith.mulf %431, %431 : f32
      %435 = arith.addf %433, %434 : f32
      %436 = arith.mulf %432, %432 : f32
      %437 = arith.addf %435, %436 : f32
      %438 = arith.select %417, %421, %369 : f32
      %439 = arith.select %417, %423, %370 : f32
      %440 = arith.select %417, %425, %371 : f32
      %cst_148 = arith.constant 6.488190e-01 : f32
      %441 = arith.mulf %cst_148, %375 : f32
      %cst_149 = arith.constant 1.049100e-02 : f32
      %442 = arith.addf %441, %cst_149 : f32
      %443 = arith.select %417, %426, %375 : f32
      %444 = arith.select %408, %442, %443 : f32
      %cst_150 = arith.constant 0.643549978 : f32
      %445 = arith.mulf %cst_150, %379 : f32
      %cst_151 = arith.constant 2.406400e-02 : f32
      %446 = arith.addf %445, %cst_151 : f32
      %447 = arith.select %417, %427, %379 : f32
      %448 = arith.select %408, %446, %447 : f32
      %cst_152 = arith.constant -8.073920e-01 : f32
      %449 = arith.mulf %cst_152, %383 : f32
      %cst_153 = arith.constant 4.681100e-01 : f32
      %450 = arith.addf %449, %cst_153 : f32
      %451 = arith.select %417, %429, %383 : f32
      %452 = arith.select %408, %450, %451 : f32
      %453 = arith.select %408, %437, %384 : f32
      %454 = arith.ori %385, %408 : i1
      %455 = arith.ori %408, %417 : i1
      %c1_i32_154 = arith.constant 1 : i32
      %c0_i32_155 = arith.constant 0 : i32
      %456 = arith.select %455, %c1_i32_154, %c0_i32_155 : i32
      %457 = arith.addi %394, %456 : i32
      %458 = arith.ori %396, %415 : i1
      %459 = arith.ori %390, %458 : i1
      %460 = arith.ori %391, %396 : i1
      %c6_i32 = arith.constant 6 : i32
      %true_156 = arith.constant true
      %461 = arith.xori %459, %true_156 : i1
      %c1_i32_157 = arith.constant 1 : i32
      %462 = arith.addi %457, %c1_i32_157 : i32
      %463 = arith.select %461, %462, %457 : i32
      %c13000_i32_158 = arith.constant 13000 : i32
      %464 = arith.cmpi sgt, %463, %c13000_i32_158 : i32
      %465 = arith.andi %461, %464 : i1
      %true_159 = arith.constant true
      %466 = arith.xori %465, %true_159 : i1
      %467 = arith.andi %461, %466 : i1
      %468 = arith.mulf %444, %444 : f32
      %469 = arith.mulf %448, %448 : f32
      %470 = arith.addf %468, %469 : f32
      %471 = arith.mulf %452, %452 : f32
      %472 = arith.addf %470, %471 : f32
      %473 = math.sqrt %472 : f32
      %true_160 = arith.constant true
      %474 = arith.xori %454, %true_160 : i1
      %cst_161 = arith.constant 2.050000e-02 : f32
      %475 = arith.cmpf olt, %440, %cst_161 : f32
      %476 = arith.andi %474, %475 : i1
      %477 = arith.andi %467, %476 : i1
      %true_162 = arith.constant true
      %478 = arith.xori %476, %true_162 : i1
      %479 = arith.andi %467, %478 : i1
      %cst_163 = arith.constant 3.000000e+00 : f32
      %480 = arith.cmpf ogt, %439, %cst_163 : f32
      %cst_164 = arith.constant 1.985000e-02 : f32
      %481 = arith.cmpf olt, %440, %cst_164 : f32
      %482 = arith.andi %454, %481 : i1
      %483 = arith.ori %480, %482 : i1
      %484 = arith.andi %479, %483 : i1
      %true_165 = arith.constant true
      %485 = arith.xori %484, %true_165 : i1
      %486 = arith.andi %479, %485 : i1
      %cst_166 = arith.constant 1.800000e-05 : f32
      %487 = arith.mulf %cst_166, %473 : f32
      %cst_167 = arith.constant 1.000000e+00 : f32
      %488 = arith.subf %cst_167, %487 : f32
      %cst_168 = arith.constant 9.99999974E-5 : f32
      %489 = arith.mulf %444, %cst_168 : f32
      %490 = arith.addf %438, %489 : f32
      %cst_169 = arith.constant 9.99999974E-5 : f32
      %491 = arith.mulf %448, %cst_169 : f32
      %492 = arith.addf %439, %491 : f32
      %cst_170 = arith.constant 9.99999974E-5 : f32
      %493 = arith.mulf %452, %cst_170 : f32
      %494 = arith.addf %440, %493 : f32
      %495 = arith.mulf %444, %488 : f32
      %496 = arith.mulf %448, %488 : f32
      %497 = arith.mulf %452, %488 : f32
      %cst_171 = arith.constant 9.80149954E-4 : f32
      %498 = arith.subf %497, %cst_171 : f32
      %499 = arith.subf %6, %438 : f32
      %500 = arith.subf %7, %439 : f32
      %501 = arith.subf %8, %440 : f32
      %502 = arith.mulf %499, %499 : f32
      %503 = arith.mulf %500, %500 : f32
      %504 = arith.addf %502, %503 : f32
      %505 = arith.mulf %501, %501 : f32
      %506 = arith.addf %504, %505 : f32
      %507 = arith.select %486, %490, %438 : f32
      %508 = arith.select %486, %492, %439 : f32
      %509 = arith.select %486, %494, %440 : f32
      %cst_172 = arith.constant 6.488190e-01 : f32
      %510 = arith.mulf %cst_172, %444 : f32
      %cst_173 = arith.constant 1.049100e-02 : f32
      %511 = arith.addf %510, %cst_173 : f32
      %512 = arith.select %486, %495, %444 : f32
      %513 = arith.select %477, %511, %512 : f32
      %cst_174 = arith.constant 0.643549978 : f32
      %514 = arith.mulf %cst_174, %448 : f32
      %cst_175 = arith.constant 2.406400e-02 : f32
      %515 = arith.addf %514, %cst_175 : f32
      %516 = arith.select %486, %496, %448 : f32
      %517 = arith.select %477, %515, %516 : f32
      %cst_176 = arith.constant -8.073920e-01 : f32
      %518 = arith.mulf %cst_176, %452 : f32
      %cst_177 = arith.constant 4.681100e-01 : f32
      %519 = arith.addf %518, %cst_177 : f32
      %520 = arith.select %486, %498, %452 : f32
      %521 = arith.select %477, %519, %520 : f32
      %522 = arith.select %477, %506, %453 : f32
      %523 = arith.ori %454, %477 : i1
      %524 = arith.ori %477, %486 : i1
      %c1_i32_178 = arith.constant 1 : i32
      %c0_i32_179 = arith.constant 0 : i32
      %525 = arith.select %524, %c1_i32_178, %c0_i32_179 : i32
      %526 = arith.addi %463, %525 : i32
      %527 = arith.ori %465, %484 : i1
      %528 = arith.ori %459, %527 : i1
      %529 = arith.ori %460, %465 : i1
      %c7_i32 = arith.constant 7 : i32
      %true_180 = arith.constant true
      %530 = arith.xori %528, %true_180 : i1
      %c1_i32_181 = arith.constant 1 : i32
      %531 = arith.addi %526, %c1_i32_181 : i32
      %532 = arith.select %530, %531, %526 : i32
      %c13000_i32_182 = arith.constant 13000 : i32
      %533 = arith.cmpi sgt, %532, %c13000_i32_182 : i32
      %534 = arith.andi %530, %533 : i1
      %true_183 = arith.constant true
      %535 = arith.xori %534, %true_183 : i1
      %536 = arith.andi %530, %535 : i1
      %537 = arith.mulf %513, %513 : f32
      %538 = arith.mulf %517, %517 : f32
      %539 = arith.addf %537, %538 : f32
      %540 = arith.mulf %521, %521 : f32
      %541 = arith.addf %539, %540 : f32
      %542 = math.sqrt %541 : f32
      %true_184 = arith.constant true
      %543 = arith.xori %523, %true_184 : i1
      %cst_185 = arith.constant 2.050000e-02 : f32
      %544 = arith.cmpf olt, %509, %cst_185 : f32
      %545 = arith.andi %543, %544 : i1
      %546 = arith.andi %536, %545 : i1
      %true_186 = arith.constant true
      %547 = arith.xori %545, %true_186 : i1
      %548 = arith.andi %536, %547 : i1
      %cst_187 = arith.constant 3.000000e+00 : f32
      %549 = arith.cmpf ogt, %508, %cst_187 : f32
      %cst_188 = arith.constant 1.985000e-02 : f32
      %550 = arith.cmpf olt, %509, %cst_188 : f32
      %551 = arith.andi %523, %550 : i1
      %552 = arith.ori %549, %551 : i1
      %553 = arith.andi %548, %552 : i1
      %true_189 = arith.constant true
      %554 = arith.xori %553, %true_189 : i1
      %555 = arith.andi %548, %554 : i1
      %cst_190 = arith.constant 1.800000e-05 : f32
      %556 = arith.mulf %cst_190, %542 : f32
      %cst_191 = arith.constant 1.000000e+00 : f32
      %557 = arith.subf %cst_191, %556 : f32
      %cst_192 = arith.constant 9.99999974E-5 : f32
      %558 = arith.mulf %513, %cst_192 : f32
      %559 = arith.addf %507, %558 : f32
      %cst_193 = arith.constant 9.99999974E-5 : f32
      %560 = arith.mulf %517, %cst_193 : f32
      %561 = arith.addf %508, %560 : f32
      %cst_194 = arith.constant 9.99999974E-5 : f32
      %562 = arith.mulf %521, %cst_194 : f32
      %563 = arith.addf %509, %562 : f32
      %564 = arith.mulf %513, %557 : f32
      %565 = arith.mulf %517, %557 : f32
      %566 = arith.mulf %521, %557 : f32
      %cst_195 = arith.constant 9.80149954E-4 : f32
      %567 = arith.subf %566, %cst_195 : f32
      %568 = arith.subf %6, %507 : f32
      %569 = arith.subf %7, %508 : f32
      %570 = arith.subf %8, %509 : f32
      %571 = arith.mulf %568, %568 : f32
      %572 = arith.mulf %569, %569 : f32
      %573 = arith.addf %571, %572 : f32
      %574 = arith.mulf %570, %570 : f32
      %575 = arith.addf %573, %574 : f32
      %576 = arith.select %555, %559, %507 : f32
      %577 = arith.select %555, %561, %508 : f32
      %578 = arith.select %555, %563, %509 : f32
      %cst_196 = arith.constant 6.488190e-01 : f32
      %579 = arith.mulf %cst_196, %513 : f32
      %cst_197 = arith.constant 1.049100e-02 : f32
      %580 = arith.addf %579, %cst_197 : f32
      %581 = arith.select %555, %564, %513 : f32
      %582 = arith.select %546, %580, %581 : f32
      %cst_198 = arith.constant 0.643549978 : f32
      %583 = arith.mulf %cst_198, %517 : f32
      %cst_199 = arith.constant 2.406400e-02 : f32
      %584 = arith.addf %583, %cst_199 : f32
      %585 = arith.select %555, %565, %517 : f32
      %586 = arith.select %546, %584, %585 : f32
      %cst_200 = arith.constant -8.073920e-01 : f32
      %587 = arith.mulf %cst_200, %521 : f32
      %cst_201 = arith.constant 4.681100e-01 : f32
      %588 = arith.addf %587, %cst_201 : f32
      %589 = arith.select %555, %567, %521 : f32
      %590 = arith.select %546, %588, %589 : f32
      %591 = arith.select %546, %575, %522 : f32
      %592 = arith.ori %523, %546 : i1
      %593 = arith.ori %546, %555 : i1
      %c1_i32_202 = arith.constant 1 : i32
      %c0_i32_203 = arith.constant 0 : i32
      %594 = arith.select %593, %c1_i32_202, %c0_i32_203 : i32
      %595 = arith.addi %532, %594 : i32
      %596 = arith.ori %534, %553 : i1
      %597 = arith.ori %528, %596 : i1
      %598 = arith.ori %529, %534 : i1
      %c8_i32 = arith.constant 8 : i32
      scf.yield %576, %577, %578, %582, %586, %590, %592, %595, %591, %597, %598 : f32, f32, f32, f32, f32, f32, i1, i32, f32, i1, i1
    }
    %true_5 = arith.constant true
    %27 = arith.xori %26#6, %true_5 : i1
    %cst_6 = arith.constant 2.700000e+00 : f32
    %28 = arith.select %27, %cst_6, %26#1 : f32
    %false_7 = arith.constant false
    %29:11 = scf.while (%arg2 = %26#0, %arg3 = %28, %arg4 = %26#2, %arg5 = %26#3, %arg6 = %26#4, %arg7 = %26#5, %arg8 = %26#6, %arg9 = %26#7, %arg10 = %26#8, %arg11 = %26#6, %arg12 = %false_7) : (f32, f32, f32, f32, f32, f32, i1, i32, f32, i1, i1) -> (f32, f32, f32, f32, f32, f32, i1, i32, f32, i1, i1) {
      %true_12 = arith.constant true
      %47 = arith.xori %arg11, %true_12 : i1
      scf.condition(%47) %arg2, %arg3, %arg4, %arg5, %arg6, %arg7, %arg8, %arg9, %arg10, %arg11, %arg12 : f32, f32, f32, f32, f32, f32, i1, i32, f32, i1, i1
    } do {
    ^bb0(%arg2: f32, %arg3: f32, %arg4: f32, %arg5: f32, %arg6: f32, %arg7: f32, %arg8: i1, %arg9: i32, %arg10: f32, %arg11: i1, %arg12: i1):
      %c0_i32_12 = arith.constant 0 : i32
      %true_13 = arith.constant true
      %47 = arith.xori %arg11, %true_13 : i1
      %c10000_i32 = arith.constant 10000 : i32
      %48 = arith.cmpi sgt, %arg9, %c10000_i32 : i32
      %49 = arith.andi %47, %48 : i1
      %true_14 = arith.constant true
      %50 = arith.xori %49, %true_14 : i1
      %51 = arith.andi %47, %50 : i1
      %52 = arith.mulf %arg5, %arg5 : f32
      %53 = arith.mulf %arg6, %arg6 : f32
      %54 = arith.addf %52, %53 : f32
      %55 = arith.mulf %arg7, %arg7 : f32
      %56 = arith.addf %54, %55 : f32
      %57 = math.sqrt %56 : f32
      %true_15 = arith.constant true
      %58 = arith.xori %arg8, %true_15 : i1
      %cst_16 = arith.constant 2.050000e-02 : f32
      %59 = arith.cmpf olt, %arg4, %cst_16 : f32
      %60 = arith.andi %58, %59 : i1
      %61 = arith.andi %51, %60 : i1
      %true_17 = arith.constant true
      %62 = arith.xori %60, %true_17 : i1
      %63 = arith.andi %51, %62 : i1
      %cst_18 = arith.constant 3.000000e+00 : f32
      %64 = arith.cmpf ogt, %arg3, %cst_18 : f32
      %cst_19 = arith.constant 1.985000e-02 : f32
      %65 = arith.cmpf olt, %arg4, %cst_19 : f32
      %66 = arith.andi %arg8, %65 : i1
      %67 = arith.ori %64, %66 : i1
      %68 = arith.andi %63, %67 : i1
      %true_20 = arith.constant true
      %69 = arith.xori %68, %true_20 : i1
      %70 = arith.andi %63, %69 : i1
      %cst_21 = arith.constant 1.800000e-05 : f32
      %71 = arith.mulf %cst_21, %57 : f32
      %cst_22 = arith.constant 1.000000e+00 : f32
      %72 = arith.subf %cst_22, %71 : f32
      %cst_23 = arith.constant 9.99999974E-5 : f32
      %73 = arith.mulf %arg5, %cst_23 : f32
      %74 = arith.addf %arg2, %73 : f32
      %cst_24 = arith.constant 9.99999974E-5 : f32
      %75 = arith.mulf %arg6, %cst_24 : f32
      %76 = arith.addf %arg3, %75 : f32
      %cst_25 = arith.constant 9.99999974E-5 : f32
      %77 = arith.mulf %arg7, %cst_25 : f32
      %78 = arith.addf %arg4, %77 : f32
      %79 = arith.mulf %arg5, %72 : f32
      %80 = arith.mulf %arg6, %72 : f32
      %81 = arith.mulf %arg7, %72 : f32
      %cst_26 = arith.constant 9.80149954E-4 : f32
      %82 = arith.subf %81, %cst_26 : f32
      %83 = arith.subf %6, %arg2 : f32
      %84 = arith.subf %7, %arg3 : f32
      %85 = arith.subf %8, %arg4 : f32
      %86 = arith.mulf %83, %83 : f32
      %87 = arith.mulf %84, %84 : f32
      %88 = arith.addf %86, %87 : f32
      %89 = arith.mulf %85, %85 : f32
      %90 = arith.addf %88, %89 : f32
      %91 = arith.select %70, %74, %arg2 : f32
      %92 = arith.select %70, %76, %arg3 : f32
      %93 = arith.select %70, %78, %arg4 : f32
      %cst_27 = arith.constant 6.488190e-01 : f32
      %94 = arith.mulf %cst_27, %arg5 : f32
      %cst_28 = arith.constant 1.049100e-02 : f32
      %95 = arith.addf %94, %cst_28 : f32
      %96 = arith.select %70, %79, %arg5 : f32
      %97 = arith.select %61, %95, %96 : f32
      %cst_29 = arith.constant 0.643549978 : f32
      %98 = arith.mulf %cst_29, %arg6 : f32
      %cst_30 = arith.constant 2.406400e-02 : f32
      %99 = arith.addf %98, %cst_30 : f32
      %100 = arith.select %70, %80, %arg6 : f32
      %101 = arith.select %61, %99, %100 : f32
      %cst_31 = arith.constant -8.073920e-01 : f32
      %102 = arith.mulf %cst_31, %arg7 : f32
      %cst_32 = arith.constant 4.681100e-01 : f32
      %103 = arith.addf %102, %cst_32 : f32
      %104 = arith.select %70, %82, %arg7 : f32
      %105 = arith.select %61, %103, %104 : f32
      %106 = arith.select %61, %90, %arg10 : f32
      %107 = arith.ori %arg8, %61 : i1
      %108 = arith.ori %61, %70 : i1
      %c1_i32 = arith.constant 1 : i32
      %c0_i32_33 = arith.constant 0 : i32
      %109 = arith.select %108, %c1_i32, %c0_i32_33 : i32
      %110 = arith.addi %arg9, %109 : i32
      %111 = arith.ori %49, %68 : i1
      %112 = arith.ori %arg11, %111 : i1
      %113 = arith.ori %arg12, %49 : i1
      %c1_i32_34 = arith.constant 1 : i32
      %true_35 = arith.constant true
      %114 = arith.xori %112, %true_35 : i1
      %c10000_i32_36 = arith.constant 10000 : i32
      %115 = arith.cmpi sgt, %110, %c10000_i32_36 : i32
      %116 = arith.andi %114, %115 : i1
      %true_37 = arith.constant true
      %117 = arith.xori %116, %true_37 : i1
      %118 = arith.andi %114, %117 : i1
      %119 = arith.mulf %97, %97 : f32
      %120 = arith.mulf %101, %101 : f32
      %121 = arith.addf %119, %120 : f32
      %122 = arith.mulf %105, %105 : f32
      %123 = arith.addf %121, %122 : f32
      %124 = math.sqrt %123 : f32
      %true_38 = arith.constant true
      %125 = arith.xori %107, %true_38 : i1
      %cst_39 = arith.constant 2.050000e-02 : f32
      %126 = arith.cmpf olt, %93, %cst_39 : f32
      %127 = arith.andi %125, %126 : i1
      %128 = arith.andi %118, %127 : i1
      %true_40 = arith.constant true
      %129 = arith.xori %127, %true_40 : i1
      %130 = arith.andi %118, %129 : i1
      %cst_41 = arith.constant 3.000000e+00 : f32
      %131 = arith.cmpf ogt, %92, %cst_41 : f32
      %cst_42 = arith.constant 1.985000e-02 : f32
      %132 = arith.cmpf olt, %93, %cst_42 : f32
      %133 = arith.andi %107, %132 : i1
      %134 = arith.ori %131, %133 : i1
      %135 = arith.andi %130, %134 : i1
      %true_43 = arith.constant true
      %136 = arith.xori %135, %true_43 : i1
      %137 = arith.andi %130, %136 : i1
      %cst_44 = arith.constant 1.800000e-05 : f32
      %138 = arith.mulf %cst_44, %124 : f32
      %cst_45 = arith.constant 1.000000e+00 : f32
      %139 = arith.subf %cst_45, %138 : f32
      %cst_46 = arith.constant 9.99999974E-5 : f32
      %140 = arith.mulf %97, %cst_46 : f32
      %141 = arith.addf %91, %140 : f32
      %cst_47 = arith.constant 9.99999974E-5 : f32
      %142 = arith.mulf %101, %cst_47 : f32
      %143 = arith.addf %92, %142 : f32
      %cst_48 = arith.constant 9.99999974E-5 : f32
      %144 = arith.mulf %105, %cst_48 : f32
      %145 = arith.addf %93, %144 : f32
      %146 = arith.mulf %97, %139 : f32
      %147 = arith.mulf %101, %139 : f32
      %148 = arith.mulf %105, %139 : f32
      %cst_49 = arith.constant 9.80149954E-4 : f32
      %149 = arith.subf %148, %cst_49 : f32
      %150 = arith.subf %6, %91 : f32
      %151 = arith.subf %7, %92 : f32
      %152 = arith.subf %8, %93 : f32
      %153 = arith.mulf %150, %150 : f32
      %154 = arith.mulf %151, %151 : f32
      %155 = arith.addf %153, %154 : f32
      %156 = arith.mulf %152, %152 : f32
      %157 = arith.addf %155, %156 : f32
      %158 = arith.select %137, %141, %91 : f32
      %159 = arith.select %137, %143, %92 : f32
      %160 = arith.select %137, %145, %93 : f32
      %cst_50 = arith.constant 6.488190e-01 : f32
      %161 = arith.mulf %cst_50, %97 : f32
      %cst_51 = arith.constant 1.049100e-02 : f32
      %162 = arith.addf %161, %cst_51 : f32
      %163 = arith.select %137, %146, %97 : f32
      %164 = arith.select %128, %162, %163 : f32
      %cst_52 = arith.constant 0.643549978 : f32
      %165 = arith.mulf %cst_52, %101 : f32
      %cst_53 = arith.constant 2.406400e-02 : f32
      %166 = arith.addf %165, %cst_53 : f32
      %167 = arith.select %137, %147, %101 : f32
      %168 = arith.select %128, %166, %167 : f32
      %cst_54 = arith.constant -8.073920e-01 : f32
      %169 = arith.mulf %cst_54, %105 : f32
      %cst_55 = arith.constant 4.681100e-01 : f32
      %170 = arith.addf %169, %cst_55 : f32
      %171 = arith.select %137, %149, %105 : f32
      %172 = arith.select %128, %170, %171 : f32
      %173 = arith.select %128, %157, %106 : f32
      %174 = arith.ori %107, %128 : i1
      %175 = arith.ori %128, %137 : i1
      %c1_i32_56 = arith.constant 1 : i32
      %c0_i32_57 = arith.constant 0 : i32
      %176 = arith.select %175, %c1_i32_56, %c0_i32_57 : i32
      %177 = arith.addi %110, %176 : i32
      %178 = arith.ori %116, %135 : i1
      %179 = arith.ori %112, %178 : i1
      %180 = arith.ori %113, %116 : i1
      %c2_i32 = arith.constant 2 : i32
      %true_58 = arith.constant true
      %181 = arith.xori %179, %true_58 : i1
      %c10000_i32_59 = arith.constant 10000 : i32
      %182 = arith.cmpi sgt, %177, %c10000_i32_59 : i32
      %183 = arith.andi %181, %182 : i1
      %true_60 = arith.constant true
      %184 = arith.xori %183, %true_60 : i1
      %185 = arith.andi %181, %184 : i1
      %186 = arith.mulf %164, %164 : f32
      %187 = arith.mulf %168, %168 : f32
      %188 = arith.addf %186, %187 : f32
      %189 = arith.mulf %172, %172 : f32
      %190 = arith.addf %188, %189 : f32
      %191 = math.sqrt %190 : f32
      %true_61 = arith.constant true
      %192 = arith.xori %174, %true_61 : i1
      %cst_62 = arith.constant 2.050000e-02 : f32
      %193 = arith.cmpf olt, %160, %cst_62 : f32
      %194 = arith.andi %192, %193 : i1
      %195 = arith.andi %185, %194 : i1
      %true_63 = arith.constant true
      %196 = arith.xori %194, %true_63 : i1
      %197 = arith.andi %185, %196 : i1
      %cst_64 = arith.constant 3.000000e+00 : f32
      %198 = arith.cmpf ogt, %159, %cst_64 : f32
      %cst_65 = arith.constant 1.985000e-02 : f32
      %199 = arith.cmpf olt, %160, %cst_65 : f32
      %200 = arith.andi %174, %199 : i1
      %201 = arith.ori %198, %200 : i1
      %202 = arith.andi %197, %201 : i1
      %true_66 = arith.constant true
      %203 = arith.xori %202, %true_66 : i1
      %204 = arith.andi %197, %203 : i1
      %cst_67 = arith.constant 1.800000e-05 : f32
      %205 = arith.mulf %cst_67, %191 : f32
      %cst_68 = arith.constant 1.000000e+00 : f32
      %206 = arith.subf %cst_68, %205 : f32
      %cst_69 = arith.constant 9.99999974E-5 : f32
      %207 = arith.mulf %164, %cst_69 : f32
      %208 = arith.addf %158, %207 : f32
      %cst_70 = arith.constant 9.99999974E-5 : f32
      %209 = arith.mulf %168, %cst_70 : f32
      %210 = arith.addf %159, %209 : f32
      %cst_71 = arith.constant 9.99999974E-5 : f32
      %211 = arith.mulf %172, %cst_71 : f32
      %212 = arith.addf %160, %211 : f32
      %213 = arith.mulf %164, %206 : f32
      %214 = arith.mulf %168, %206 : f32
      %215 = arith.mulf %172, %206 : f32
      %cst_72 = arith.constant 9.80149954E-4 : f32
      %216 = arith.subf %215, %cst_72 : f32
      %217 = arith.subf %6, %158 : f32
      %218 = arith.subf %7, %159 : f32
      %219 = arith.subf %8, %160 : f32
      %220 = arith.mulf %217, %217 : f32
      %221 = arith.mulf %218, %218 : f32
      %222 = arith.addf %220, %221 : f32
      %223 = arith.mulf %219, %219 : f32
      %224 = arith.addf %222, %223 : f32
      %225 = arith.select %204, %208, %158 : f32
      %226 = arith.select %204, %210, %159 : f32
      %227 = arith.select %204, %212, %160 : f32
      %cst_73 = arith.constant 6.488190e-01 : f32
      %228 = arith.mulf %cst_73, %164 : f32
      %cst_74 = arith.constant 1.049100e-02 : f32
      %229 = arith.addf %228, %cst_74 : f32
      %230 = arith.select %204, %213, %164 : f32
      %231 = arith.select %195, %229, %230 : f32
      %cst_75 = arith.constant 0.643549978 : f32
      %232 = arith.mulf %cst_75, %168 : f32
      %cst_76 = arith.constant 2.406400e-02 : f32
      %233 = arith.addf %232, %cst_76 : f32
      %234 = arith.select %204, %214, %168 : f32
      %235 = arith.select %195, %233, %234 : f32
      %cst_77 = arith.constant -8.073920e-01 : f32
      %236 = arith.mulf %cst_77, %172 : f32
      %cst_78 = arith.constant 4.681100e-01 : f32
      %237 = arith.addf %236, %cst_78 : f32
      %238 = arith.select %204, %216, %172 : f32
      %239 = arith.select %195, %237, %238 : f32
      %240 = arith.select %195, %224, %173 : f32
      %241 = arith.ori %174, %195 : i1
      %242 = arith.ori %195, %204 : i1
      %c1_i32_79 = arith.constant 1 : i32
      %c0_i32_80 = arith.constant 0 : i32
      %243 = arith.select %242, %c1_i32_79, %c0_i32_80 : i32
      %244 = arith.addi %177, %243 : i32
      %245 = arith.ori %183, %202 : i1
      %246 = arith.ori %179, %245 : i1
      %247 = arith.ori %180, %183 : i1
      %c3_i32 = arith.constant 3 : i32
      %true_81 = arith.constant true
      %248 = arith.xori %246, %true_81 : i1
      %c10000_i32_82 = arith.constant 10000 : i32
      %249 = arith.cmpi sgt, %244, %c10000_i32_82 : i32
      %250 = arith.andi %248, %249 : i1
      %true_83 = arith.constant true
      %251 = arith.xori %250, %true_83 : i1
      %252 = arith.andi %248, %251 : i1
      %253 = arith.mulf %231, %231 : f32
      %254 = arith.mulf %235, %235 : f32
      %255 = arith.addf %253, %254 : f32
      %256 = arith.mulf %239, %239 : f32
      %257 = arith.addf %255, %256 : f32
      %258 = math.sqrt %257 : f32
      %true_84 = arith.constant true
      %259 = arith.xori %241, %true_84 : i1
      %cst_85 = arith.constant 2.050000e-02 : f32
      %260 = arith.cmpf olt, %227, %cst_85 : f32
      %261 = arith.andi %259, %260 : i1
      %262 = arith.andi %252, %261 : i1
      %true_86 = arith.constant true
      %263 = arith.xori %261, %true_86 : i1
      %264 = arith.andi %252, %263 : i1
      %cst_87 = arith.constant 3.000000e+00 : f32
      %265 = arith.cmpf ogt, %226, %cst_87 : f32
      %cst_88 = arith.constant 1.985000e-02 : f32
      %266 = arith.cmpf olt, %227, %cst_88 : f32
      %267 = arith.andi %241, %266 : i1
      %268 = arith.ori %265, %267 : i1
      %269 = arith.andi %264, %268 : i1
      %true_89 = arith.constant true
      %270 = arith.xori %269, %true_89 : i1
      %271 = arith.andi %264, %270 : i1
      %cst_90 = arith.constant 1.800000e-05 : f32
      %272 = arith.mulf %cst_90, %258 : f32
      %cst_91 = arith.constant 1.000000e+00 : f32
      %273 = arith.subf %cst_91, %272 : f32
      %cst_92 = arith.constant 9.99999974E-5 : f32
      %274 = arith.mulf %231, %cst_92 : f32
      %275 = arith.addf %225, %274 : f32
      %cst_93 = arith.constant 9.99999974E-5 : f32
      %276 = arith.mulf %235, %cst_93 : f32
      %277 = arith.addf %226, %276 : f32
      %cst_94 = arith.constant 9.99999974E-5 : f32
      %278 = arith.mulf %239, %cst_94 : f32
      %279 = arith.addf %227, %278 : f32
      %280 = arith.mulf %231, %273 : f32
      %281 = arith.mulf %235, %273 : f32
      %282 = arith.mulf %239, %273 : f32
      %cst_95 = arith.constant 9.80149954E-4 : f32
      %283 = arith.subf %282, %cst_95 : f32
      %284 = arith.subf %6, %225 : f32
      %285 = arith.subf %7, %226 : f32
      %286 = arith.subf %8, %227 : f32
      %287 = arith.mulf %284, %284 : f32
      %288 = arith.mulf %285, %285 : f32
      %289 = arith.addf %287, %288 : f32
      %290 = arith.mulf %286, %286 : f32
      %291 = arith.addf %289, %290 : f32
      %292 = arith.select %271, %275, %225 : f32
      %293 = arith.select %271, %277, %226 : f32
      %294 = arith.select %271, %279, %227 : f32
      %cst_96 = arith.constant 6.488190e-01 : f32
      %295 = arith.mulf %cst_96, %231 : f32
      %cst_97 = arith.constant 1.049100e-02 : f32
      %296 = arith.addf %295, %cst_97 : f32
      %297 = arith.select %271, %280, %231 : f32
      %298 = arith.select %262, %296, %297 : f32
      %cst_98 = arith.constant 0.643549978 : f32
      %299 = arith.mulf %cst_98, %235 : f32
      %cst_99 = arith.constant 2.406400e-02 : f32
      %300 = arith.addf %299, %cst_99 : f32
      %301 = arith.select %271, %281, %235 : f32
      %302 = arith.select %262, %300, %301 : f32
      %cst_100 = arith.constant -8.073920e-01 : f32
      %303 = arith.mulf %cst_100, %239 : f32
      %cst_101 = arith.constant 4.681100e-01 : f32
      %304 = arith.addf %303, %cst_101 : f32
      %305 = arith.select %271, %283, %239 : f32
      %306 = arith.select %262, %304, %305 : f32
      %307 = arith.select %262, %291, %240 : f32
      %308 = arith.ori %241, %262 : i1
      %309 = arith.ori %262, %271 : i1
      %c1_i32_102 = arith.constant 1 : i32
      %c0_i32_103 = arith.constant 0 : i32
      %310 = arith.select %309, %c1_i32_102, %c0_i32_103 : i32
      %311 = arith.addi %244, %310 : i32
      %312 = arith.ori %250, %269 : i1
      %313 = arith.ori %246, %312 : i1
      %314 = arith.ori %247, %250 : i1
      %c4_i32 = arith.constant 4 : i32
      %true_104 = arith.constant true
      %315 = arith.xori %313, %true_104 : i1
      %c10000_i32_105 = arith.constant 10000 : i32
      %316 = arith.cmpi sgt, %311, %c10000_i32_105 : i32
      %317 = arith.andi %315, %316 : i1
      %true_106 = arith.constant true
      %318 = arith.xori %317, %true_106 : i1
      %319 = arith.andi %315, %318 : i1
      %320 = arith.mulf %298, %298 : f32
      %321 = arith.mulf %302, %302 : f32
      %322 = arith.addf %320, %321 : f32
      %323 = arith.mulf %306, %306 : f32
      %324 = arith.addf %322, %323 : f32
      %325 = math.sqrt %324 : f32
      %true_107 = arith.constant true
      %326 = arith.xori %308, %true_107 : i1
      %cst_108 = arith.constant 2.050000e-02 : f32
      %327 = arith.cmpf olt, %294, %cst_108 : f32
      %328 = arith.andi %326, %327 : i1
      %329 = arith.andi %319, %328 : i1
      %true_109 = arith.constant true
      %330 = arith.xori %328, %true_109 : i1
      %331 = arith.andi %319, %330 : i1
      %cst_110 = arith.constant 3.000000e+00 : f32
      %332 = arith.cmpf ogt, %293, %cst_110 : f32
      %cst_111 = arith.constant 1.985000e-02 : f32
      %333 = arith.cmpf olt, %294, %cst_111 : f32
      %334 = arith.andi %308, %333 : i1
      %335 = arith.ori %332, %334 : i1
      %336 = arith.andi %331, %335 : i1
      %true_112 = arith.constant true
      %337 = arith.xori %336, %true_112 : i1
      %338 = arith.andi %331, %337 : i1
      %cst_113 = arith.constant 1.800000e-05 : f32
      %339 = arith.mulf %cst_113, %325 : f32
      %cst_114 = arith.constant 1.000000e+00 : f32
      %340 = arith.subf %cst_114, %339 : f32
      %cst_115 = arith.constant 9.99999974E-5 : f32
      %341 = arith.mulf %298, %cst_115 : f32
      %342 = arith.addf %292, %341 : f32
      %cst_116 = arith.constant 9.99999974E-5 : f32
      %343 = arith.mulf %302, %cst_116 : f32
      %344 = arith.addf %293, %343 : f32
      %cst_117 = arith.constant 9.99999974E-5 : f32
      %345 = arith.mulf %306, %cst_117 : f32
      %346 = arith.addf %294, %345 : f32
      %347 = arith.mulf %298, %340 : f32
      %348 = arith.mulf %302, %340 : f32
      %349 = arith.mulf %306, %340 : f32
      %cst_118 = arith.constant 9.80149954E-4 : f32
      %350 = arith.subf %349, %cst_118 : f32
      %351 = arith.subf %6, %292 : f32
      %352 = arith.subf %7, %293 : f32
      %353 = arith.subf %8, %294 : f32
      %354 = arith.mulf %351, %351 : f32
      %355 = arith.mulf %352, %352 : f32
      %356 = arith.addf %354, %355 : f32
      %357 = arith.mulf %353, %353 : f32
      %358 = arith.addf %356, %357 : f32
      %359 = arith.select %338, %342, %292 : f32
      %360 = arith.select %338, %344, %293 : f32
      %361 = arith.select %338, %346, %294 : f32
      %cst_119 = arith.constant 6.488190e-01 : f32
      %362 = arith.mulf %cst_119, %298 : f32
      %cst_120 = arith.constant 1.049100e-02 : f32
      %363 = arith.addf %362, %cst_120 : f32
      %364 = arith.select %338, %347, %298 : f32
      %365 = arith.select %329, %363, %364 : f32
      %cst_121 = arith.constant 0.643549978 : f32
      %366 = arith.mulf %cst_121, %302 : f32
      %cst_122 = arith.constant 2.406400e-02 : f32
      %367 = arith.addf %366, %cst_122 : f32
      %368 = arith.select %338, %348, %302 : f32
      %369 = arith.select %329, %367, %368 : f32
      %cst_123 = arith.constant -8.073920e-01 : f32
      %370 = arith.mulf %cst_123, %306 : f32
      %cst_124 = arith.constant 4.681100e-01 : f32
      %371 = arith.addf %370, %cst_124 : f32
      %372 = arith.select %338, %350, %306 : f32
      %373 = arith.select %329, %371, %372 : f32
      %374 = arith.select %329, %358, %307 : f32
      %375 = arith.ori %308, %329 : i1
      %376 = arith.ori %329, %338 : i1
      %c1_i32_125 = arith.constant 1 : i32
      %c0_i32_126 = arith.constant 0 : i32
      %377 = arith.select %376, %c1_i32_125, %c0_i32_126 : i32
      %378 = arith.addi %311, %377 : i32
      %379 = arith.ori %317, %336 : i1
      %380 = arith.ori %313, %379 : i1
      %381 = arith.ori %314, %317 : i1
      %c5_i32 = arith.constant 5 : i32
      %true_127 = arith.constant true
      %382 = arith.xori %380, %true_127 : i1
      %c10000_i32_128 = arith.constant 10000 : i32
      %383 = arith.cmpi sgt, %378, %c10000_i32_128 : i32
      %384 = arith.andi %382, %383 : i1
      %true_129 = arith.constant true
      %385 = arith.xori %384, %true_129 : i1
      %386 = arith.andi %382, %385 : i1
      %387 = arith.mulf %365, %365 : f32
      %388 = arith.mulf %369, %369 : f32
      %389 = arith.addf %387, %388 : f32
      %390 = arith.mulf %373, %373 : f32
      %391 = arith.addf %389, %390 : f32
      %392 = math.sqrt %391 : f32
      %true_130 = arith.constant true
      %393 = arith.xori %375, %true_130 : i1
      %cst_131 = arith.constant 2.050000e-02 : f32
      %394 = arith.cmpf olt, %361, %cst_131 : f32
      %395 = arith.andi %393, %394 : i1
      %396 = arith.andi %386, %395 : i1
      %true_132 = arith.constant true
      %397 = arith.xori %395, %true_132 : i1
      %398 = arith.andi %386, %397 : i1
      %cst_133 = arith.constant 3.000000e+00 : f32
      %399 = arith.cmpf ogt, %360, %cst_133 : f32
      %cst_134 = arith.constant 1.985000e-02 : f32
      %400 = arith.cmpf olt, %361, %cst_134 : f32
      %401 = arith.andi %375, %400 : i1
      %402 = arith.ori %399, %401 : i1
      %403 = arith.andi %398, %402 : i1
      %true_135 = arith.constant true
      %404 = arith.xori %403, %true_135 : i1
      %405 = arith.andi %398, %404 : i1
      %cst_136 = arith.constant 1.800000e-05 : f32
      %406 = arith.mulf %cst_136, %392 : f32
      %cst_137 = arith.constant 1.000000e+00 : f32
      %407 = arith.subf %cst_137, %406 : f32
      %cst_138 = arith.constant 9.99999974E-5 : f32
      %408 = arith.mulf %365, %cst_138 : f32
      %409 = arith.addf %359, %408 : f32
      %cst_139 = arith.constant 9.99999974E-5 : f32
      %410 = arith.mulf %369, %cst_139 : f32
      %411 = arith.addf %360, %410 : f32
      %cst_140 = arith.constant 9.99999974E-5 : f32
      %412 = arith.mulf %373, %cst_140 : f32
      %413 = arith.addf %361, %412 : f32
      %414 = arith.mulf %365, %407 : f32
      %415 = arith.mulf %369, %407 : f32
      %416 = arith.mulf %373, %407 : f32
      %cst_141 = arith.constant 9.80149954E-4 : f32
      %417 = arith.subf %416, %cst_141 : f32
      %418 = arith.subf %6, %359 : f32
      %419 = arith.subf %7, %360 : f32
      %420 = arith.subf %8, %361 : f32
      %421 = arith.mulf %418, %418 : f32
      %422 = arith.mulf %419, %419 : f32
      %423 = arith.addf %421, %422 : f32
      %424 = arith.mulf %420, %420 : f32
      %425 = arith.addf %423, %424 : f32
      %426 = arith.select %405, %409, %359 : f32
      %427 = arith.select %405, %411, %360 : f32
      %428 = arith.select %405, %413, %361 : f32
      %cst_142 = arith.constant 6.488190e-01 : f32
      %429 = arith.mulf %cst_142, %365 : f32
      %cst_143 = arith.constant 1.049100e-02 : f32
      %430 = arith.addf %429, %cst_143 : f32
      %431 = arith.select %405, %414, %365 : f32
      %432 = arith.select %396, %430, %431 : f32
      %cst_144 = arith.constant 0.643549978 : f32
      %433 = arith.mulf %cst_144, %369 : f32
      %cst_145 = arith.constant 2.406400e-02 : f32
      %434 = arith.addf %433, %cst_145 : f32
      %435 = arith.select %405, %415, %369 : f32
      %436 = arith.select %396, %434, %435 : f32
      %cst_146 = arith.constant -8.073920e-01 : f32
      %437 = arith.mulf %cst_146, %373 : f32
      %cst_147 = arith.constant 4.681100e-01 : f32
      %438 = arith.addf %437, %cst_147 : f32
      %439 = arith.select %405, %417, %373 : f32
      %440 = arith.select %396, %438, %439 : f32
      %441 = arith.select %396, %425, %374 : f32
      %442 = arith.ori %375, %396 : i1
      %443 = arith.ori %396, %405 : i1
      %c1_i32_148 = arith.constant 1 : i32
      %c0_i32_149 = arith.constant 0 : i32
      %444 = arith.select %443, %c1_i32_148, %c0_i32_149 : i32
      %445 = arith.addi %378, %444 : i32
      %446 = arith.ori %384, %403 : i1
      %447 = arith.ori %380, %446 : i1
      %448 = arith.ori %381, %384 : i1
      %c6_i32 = arith.constant 6 : i32
      %true_150 = arith.constant true
      %449 = arith.xori %447, %true_150 : i1
      %c10000_i32_151 = arith.constant 10000 : i32
      %450 = arith.cmpi sgt, %445, %c10000_i32_151 : i32
      %451 = arith.andi %449, %450 : i1
      %true_152 = arith.constant true
      %452 = arith.xori %451, %true_152 : i1
      %453 = arith.andi %449, %452 : i1
      %454 = arith.mulf %432, %432 : f32
      %455 = arith.mulf %436, %436 : f32
      %456 = arith.addf %454, %455 : f32
      %457 = arith.mulf %440, %440 : f32
      %458 = arith.addf %456, %457 : f32
      %459 = math.sqrt %458 : f32
      %true_153 = arith.constant true
      %460 = arith.xori %442, %true_153 : i1
      %cst_154 = arith.constant 2.050000e-02 : f32
      %461 = arith.cmpf olt, %428, %cst_154 : f32
      %462 = arith.andi %460, %461 : i1
      %463 = arith.andi %453, %462 : i1
      %true_155 = arith.constant true
      %464 = arith.xori %462, %true_155 : i1
      %465 = arith.andi %453, %464 : i1
      %cst_156 = arith.constant 3.000000e+00 : f32
      %466 = arith.cmpf ogt, %427, %cst_156 : f32
      %cst_157 = arith.constant 1.985000e-02 : f32
      %467 = arith.cmpf olt, %428, %cst_157 : f32
      %468 = arith.andi %442, %467 : i1
      %469 = arith.ori %466, %468 : i1
      %470 = arith.andi %465, %469 : i1
      %true_158 = arith.constant true
      %471 = arith.xori %470, %true_158 : i1
      %472 = arith.andi %465, %471 : i1
      %cst_159 = arith.constant 1.800000e-05 : f32
      %473 = arith.mulf %cst_159, %459 : f32
      %cst_160 = arith.constant 1.000000e+00 : f32
      %474 = arith.subf %cst_160, %473 : f32
      %cst_161 = arith.constant 9.99999974E-5 : f32
      %475 = arith.mulf %432, %cst_161 : f32
      %476 = arith.addf %426, %475 : f32
      %cst_162 = arith.constant 9.99999974E-5 : f32
      %477 = arith.mulf %436, %cst_162 : f32
      %478 = arith.addf %427, %477 : f32
      %cst_163 = arith.constant 9.99999974E-5 : f32
      %479 = arith.mulf %440, %cst_163 : f32
      %480 = arith.addf %428, %479 : f32
      %481 = arith.mulf %432, %474 : f32
      %482 = arith.mulf %436, %474 : f32
      %483 = arith.mulf %440, %474 : f32
      %cst_164 = arith.constant 9.80149954E-4 : f32
      %484 = arith.subf %483, %cst_164 : f32
      %485 = arith.subf %6, %426 : f32
      %486 = arith.subf %7, %427 : f32
      %487 = arith.subf %8, %428 : f32
      %488 = arith.mulf %485, %485 : f32
      %489 = arith.mulf %486, %486 : f32
      %490 = arith.addf %488, %489 : f32
      %491 = arith.mulf %487, %487 : f32
      %492 = arith.addf %490, %491 : f32
      %493 = arith.select %472, %476, %426 : f32
      %494 = arith.select %472, %478, %427 : f32
      %495 = arith.select %472, %480, %428 : f32
      %cst_165 = arith.constant 6.488190e-01 : f32
      %496 = arith.mulf %cst_165, %432 : f32
      %cst_166 = arith.constant 1.049100e-02 : f32
      %497 = arith.addf %496, %cst_166 : f32
      %498 = arith.select %472, %481, %432 : f32
      %499 = arith.select %463, %497, %498 : f32
      %cst_167 = arith.constant 0.643549978 : f32
      %500 = arith.mulf %cst_167, %436 : f32
      %cst_168 = arith.constant 2.406400e-02 : f32
      %501 = arith.addf %500, %cst_168 : f32
      %502 = arith.select %472, %482, %436 : f32
      %503 = arith.select %463, %501, %502 : f32
      %cst_169 = arith.constant -8.073920e-01 : f32
      %504 = arith.mulf %cst_169, %440 : f32
      %cst_170 = arith.constant 4.681100e-01 : f32
      %505 = arith.addf %504, %cst_170 : f32
      %506 = arith.select %472, %484, %440 : f32
      %507 = arith.select %463, %505, %506 : f32
      %508 = arith.select %463, %492, %441 : f32
      %509 = arith.ori %442, %463 : i1
      %510 = arith.ori %463, %472 : i1
      %c1_i32_171 = arith.constant 1 : i32
      %c0_i32_172 = arith.constant 0 : i32
      %511 = arith.select %510, %c1_i32_171, %c0_i32_172 : i32
      %512 = arith.addi %445, %511 : i32
      %513 = arith.ori %451, %470 : i1
      %514 = arith.ori %447, %513 : i1
      %515 = arith.ori %448, %451 : i1
      %c7_i32 = arith.constant 7 : i32
      %true_173 = arith.constant true
      %516 = arith.xori %514, %true_173 : i1
      %c10000_i32_174 = arith.constant 10000 : i32
      %517 = arith.cmpi sgt, %512, %c10000_i32_174 : i32
      %518 = arith.andi %516, %517 : i1
      %true_175 = arith.constant true
      %519 = arith.xori %518, %true_175 : i1
      %520 = arith.andi %516, %519 : i1
      %521 = arith.mulf %499, %499 : f32
      %522 = arith.mulf %503, %503 : f32
      %523 = arith.addf %521, %522 : f32
      %524 = arith.mulf %507, %507 : f32
      %525 = arith.addf %523, %524 : f32
      %526 = math.sqrt %525 : f32
      %true_176 = arith.constant true
      %527 = arith.xori %509, %true_176 : i1
      %cst_177 = arith.constant 2.050000e-02 : f32
      %528 = arith.cmpf olt, %495, %cst_177 : f32
      %529 = arith.andi %527, %528 : i1
      %530 = arith.andi %520, %529 : i1
      %true_178 = arith.constant true
      %531 = arith.xori %529, %true_178 : i1
      %532 = arith.andi %520, %531 : i1
      %cst_179 = arith.constant 3.000000e+00 : f32
      %533 = arith.cmpf ogt, %494, %cst_179 : f32
      %cst_180 = arith.constant 1.985000e-02 : f32
      %534 = arith.cmpf olt, %495, %cst_180 : f32
      %535 = arith.andi %509, %534 : i1
      %536 = arith.ori %533, %535 : i1
      %537 = arith.andi %532, %536 : i1
      %true_181 = arith.constant true
      %538 = arith.xori %537, %true_181 : i1
      %539 = arith.andi %532, %538 : i1
      %cst_182 = arith.constant 1.800000e-05 : f32
      %540 = arith.mulf %cst_182, %526 : f32
      %cst_183 = arith.constant 1.000000e+00 : f32
      %541 = arith.subf %cst_183, %540 : f32
      %cst_184 = arith.constant 9.99999974E-5 : f32
      %542 = arith.mulf %499, %cst_184 : f32
      %543 = arith.addf %493, %542 : f32
      %cst_185 = arith.constant 9.99999974E-5 : f32
      %544 = arith.mulf %503, %cst_185 : f32
      %545 = arith.addf %494, %544 : f32
      %cst_186 = arith.constant 9.99999974E-5 : f32
      %546 = arith.mulf %507, %cst_186 : f32
      %547 = arith.addf %495, %546 : f32
      %548 = arith.mulf %499, %541 : f32
      %549 = arith.mulf %503, %541 : f32
      %550 = arith.mulf %507, %541 : f32
      %cst_187 = arith.constant 9.80149954E-4 : f32
      %551 = arith.subf %550, %cst_187 : f32
      %552 = arith.subf %6, %493 : f32
      %553 = arith.subf %7, %494 : f32
      %554 = arith.subf %8, %495 : f32
      %555 = arith.mulf %552, %552 : f32
      %556 = arith.mulf %553, %553 : f32
      %557 = arith.addf %555, %556 : f32
      %558 = arith.mulf %554, %554 : f32
      %559 = arith.addf %557, %558 : f32
      %560 = arith.select %539, %543, %493 : f32
      %561 = arith.select %539, %545, %494 : f32
      %562 = arith.select %539, %547, %495 : f32
      %cst_188 = arith.constant 6.488190e-01 : f32
      %563 = arith.mulf %cst_188, %499 : f32
      %cst_189 = arith.constant 1.049100e-02 : f32
      %564 = arith.addf %563, %cst_189 : f32
      %565 = arith.select %539, %548, %499 : f32
      %566 = arith.select %530, %564, %565 : f32
      %cst_190 = arith.constant 0.643549978 : f32
      %567 = arith.mulf %cst_190, %503 : f32
      %cst_191 = arith.constant 2.406400e-02 : f32
      %568 = arith.addf %567, %cst_191 : f32
      %569 = arith.select %539, %549, %503 : f32
      %570 = arith.select %530, %568, %569 : f32
      %cst_192 = arith.constant -8.073920e-01 : f32
      %571 = arith.mulf %cst_192, %507 : f32
      %cst_193 = arith.constant 4.681100e-01 : f32
      %572 = arith.addf %571, %cst_193 : f32
      %573 = arith.select %539, %551, %507 : f32
      %574 = arith.select %530, %572, %573 : f32
      %575 = arith.select %530, %559, %508 : f32
      %576 = arith.ori %509, %530 : i1
      %577 = arith.ori %530, %539 : i1
      %c1_i32_194 = arith.constant 1 : i32
      %c0_i32_195 = arith.constant 0 : i32
      %578 = arith.select %577, %c1_i32_194, %c0_i32_195 : i32
      %579 = arith.addi %512, %578 : i32
      %580 = arith.ori %518, %537 : i1
      %581 = arith.ori %514, %580 : i1
      %582 = arith.ori %515, %518 : i1
      %c8_i32 = arith.constant 8 : i32
      scf.yield %560, %561, %562, %566, %570, %574, %576, %579, %575, %581, %582 : f32, f32, f32, f32, f32, f32, i1, i32, f32, i1, i1
    }
    %30 = arith.subf %29#0, %9 : f32
    %31 = arith.subf %29#1, %10 : f32
    %32 = arith.subf %29#2, %11 : f32
    %33 = arith.mulf %30, %30 : f32
    %34 = arith.mulf %31, %31 : f32
    %35 = arith.addf %33, %34 : f32
    %36 = arith.mulf %32, %32 : f32
    %37 = arith.addf %35, %36 : f32
    %38 = math.sqrt %37 : f32
    %c0_8 = arith.constant 0 : index
    %39 = memref.load %arg1[%c0_8] : memref<3xf32, #tpu.memory_space<smem>>
    memref.store %38, %arg1[%c0_8] : memref<3xf32, #tpu.memory_space<smem>>
    %40 = math.sqrt %29#8 : f32
    %c1_9 = arith.constant 1 : index
    %41 = memref.load %arg1[%c1_9] : memref<3xf32, #tpu.memory_space<smem>>
    memref.store %40, %arg1[%c1_9] : memref<3xf32, #tpu.memory_space<smem>>
    %42 = arith.sitofp %29#7 : i32 to f32
    %cst_10 = arith.constant 9.99999974E-5 : f32
    %43 = arith.mulf %42, %cst_10 : f32
    %44 = arith.subf %43, %15 : f32
    %45 = math.absf %44 : f32
    %c2_11 = arith.constant 2 : index
    %46 = memref.load %arg1[%c2_11] : memref<3xf32, #tpu.memory_space<smem>>
    memref.store %45, %arg1[%c2_11] : memref<3xf32, #tpu.memory_space<smem>>
    return
  }
}

</mosaic_0001>

<llo_original>
// kernel: tpu_custom_call.1
$region0: #{tpu_custom_call.1}
  #allocation0 [shape = 'u32[]', space=smem, size = 0x4, offset = 0x4, fixed_abs, tag = 'smem constant byte address 0x4 - core index']
  #allocation1 [shape = 'u32[72,128]{1,0:T(1,128)}', space=vmem, size = 0x9000, scoped, tag = 'internal scratch']
  %s0 = inlined_call_operand.hbm [shape: f32[16], index: 0, kind: input, shape index: {}]
  %s1 = inlined_call_operand.hbm [shape: f32[3], index: 1, kind: output, shape index: {}]
  %s2 = sld [smem:[#allocation0]]
  $region39: #{tpu_custom_call.1} parent=0
    _
  %s4 = ssub.s32 1, %s2
  %s5 = scalar_select 0, %s4, %s2
  $region1: #{tpu_custom_call.1} parent=0
    #allocation2 [shape = 'u8[512]{0}', space=smem, size = 0x200, scoped, tag = 'input window, operand 0, single buffered']
    #allocation3 [shape = 's32[1]{0}', space=sflag, size = 0x4, scoped, tag = 'scoped memory for tpu_custom_call.1']
    #allocation4 [shape = 's32[1]{0}', space=sflag, size = 0x4, scoped, tag = 'scoped memory for tpu_custom_call.1']
    #allocation5 [shape = 'u8[512]{0}', space=smem, size = 0x200, scoped, tag = 'output window, operand 0, single buffered']
    %6 = vsyncpa [#allocation3], 0
    %7 = vsyncpa [#allocation4], 0
    // Predicated region
    $region2: #{tpu_custom_call.1} parent=1 // pred_check
      _
    $region3: #{tpu_custom_call.1} parent=1 // pred_check_branch
      %9 = sbr.rel (0) target = $region5
    $region4: #{tpu_custom_call.1} parent=1 // pred_region
      %11 = vsyncadd [#allocation3], 0
      %s13 = sshll.u32 %s0, 4
      %s14 = int_to_ptr.hbm [resolvable:$true] %s13
      %16 = dma.hbm_to_smem %s14, 16, [#allocation2], [#allocation3]
    $region5: #{tpu_custom_call.1} parent=1 // pred_fallthru
      _
    // Predicated region
    $region6: #{tpu_custom_call.1} parent=1 // pred_check
      _
    $region7: #{tpu_custom_call.1} parent=1 // pred_check_branch
      %18 = sbr.rel (0) target = $region9
    $region8: #{tpu_custom_call.1} parent=1 // pred_region
      %20 = dma.done [#allocation3], 16
    $region9: #{tpu_custom_call.1} parent=1 // pred_fallthru
      _
    %21 = sfence
    %s22 = sld [smem:[#allocation2]]
    %s23 = sld [smem:[#allocation2 + $0x1]]
    %s24 = sld [smem:[#allocation2 + $0x2]]
    %s25 = sld [smem:[#allocation2 + $0x3]]
    %s26 = sld [smem:[#allocation2 + $0x4]]
    %s27 = sld [smem:[#allocation2 + $0x5]]
    %s28 = sld [smem:[#allocation2 + $0x6]]
    %s29 = sld [smem:[#allocation2 + $0x7]]
    %s30 = sld [smem:[#allocation2 + $0x8]]
    %s31 = sld [smem:[#allocation2 + $0x9]]
    %s32 = sld [smem:[#allocation2 + $0xa]]
    %s33 = sld [smem:[#allocation2 + $0xb]]
    %s34 = sld [smem:[#allocation2 + $0xc]]
    %s35 = sld [smem:[#allocation2 + $0xd]]
    %s36 = sld [smem:[#allocation2 + $0xe]]
    %s37 = sld [smem:[#allocation2 + $0xf]]
    // While loop
    $region10: #{tpu_custom_call.1} parent=1 // loop_pre_header
      _
    $region11: #{tpu_custom_call.1} parent=1 // loop_header
      %s39 = sphi %s22, %s734
      %s40 = sphi %s23, %s735
      %s41 = sphi %s24, %s736
      %s42 = sphi %s25, %s740
      %s43 = sphi %s26, %s744
      %s44 = sphi %s27, %s748
      %p45 = pphi 0, %p750
      %s46 = sphi 0, %s753
      %s47 = sphi 0.0, %s749
      %p48 = pphi 0, %p755
      %p49 = pphi 0, %p756
      %p50 = pneg %p48
    $region12: #{tpu_custom_call.1} parent=1 // loop_header_branch
      %52 = sbr.rel (%p48) target = $region16
    $region13: #{tpu_custom_call.1} parent=1 // loop_body
      %p53 = pneg %p48
      %p54 = scmp.gt.s32.totalorder %s46, 10000
      %p55 = pnand %p53, %p54
      %p56 = pneg %p55
      %p57 = pneg %p56
      %p58 = pnand %p53, %p57
      %p59 = pneg %p58
      %s60 = smul.f32 %s42, %s42
      %s61 = smul.f32 %s43, %s43
      %s62 = sadd.f32 %s60, %s61
      %s63 = smul.f32 %s44, %s44
      %s64 = sadd.f32 %s62, %s63
      %v65 = vstv %s64
      %v66 = vrsqrt.pop %v65
      %v67 = vmul.f32 %v66, %v65
      %v68 = vmul.f32 %v67, %v66
      %v69 = vmul.f32 0.5, %v68
      %v70 = vsub.f32 1.5, %v69
      %v71 = vmul.f32 %v66, %v70
      %v72 = vmul.f32 %v65, %v71
      %vm73 = vcmp.eq.f32.partialorder %v65, inf
      %v74 = vsel %vm73, %v65, %v72
      %vm75 = vcmp.eq.f32.partialorder %v65, 0.0
      %v76 = vand.u32 %v65, 2147483648
      %v77 = vsel %vm75, %v76, %v74
      %s78 = vtos %v77
      %p79 = pneg %p45
      %p80 = scmp.lt.f32.partialorder %s41, 0.0205
      %p81 = pnand %p79, %p80
      %p82 = pneg %p81
      %p83 = pnand %p59, %p82
      %p84 = pneg %p83
      %p85 = pneg %p82
      %p86 = pnand %p59, %p85
      %p87 = pneg %p86
      %p88 = scmp.gt.f32.partialorder %s40, 3.0
      %p89 = scmp.lt.f32.partialorder %s41, 0.01985
      %p90 = pnand %p45, %p89
      %p91 = pneg %p90
      %p92 = por %p88, %p91
      %p93 = pnand %p87, %p92
      %p94 = pneg %p93
      %p95 = pneg %p94
      %p96 = pnand %p87, %p95
      %p97 = pneg %p96
      %s98 = smul.f32 %s78, 1.8e-05
      %s99 = ssub.f32 1.0, %s98
      %s100 = smul.f32 %s42, 0.0001
      %s101 = sadd.f32 %s39, %s100
      %s102 = smul.f32 %s43, 0.0001
      %s103 = sadd.f32 %s40, %s102
      %s104 = smul.f32 %s44, 0.0001
      %s105 = sadd.f32 %s41, %s104
      %s106 = smul.f32 %s42, %s99
      %s107 = smul.f32 %s43, %s99
      %s108 = smul.f32 %s44, %s99
      %s109 = ssub.f32 %s108, 0.00098015
      %s110 = ssub.f32 %s28, %s39
      %s111 = ssub.f32 %s29, %s40
      %s112 = ssub.f32 %s30, %s41
      %s113 = smul.f32 %s110, %s110
      %s114 = smul.f32 %s111, %s111
      %s115 = sadd.f32 %s113, %s114
      %s116 = smul.f32 %s112, %s112
      %s117 = sadd.f32 %s115, %s116
      %s118 = scalar_select %p97, %s101, %s39
      %s119 = scalar_select %p97, %s103, %s40
      %s120 = scalar_select %p97, %s105, %s41
      %s121 = smul.f32 %s42, 0.648819
      %s122 = sadd.f32 %s121, 0.010491
      %s123 = scalar_select %p97, %s106, %s42
      %s124 = scalar_select %p84, %s122, %s123
      %s125 = smul.f32 %s43, 0.64355
      %s126 = sadd.f32 %s125, 0.024064
      %s127 = scalar_select %p97, %s107, %s43
      %s128 = scalar_select %p84, %s126, %s127
      %s129 = smul.f32 %s44, -0.807392
      %s130 = sadd.f32 %s129, 0.46811
      %s131 = scalar_select %p97, %s109, %s44
      %s132 = scalar_select %p84, %s130, %s131
      %s133 = scalar_select %p84, %s117, %s47
      %p134 = por %p45, %p84
      %p135 = por %p84, %p97
      %s136 = scalar_select %p135, 1, 0
      %s137 = sadd.s32 %s46, %s136
      %p138 = por %p56, %p94
      %p139 = por %p48, %p138
      %p140 = por %p49, %p56
      %p141 = pneg %p139
      %p142 = scmp.gt.s32.totalorder %s137, 10000
      %p143 = pnand %p141, %p142
      %p144 = pneg %p143
      %p145 = pneg %p144
      %p146 = pnand %p141, %p145
      %p147 = pneg %p146
      %s148 = smul.f32 %s124, %s124
      %s149 = smul.f32 %s128, %s128
      %s150 = sadd.f32 %s148, %s149
      %s151 = smul.f32 %s132, %s132
      %s152 = sadd.f32 %s150, %s151
      %v153 = vstv %s152
      %v154 = vrsqrt.pop %v153
      %v155 = vmul.f32 %v154, %v153
      %v156 = vmul.f32 %v155, %v154
      %v157 = vmul.f32 0.5, %v156
      %v158 = vsub.f32 1.5, %v157
      %v159 = vmul.f32 %v154, %v158
      %v160 = vmul.f32 %v153, %v159
      %vm161 = vcmp.eq.f32.partialorder %v153, inf
      %v162 = vsel %vm161, %v153, %v160
      %vm163 = vcmp.eq.f32.partialorder %v153, 0.0
      %v164 = vand.u32 %v153, 2147483648
      %v165 = vsel %vm163, %v164, %v162
      %s166 = vtos %v165
      %p167 = pneg %p134
      %p168 = scmp.lt.f32.partialorder %s120, 0.0205
      %p169 = pnand %p167, %p168
      %p170 = pneg %p169
      %p171 = pnand %p147, %p170
      %p172 = pneg %p171
      %p173 = pneg %p170
      %p174 = pnand %p147, %p173
      %p175 = pneg %p174
      %p176 = scmp.gt.f32.partialorder %s119, 3.0
      %p177 = scmp.lt.f32.partialorder %s120, 0.01985
      %p178 = pnand %p134, %p177
      %p179 = pneg %p178
      %p180 = por %p176, %p179
      %p181 = pnand %p175, %p180
      %p182 = pneg %p181
      %p183 = pneg %p182
      %p184 = pnand %p175, %p183
      %p185 = pneg %p184
      %s186 = smul.f32 %s166, 1.8e-05
      %s187 = ssub.f32 1.0, %s186
      %s188 = smul.f32 %s124, 0.0001
      %s189 = sadd.f32 %s118, %s188
      %s190 = smul.f32 %s128, 0.0001
      %s191 = sadd.f32 %s119, %s190
      %s192 = smul.f32 %s132, 0.0001
      %s193 = sadd.f32 %s120, %s192
      %s194 = smul.f32 %s124, %s187
      %s195 = smul.f32 %s128, %s187
      %s196 = smul.f32 %s132, %s187
      %s197 = ssub.f32 %s196, 0.00098015
      %s198 = ssub.f32 %s28, %s118
      %s199 = ssub.f32 %s29, %s119
      %s200 = ssub.f32 %s30, %s120
      %s201 = smul.f32 %s198, %s198
      %s202 = smul.f32 %s199, %s199
      %s203 = sadd.f32 %s201, %s202
      %s204 = smul.f32 %s200, %s200
      %s205 = sadd.f32 %s203, %s204
      %s206 = scalar_select %p185, %s189, %s118
      %s207 = scalar_select %p185, %s191, %s119
      %s208 = scalar_select %p185, %s193, %s120
      %s209 = smul.f32 %s124, 0.648819
      %s210 = sadd.f32 %s209, 0.010491
      %s211 = scalar_select %p185, %s194, %s124
      %s212 = scalar_select %p172, %s210, %s211
      %s213 = smul.f32 %s128, 0.64355
      %s214 = sadd.f32 %s213, 0.024064
      %s215 = scalar_select %p185, %s195, %s128
      %s216 = scalar_select %p172, %s214, %s215
      %s217 = smul.f32 %s132, -0.807392
      %s218 = sadd.f32 %s217, 0.46811
      %s219 = scalar_select %p185, %s197, %s132
      %s220 = scalar_select %p172, %s218, %s219
      %s221 = scalar_select %p172, %s205, %s133
      %p222 = por %p134, %p172
      %p223 = por %p172, %p185
      %s224 = scalar_select %p223, 1, 0
      %s225 = sadd.s32 %s137, %s224
      %p226 = por %p144, %p182
      %p227 = por %p139, %p226
      %p228 = por %p140, %p144
      %p229 = pneg %p227
      %p230 = scmp.gt.s32.totalorder %s225, 10000
      %p231 = pnand %p229, %p230
      %p232 = pneg %p231
      %p233 = pneg %p232
      %p234 = pnand %p229, %p233
      %p235 = pneg %p234
      %s236 = smul.f32 %s212, %s212
      %s237 = smul.f32 %s216, %s216
      %s238 = sadd.f32 %s236, %s237
      %s239 = smul.f32 %s220, %s220
      %s240 = sadd.f32 %s238, %s239
      %v241 = vstv %s240
      %v242 = vrsqrt.pop %v241
      %v243 = vmul.f32 %v242, %v241
      %v244 = vmul.f32 %v243, %v242
      %v245 = vmul.f32 0.5, %v244
      %v246 = vsub.f32 1.5, %v245
      %v247 = vmul.f32 %v242, %v246
      %v248 = vmul.f32 %v241, %v247
      %vm249 = vcmp.eq.f32.partialorder %v241, inf
      %v250 = vsel %vm249, %v241, %v248
      %vm251 = vcmp.eq.f32.partialorder %v241, 0.0
      %v252 = vand.u32 %v241, 2147483648
      %v253 = vsel %vm251, %v252, %v250
      %s254 = vtos %v253
      %p255 = pneg %p222
      %p256 = scmp.lt.f32.partialorder %s208, 0.0205
      %p257 = pnand %p255, %p256
      %p258 = pneg %p257
      %p259 = pnand %p235, %p258
      %p260 = pneg %p259
      %p261 = pneg %p258
      %p262 = pnand %p235, %p261
      %p263 = pneg %p262
      %p264 = scmp.gt.f32.partialorder %s207, 3.0
      %p265 = scmp.lt.f32.partialorder %s208, 0.01985
      %p266 = pnand %p222, %p265
      %p267 = pneg %p266
      %p268 = por %p264, %p267
      %p269 = pnand %p263, %p268
      %p270 = pneg %p269
      %p271 = pneg %p270
      %p272 = pnand %p263, %p271
      %p273 = pneg %p272
      %s274 = smul.f32 %s254, 1.8e-05
      %s275 = ssub.f32 1.0, %s274
      %s276 = smul.f32 %s212, 0.0001
      %s277 = sadd.f32 %s206, %s276
      %s278 = smul.f32 %s216, 0.0001
      %s279 = sadd.f32 %s207, %s278
      %s280 = smul.f32 %s220, 0.0001
      %s281 = sadd.f32 %s208, %s280
      %s282 = smul.f32 %s212, %s275
      %s283 = smul.f32 %s216, %s275
      %s284 = smul.f32 %s220, %s275
      %s285 = ssub.f32 %s284, 0.00098015
      %s286 = ssub.f32 %s28, %s206
      %s287 = ssub.f32 %s29, %s207
      %s288 = ssub.f32 %s30, %s208
      %s289 = smul.f32 %s286, %s286
      %s290 = smul.f32 %s287, %s287
      %s291 = sadd.f32 %s289, %s290
      %s292 = smul.f32 %s288, %s288
      %s293 = sadd.f32 %s291, %s292
      %s294 = scalar_select %p273, %s277, %s206
      %s295 = scalar_select %p273, %s279, %s207
      %s296 = scalar_select %p273, %s281, %s208
      %s297 = smul.f32 %s212, 0.648819
      %s298 = sadd.f32 %s297, 0.010491
      %s299 = scalar_select %p273, %s282, %s212
      %s300 = scalar_select %p260, %s298, %s299
      %s301 = smul.f32 %s216, 0.64355
      %s302 = sadd.f32 %s301, 0.024064
      %s303 = scalar_select %p273, %s283, %s216
      %s304 = scalar_select %p260, %s302, %s303
      %s305 = smul.f32 %s220, -0.807392
      %s306 = sadd.f32 %s305, 0.46811
      %s307 = scalar_select %p273, %s285, %s220
      %s308 = scalar_select %p260, %s306, %s307
      %s309 = scalar_select %p260, %s293, %s221
      %p310 = por %p222, %p260
      %p311 = por %p260, %p273
      %s312 = scalar_select %p311, 1, 0
      %s313 = sadd.s32 %s225, %s312
      %p314 = por %p232, %p270
      %p315 = por %p227, %p314
      %p316 = por %p228, %p232
      %p317 = pneg %p315
      %p318 = scmp.gt.s32.totalorder %s313, 10000
      %p319 = pnand %p317, %p318
      %p320 = pneg %p319
      %p321 = pneg %p320
      %p322 = pnand %p317, %p321
      %p323 = pneg %p322
      %s324 = smul.f32 %s300, %s300
      %s325 = smul.f32 %s304, %s304
      %s326 = sadd.f32 %s324, %s325
      %s327 = smul.f32 %s308, %s308
      %s328 = sadd.f32 %s326, %s327
      %v329 = vstv %s328
      %v330 = vrsqrt.pop %v329
      %v331 = vmul.f32 %v330, %v329
      %v332 = vmul.f32 %v331, %v330
      %v333 = vmul.f32 0.5, %v332
      %v334 = vsub.f32 1.5, %v333
      %v335 = vmul.f32 %v330, %v334
      %v336 = vmul.f32 %v329, %v335
      %vm337 = vcmp.eq.f32.partialorder %v329, inf
      %v338 = vsel %vm337, %v329, %v336
      %vm339 = vcmp.eq.f32.partialorder %v329, 0.0
      %v340 = vand.u32 %v329, 2147483648
      %v341 = vsel %vm339, %v340, %v338
      %s342 = vtos %v341
      %p343 = pneg %p310
      %p344 = scmp.lt.f32.partialorder %s296, 0.0205
      %p345 = pnand %p343, %p344
      %p346 = pneg %p345
      %p347 = pnand %p323, %p346
      %p348 = pneg %p347
      %p349 = pneg %p346
      %p350 = pnand %p323, %p349
      %p351 = pneg %p350
      %p352 = scmp.gt.f32.partialorder %s295, 3.0
      %p353 = scmp.lt.f32.partialorder %s296, 0.01985
      %p354 = pnand %p310, %p353
      %p355 = pneg %p354
      %p356 = por %p352, %p355
      %p357 = pnand %p351, %p356
      %p358 = pneg %p357
      %p359 = pneg %p358
      %p360 = pnand %p351, %p359
      %p361 = pneg %p360
      %s362 = smul.f32 %s342, 1.8e-05
      %s363 = ssub.f32 1.0, %s362
      %s364 = smul.f32 %s300, 0.0001
      %s365 = sadd.f32 %s294, %s364
      %s366 = smul.f32 %s304, 0.0001
      %s367 = sadd.f32 %s295, %s366
      %s368 = smul.f32 %s308, 0.0001
      %s369 = sadd.f32 %s296, %s368
      %s370 = smul.f32 %s300, %s363
      %s371 = smul.f32 %s304, %s363
      %s372 = smul.f32 %s308, %s363
      %s373 = ssub.f32 %s372, 0.00098015
      %s374 = ssub.f32 %s28, %s294
      %s375 = ssub.f32 %s29, %s295
      %s376 = ssub.f32 %s30, %s296
      %s377 = smul.f32 %s374, %s374
      %s378 = smul.f32 %s375, %s375
      %s379 = sadd.f32 %s377, %s378
      %s380 = smul.f32 %s376, %s376
      %s381 = sadd.f32 %s379, %s380
      %s382 = scalar_select %p361, %s365, %s294
      %s383 = scalar_select %p361, %s367, %s295
      %s384 = scalar_select %p361, %s369, %s296
      %s385 = smul.f32 %s300, 0.648819
      %s386 = sadd.f32 %s385, 0.010491
      %s387 = scalar_select %p361, %s370, %s300
      %s388 = scalar_select %p348, %s386, %s387
      %s389 = smul.f32 %s304, 0.64355
      %s390 = sadd.f32 %s389, 0.024064
      %s391 = scalar_select %p361, %s371, %s304
      %s392 = scalar_select %p348, %s390, %s391
      %s393 = smul.f32 %s308, -0.807392
      %s394 = sadd.f32 %s393, 0.46811
      %s395 = scalar_select %p361, %s373, %s308
      %s396 = scalar_select %p348, %s394, %s395
      %s397 = scalar_select %p348, %s381, %s309
      %p398 = por %p310, %p348
      %p399 = por %p348, %p361
      %s400 = scalar_select %p399, 1, 0
      %s401 = sadd.s32 %s313, %s400
      %p402 = por %p320, %p358
      %p403 = por %p315, %p402
      %p404 = por %p316, %p320
      %p405 = pneg %p403
      %p406 = scmp.gt.s32.totalorder %s401, 10000
      %p407 = pnand %p405, %p406
      %p408 = pneg %p407
      %p409 = pneg %p408
      %p410 = pnand %p405, %p409
      %p411 = pneg %p410
      %s412 = smul.f32 %s388, %s388
      %s413 = smul.f32 %s392, %s392
      %s414 = sadd.f32 %s412, %s413
      %s415 = smul.f32 %s396, %s396
      %s416 = sadd.f32 %s414, %s415
      %v417 = vstv %s416
      %v418 = vrsqrt.pop %v417
      %v419 = vmul.f32 %v418, %v417
      %v420 = vmul.f32 %v419, %v418
      %v421 = vmul.f32 0.5, %v420
      %v422 = vsub.f32 1.5, %v421
      %v423 = vmul.f32 %v418, %v422
      %v424 = vmul.f32 %v417, %v423
      %vm425 = vcmp.eq.f32.partialorder %v417, inf
      %v426 = vsel %vm425, %v417, %v424
      %vm427 = vcmp.eq.f32.partialorder %v417, 0.0
      %v428 = vand.u32 %v417, 2147483648
      %v429 = vsel %vm427, %v428, %v426
      %s430 = vtos %v429
      %p431 = pneg %p398
      %p432 = scmp.lt.f32.partialorder %s384, 0.0205
      %p433 = pnand %p431, %p432
      %p434 = pneg %p433
      %p435 = pnand %p411, %p434
      %p436 = pneg %p435
      %p437 = pneg %p434
      %p438 = pnand %p411, %p437
      %p439 = pneg %p438
      %p440 = scmp.gt.f32.partialorder %s383, 3.0
      %p441 = scmp.lt.f32.partialorder %s384, 0.01985
      %p442 = pnand %p398, %p441
      %p443 = pneg %p442
      %p444 = por %p440, %p443
      %p445 = pnand %p439, %p444
      %p446 = pneg %p445
      %p447 = pneg %p446
      %p448 = pnand %p439, %p447
      %p449 = pneg %p448
      %s450 = smul.f32 %s430, 1.8e-05
      %s451 = ssub.f32 1.0, %s450
      %s452 = smul.f32 %s388, 0.0001
      %s453 = sadd.f32 %s382, %s452
      %s454 = smul.f32 %s392, 0.0001
      %s455 = sadd.f32 %s383, %s454
      %s456 = smul.f32 %s396, 0.0001
      %s457 = sadd.f32 %s384, %s456
      %s458 = smul.f32 %s388, %s451
      %s459 = smul.f32 %s392, %s451
      %s460 = smul.f32 %s396, %s451
      %s461 = ssub.f32 %s460, 0.00098015
      %s462 = ssub.f32 %s28, %s382
      %s463 = ssub.f32 %s29, %s383
      %s464 = ssub.f32 %s30, %s384
      %s465 = smul.f32 %s462, %s462
      %s466 = smul.f32 %s463, %s463
      %s467 = sadd.f32 %s465, %s466
      %s468 = smul.f32 %s464, %s464
      %s469 = sadd.f32 %s467, %s468
      %s470 = scalar_select %p449, %s453, %s382
      %s471 = scalar_select %p449, %s455, %s383
      %s472 = scalar_select %p449, %s457, %s384
      %s473 = smul.f32 %s388, 0.648819
      %s474 = sadd.f32 %s473, 0.010491
      %s475 = scalar_select %p449, %s458, %s388
      %s476 = scalar_select %p436, %s474, %s475
      %s477 = smul.f32 %s392, 0.64355
      %s478 = sadd.f32 %s477, 0.024064
      %s479 = scalar_select %p449, %s459, %s392
      %s480 = scalar_select %p436, %s478, %s479
      %s481 = smul.f32 %s396, -0.807392
      %s482 = sadd.f32 %s481, 0.46811
      %s483 = scalar_select %p449, %s461, %s396
      %s484 = scalar_select %p436, %s482, %s483
      %s485 = scalar_select %p436, %s469, %s397
      %p486 = por %p398, %p436
      %p487 = por %p436, %p449
      %s488 = scalar_select %p487, 1, 0
      %s489 = sadd.s32 %s401, %s488
      %p490 = por %p408, %p446
      %p491 = por %p403, %p490
      %p492 = por %p404, %p408
      %p493 = pneg %p491
      %p494 = scmp.gt.s32.totalorder %s489, 10000
      %p495 = pnand %p493, %p494
      %p496 = pneg %p495
      %p497 = pneg %p496
      %p498 = pnand %p493, %p497
      %p499 = pneg %p498
      %s500 = smul.f32 %s476, %s476
      %s501 = smul.f32 %s480, %s480
      %s502 = sadd.f32 %s500, %s501
      %s503 = smul.f32 %s484, %s484
      %s504 = sadd.f32 %s502, %s503
      %v505 = vstv %s504
      %v506 = vrsqrt.pop %v505
      %v507 = vmul.f32 %v506, %v505
      %v508 = vmul.f32 %v507, %v506
      %v509 = vmul.f32 0.5, %v508
      %v510 = vsub.f32 1.5, %v509
      %v511 = vmul.f32 %v506, %v510
      %v512 = vmul.f32 %v505, %v511
      %vm513 = vcmp.eq.f32.partialorder %v505, inf
      %v514 = vsel %vm513, %v505, %v512
      %vm515 = vcmp.eq.f32.partialorder %v505, 0.0
      %v516 = vand.u32 %v505, 2147483648
      %v517 = vsel %vm515, %v516, %v514
      %s518 = vtos %v517
      %p519 = pneg %p486
      %p520 = scmp.lt.f32.partialorder %s472, 0.0205
      %p521 = pnand %p519, %p520
      %p522 = pneg %p521
      %p523 = pnand %p499, %p522
      %p524 = pneg %p523
      %p525 = pneg %p522
      %p526 = pnand %p499, %p525
      %p527 = pneg %p526
      %p528 = scmp.gt.f32.partialorder %s471, 3.0
      %p529 = scmp.lt.f32.partialorder %s472, 0.01985
      %p530 = pnand %p486, %p529
      %p531 = pneg %p530
      %p532 = por %p528, %p531
      %p533 = pnand %p527, %p532
      %p534 = pneg %p533
      %p535 = pneg %p534
      %p536 = pnand %p527, %p535
      %p537 = pneg %p536
      %s538 = smul.f32 %s518, 1.8e-05
      %s539 = ssub.f32 1.0, %s538
      %s540 = smul.f32 %s476, 0.0001
      %s541 = sadd.f32 %s470, %s540
      %s542 = smul.f32 %s480, 0.0001
      %s543 = sadd.f32 %s471, %s542
      %s544 = smul.f32 %s484, 0.0001
      %s545 = sadd.f32 %s472, %s544
      %s546 = smul.f32 %s476, %s539
      %s547 = smul.f32 %s480, %s539
      %s548 = smul.f32 %s484, %s539
      %s549 = ssub.f32 %s548, 0.00098015
      %s550 = ssub.f32 %s28, %s470
      %s551 = ssub.f32 %s29, %s471
      %s552 = ssub.f32 %s30, %s472
      %s553 = smul.f32 %s550, %s550
      %s554 = smul.f32 %s551, %s551
      %s555 = sadd.f32 %s553, %s554
      %s556 = smul.f32 %s552, %s552
      %s557 = sadd.f32 %s555, %s556
      %s558 = scalar_select %p537, %s541, %s470
      %s559 = scalar_select %p537, %s543, %s471
      %s560 = scalar_select %p537, %s545, %s472
      %s561 = smul.f32 %s476, 0.648819
      %s562 = sadd.f32 %s561, 0.010491
      %s563 = scalar_select %p537, %s546, %s476
      %s564 = scalar_select %p524, %s562, %s563
      %s565 = smul.f32 %s480, 0.64355
      %s566 = sadd.f32 %s565, 0.024064
      %s567 = scalar_select %p537, %s547, %s480
      %s568 = scalar_select %p524, %s566, %s567
      %s569 = smul.f32 %s484, -0.807392
      %s570 = sadd.f32 %s569, 0.46811
      %s571 = scalar_select %p537, %s549, %s484
      %s572 = scalar_select %p524, %s570, %s571
      %s573 = scalar_select %p524, %s557, %s485
      %p574 = por %p486, %p524
      %p575 = por %p524, %p537
      %s576 = scalar_select %p575, 1, 0
      %s577 = sadd.s32 %s489, %s576
      %p578 = por %p496, %p534
      %p579 = por %p491, %p578
      %p580 = por %p492, %p496
      %p581 = pneg %p579
      %p582 = scmp.gt.s32.totalorder %s577, 10000
      %p583 = pnand %p581, %p582
      %p584 = pneg %p583
      %p585 = pneg %p584
      %p586 = pnand %p581, %p585
      %p587 = pneg %p586
      %s588 = smul.f32 %s564, %s564
      %s589 = smul.f32 %s568, %s568
      %s590 = sadd.f32 %s588, %s589
      %s591 = smul.f32 %s572, %s572
      %s592 = sadd.f32 %s590, %s591
      %v593 = vstv %s592
      %v594 = vrsqrt.pop %v593
      %v595 = vmul.f32 %v594, %v593
      %v596 = vmul.f32 %v595, %v594
      %v597 = vmul.f32 0.5, %v596
      %v598 = vsub.f32 1.5, %v597
      %v599 = vmul.f32 %v594, %v598
      %v600 = vmul.f32 %v593, %v599
      %vm601 = vcmp.eq.f32.partialorder %v593, inf
      %v602 = vsel %vm601, %v593, %v600
      %vm603 = vcmp.eq.f32.partialorder %v593, 0.0
      %v604 = vand.u32 %v593, 2147483648
      %v605 = vsel %vm603, %v604, %v602
      %s606 = vtos %v605
      %p607 = pneg %p574
      %p608 = scmp.lt.f32.partialorder %s560, 0.0205
      %p609 = pnand %p607, %p608
      %p610 = pneg %p609
      %p611 = pnand %p587, %p610
      %p612 = pneg %p611
      %p613 = pneg %p610
      %p614 = pnand %p587, %p613
      %p615 = pneg %p614
      %p616 = scmp.gt.f32.partialorder %s559, 3.0
      %p617 = scmp.lt.f32.partialorder %s560, 0.01985
      %p618 = pnand %p574, %p617
      %p619 = pneg %p618
      %p620 = por %p616, %p619
      %p621 = pnand %p615, %p620
      %p622 = pneg %p621
      %p623 = pneg %p622
      %p624 = pnand %p615, %p623
      %p625 = pneg %p624
      %s626 = smul.f32 %s606, 1.8e-05
      %s627 = ssub.f32 1.0, %s626
      %s628 = smul.f32 %s564, 0.0001
      %s629 = sadd.f32 %s558, %s628
      %s630 = smul.f32 %s568, 0.0001
      %s631 = sadd.f32 %s559, %s630
      %s632 = smul.f32 %s572, 0.0001
      %s633 = sadd.f32 %s560, %s632
      %s634 = smul.f32 %s564, %s627
      %s635 = smul.f32 %s568, %s627
      %s636 = smul.f32 %s572, %s627
      %s637 = ssub.f32 %s636, 0.00098015
      %s638 = ssub.f32 %s28, %s558
      %s639 = ssub.f32 %s29, %s559
      %s640 = ssub.f32 %s30, %s560
      %s641 = smul.f32 %s638, %s638
      %s642 = smul.f32 %s639, %s639
      %s643 = sadd.f32 %s641, %s642
      %s644 = smul.f32 %s640, %s640
      %s645 = sadd.f32 %s643, %s644
      %s646 = scalar_select %p625, %s629, %s558
      %s647 = scalar_select %p625, %s631, %s559
      %s648 = scalar_select %p625, %s633, %s560
      %s649 = smul.f32 %s564, 0.648819
      %s650 = sadd.f32 %s649, 0.010491
      %s651 = scalar_select %p625, %s634, %s564
      %s652 = scalar_select %p612, %s650, %s651
      %s653 = smul.f32 %s568, 0.64355
      %s654 = sadd.f32 %s653, 0.024064
      %s655 = scalar_select %p625, %s635, %s568
      %s656 = scalar_select %p612, %s654, %s655
      %s657 = smul.f32 %s572, -0.807392
      %s658 = sadd.f32 %s657, 0.46811
      %s659 = scalar_select %p625, %s637, %s572
      %s660 = scalar_select %p612, %s658, %s659
      %s661 = scalar_select %p612, %s645, %s573
      %p662 = por %p574, %p612
      %p663 = por %p612, %p625
      %s664 = scalar_select %p663, 1, 0
      %s665 = sadd.s32 %s577, %s664
      %p666 = por %p584, %p622
      %p667 = por %p579, %p666
      %p668 = por %p580, %p584
      %p669 = pneg %p667
      %p670 = scmp.gt.s32.totalorder %s665, 10000
      %p671 = pnand %p669, %p670
      %p672 = pneg %p671
      %p673 = pneg %p672
      %p674 = pnand %p669, %p673
      %p675 = pneg %p674
      %s676 = smul.f32 %s652, %s652
      %s677 = smul.f32 %s656, %s656
      %s678 = sadd.f32 %s676, %s677
      %s679 = smul.f32 %s660, %s660
      %s680 = sadd.f32 %s678, %s679
      %v681 = vstv %s680
      %v682 = vrsqrt.pop %v681
      %v683 = vmul.f32 %v682, %v681
      %v684 = vmul.f32 %v683, %v682
      %v685 = vmul.f32 0.5, %v684
      %v686 = vsub.f32 1.5, %v685
      %v687 = vmul.f32 %v682, %v686
      %v688 = vmul.f32 %v681, %v687
      %vm689 = vcmp.eq.f32.partialorder %v681, inf
      %v690 = vsel %vm689, %v681, %v688
      %vm691 = vcmp.eq.f32.partialorder %v681, 0.0
      %v692 = vand.u32 %v681, 2147483648
      %v693 = vsel %vm691, %v692, %v690
      %s694 = vtos %v693
      %p695 = pneg %p662
      %p696 = scmp.lt.f32.partialorder %s648, 0.0205
      %p697 = pnand %p695, %p696
      %p698 = pneg %p697
      %p699 = pnand %p675, %p698
      %p700 = pneg %p699
      %p701 = pneg %p698
      %p702 = pnand %p675, %p701
      %p703 = pneg %p702
      %p704 = scmp.gt.f32.partialorder %s647, 3.0
      %p705 = scmp.lt.f32.partialorder %s648, 0.01985
      %p706 = pnand %p662, %p705
      %p707 = pneg %p706
      %p708 = por %p704, %p707
      %p709 = pnand %p703, %p708
      %p710 = pneg %p709
      %p711 = pneg %p710
      %p712 = pnand %p703, %p711
      %p713 = pneg %p712
      %s714 = smul.f32 %s694, 1.8e-05
      %s715 = ssub.f32 1.0, %s714
      %s716 = smul.f32 %s652, 0.0001
      %s717 = sadd.f32 %s646, %s716
      %s718 = smul.f32 %s656, 0.0001
      %s719 = sadd.f32 %s647, %s718
      %s720 = smul.f32 %s660, 0.0001
      %s721 = sadd.f32 %s648, %s720
      %s722 = smul.f32 %s652, %s715
      %s723 = smul.f32 %s656, %s715
      %s724 = smul.f32 %s660, %s715
      %s725 = ssub.f32 %s724, 0.00098015
      %s726 = ssub.f32 %s28, %s646
      %s727 = ssub.f32 %s29, %s647
      %s728 = ssub.f32 %s30, %s648
      %s729 = smul.f32 %s726, %s726
      %s730 = smul.f32 %s727, %s727
      %s731 = sadd.f32 %s729, %s730
      %s732 = smul.f32 %s728, %s728
      %s733 = sadd.f32 %s731, %s732
      %s734 = scalar_select %p713, %s717, %s646
      %s735 = scalar_select %p713, %s719, %s647
      %s736 = scalar_select %p713, %s721, %s648
      %s737 = smul.f32 %s652, 0.648819
      %s738 = sadd.f32 %s737, 0.010491
      %s739 = scalar_select %p713, %s722, %s652
      %s740 = scalar_select %p700, %s738, %s739
      %s741 = smul.f32 %s656, 0.64355
      %s742 = sadd.f32 %s741, 0.024064
      %s743 = scalar_select %p713, %s723, %s656
      %s744 = scalar_select %p700, %s742, %s743
      %s745 = smul.f32 %s660, -0.807392
      %s746 = sadd.f32 %s745, 0.46811
      %s747 = scalar_select %p713, %s725, %s660
      %s748 = scalar_select %p700, %s746, %s747
      %s749 = scalar_select %p700, %s733, %s661
      %p750 = por %p662, %p700
      %p751 = por %p700, %p713
      %s752 = scalar_select %p751, 1, 0
      %s753 = sadd.s32 %s665, %s752
      %p754 = por %p672, %p710
      %p755 = por %p667, %p754
      %p756 = por %p668, %p672
    $region14: #{tpu_custom_call.1} parent=1 // loop_footer
      _
    $region15: #{tpu_custom_call.1} parent=1 // loop_footer_branch
      %38 = sbr.rel target = $region11
    $region16: #{tpu_custom_call.1} parent=1 // loop_exit
      _
    %s757 = scalar_select %p49, %s34, %s39
    %s758 = scalar_select %p49, %s35, %s40
    %s759 = scalar_select %p49, %s36, %s41
    %s760 = scalar_select %p49, %s25, %s42
    %s761 = scalar_select %p49, %s26, %s43
    %s762 = scalar_select %p49, %s27, %s44
    %s763 = scalar_select 0, 1, 0
    %s764 = scalar_select %p45, 1, 0
    %s765 = scalar_select %p49, %s763, %s764
    %p766 = scmp.eq.s32.totalorder %s765, 1
    %s767 = scalar_select %p49, 0, %s46
    %p768 = pneg %p49
    // While loop
    $region17: #{tpu_custom_call.1} parent=1 // loop_pre_header
      _
    $region18: #{tpu_custom_call.1} parent=1 // loop_header
      %s770 = sphi %s757, %s1481
      %s771 = sphi %s758, %s1482
      %s772 = sphi %s759, %s1483
      %s773 = sphi %s760, %s1487
      %s774 = sphi %s761, %s1491
      %s775 = sphi %s762, %s1495
      %p776 = pphi %p766, %p1497
      %s777 = sphi %s767, %s1500
      %s778 = sphi %s47, %s1496
      %p779 = pphi %p768, %p1502
      %p780 = pphi 0, %p1503
      %p781 = pneg %p779
    $region19: #{tpu_custom_call.1} parent=1 // loop_header_branch
      %783 = sbr.rel (%p779) target = $region23
    $region20: #{tpu_custom_call.1} parent=1 // loop_body
      %p784 = pneg %p779
      %s785 = sadd.s32 %s777, 1
      %s786 = scalar_select %p779, %s777, %s785
      %p787 = scmp.gt.s32.totalorder %s786, 13000
      %p788 = pnand %p784, %p787
      %p789 = pneg %p788
      %p790 = pneg %p789
      %p791 = pnand %p784, %p790
      %p792 = pneg %p791
      %s793 = smul.f32 %s773, %s773
      %s794 = smul.f32 %s774, %s774
      %s795 = sadd.f32 %s793, %s794
      %s796 = smul.f32 %s775, %s775
      %s797 = sadd.f32 %s795, %s796
      %v798 = vstv %s797
      %v799 = vrsqrt.pop %v798
      %v800 = vmul.f32 %v799, %v798
      %v801 = vmul.f32 %v800, %v799
      %v802 = vmul.f32 0.5, %v801
      %v803 = vsub.f32 1.5, %v802
      %v804 = vmul.f32 %v799, %v803
      %v805 = vmul.f32 %v798, %v804
      %vm806 = vcmp.eq.f32.partialorder %v798, inf
      %v807 = vsel %vm806, %v798, %v805
      %vm808 = vcmp.eq.f32.partialorder %v798, 0.0
      %v809 = vand.u32 %v798, 2147483648
      %v810 = vsel %vm808, %v809, %v807
      %s811 = vtos %v810
      %p812 = pneg %p776
      %p813 = scmp.lt.f32.partialorder %s772, 0.0205
      %p814 = pnand %p812, %p813
      %p815 = pneg %p814
      %p816 = pnand %p792, %p815
      %p817 = pneg %p816
      %p818 = pneg %p815
      %p819 = pnand %p792, %p818
      %p820 = pneg %p819
      %p821 = scmp.gt.f32.partialorder %s771, 3.0
      %p822 = scmp.lt.f32.partialorder %s772, 0.01985
      %p823 = pnand %p776, %p822
      %p824 = pneg %p823
      %p825 = por %p821, %p824
      %p826 = pnand %p820, %p825
      %p827 = pneg %p826
      %p828 = pneg %p827
      %p829 = pnand %p820, %p828
      %p830 = pneg %p829
      %s831 = smul.f32 %s811, 1.8e-05
      %s832 = ssub.f32 1.0, %s831
      %s833 = smul.f32 %s773, 0.0001
      %s834 = sadd.f32 %s770, %s833
      %s835 = smul.f32 %s774, 0.0001
      %s836 = sadd.f32 %s771, %s835
      %s837 = smul.f32 %s775, 0.0001
      %s838 = sadd.f32 %s772, %s837
      %s839 = smul.f32 %s773, %s832
      %s840 = smul.f32 %s774, %s832
      %s841 = smul.f32 %s775, %s832
      %s842 = ssub.f32 %s841, 0.00098015
      %s843 = ssub.f32 %s28, %s770
      %s844 = ssub.f32 %s29, %s771
      %s845 = ssub.f32 %s30, %s772
      %s846 = smul.f32 %s843, %s843
      %s847 = smul.f32 %s844, %s844
      %s848 = sadd.f32 %s846, %s847
      %s849 = smul.f32 %s845, %s845
      %s850 = sadd.f32 %s848, %s849
      %s851 = scalar_select %p830, %s834, %s770
      %s852 = scalar_select %p830, %s836, %s771
      %s853 = scalar_select %p830, %s838, %s772
      %s854 = smul.f32 %s773, 0.648819
      %s855 = sadd.f32 %s854, 0.010491
      %s856 = scalar_select %p830, %s839, %s773
      %s857 = scalar_select %p817, %s855, %s856
      %s858 = smul.f32 %s774, 0.64355
      %s859 = sadd.f32 %s858, 0.024064
      %s860 = scalar_select %p830, %s840, %s774
      %s861 = scalar_select %p817, %s859, %s860
      %s862 = smul.f32 %s775, -0.807392
      %s863 = sadd.f32 %s862, 0.46811
      %s864 = scalar_select %p830, %s842, %s775
      %s865 = scalar_select %p817, %s863, %s864
      %s866 = scalar_select %p817, %s850, %s778
      %p867 = por %p776, %p817
      %p868 = por %p817, %p830
      %s869 = scalar_select %p868, 1, 0
      %s870 = sadd.s32 %s786, %s869
      %p871 = por %p789, %p827
      %p872 = por %p779, %p871
      %p873 = por %p780, %p789
      %p874 = pneg %p872
      %s875 = sadd.s32 %s870, 1
      %s876 = scalar_select %p872, %s870, %s875
      %p877 = scmp.gt.s32.totalorder %s876, 13000
      %p878 = pnand %p874, %p877
      %p879 = pneg %p878
      %p880 = pneg %p879
      %p881 = pnand %p874, %p880
      %p882 = pneg %p881
      %s883 = smul.f32 %s857, %s857
      %s884 = smul.f32 %s861, %s861
      %s885 = sadd.f32 %s883, %s884
      %s886 = smul.f32 %s865, %s865
      %s887 = sadd.f32 %s885, %s886
      %v888 = vstv %s887
      %v889 = vrsqrt.pop %v888
      %v890 = vmul.f32 %v889, %v888
      %v891 = vmul.f32 %v890, %v889
      %v892 = vmul.f32 0.5, %v891
      %v893 = vsub.f32 1.5, %v892
      %v894 = vmul.f32 %v889, %v893
      %v895 = vmul.f32 %v888, %v894
      %vm896 = vcmp.eq.f32.partialorder %v888, inf
      %v897 = vsel %vm896, %v888, %v895
      %vm898 = vcmp.eq.f32.partialorder %v888, 0.0
      %v899 = vand.u32 %v888, 2147483648
      %v900 = vsel %vm898, %v899, %v897
      %s901 = vtos %v900
      %p902 = pneg %p867
      %p903 = scmp.lt.f32.partialorder %s853, 0.0205
      %p904 = pnand %p902, %p903
      %p905 = pneg %p904
      %p906 = pnand %p882, %p905
      %p907 = pneg %p906
      %p908 = pneg %p905
      %p909 = pnand %p882, %p908
      %p910 = pneg %p909
      %p911 = scmp.gt.f32.partialorder %s852, 3.0
      %p912 = scmp.lt.f32.partialorder %s853, 0.01985
      %p913 = pnand %p867, %p912
      %p914 = pneg %p913
      %p915 = por %p911, %p914
      %p916 = pnand %p910, %p915
      %p917 = pneg %p916
      %p918 = pneg %p917
      %p919 = pnand %p910, %p918
      %p920 = pneg %p919
      %s921 = smul.f32 %s901, 1.8e-05
      %s922 = ssub.f32 1.0, %s921
      %s923 = smul.f32 %s857, 0.0001
      %s924 = sadd.f32 %s851, %s923
      %s925 = smul.f32 %s861, 0.0001
      %s926 = sadd.f32 %s852, %s925
      %s927 = smul.f32 %s865, 0.0001
      %s928 = sadd.f32 %s853, %s927
      %s929 = smul.f32 %s857, %s922
      %s930 = smul.f32 %s861, %s922
      %s931 = smul.f32 %s865, %s922
      %s932 = ssub.f32 %s931, 0.00098015
      %s933 = ssub.f32 %s28, %s851
      %s934 = ssub.f32 %s29, %s852
      %s935 = ssub.f32 %s30, %s853
      %s936 = smul.f32 %s933, %s933
      %s937 = smul.f32 %s934, %s934
      %s938 = sadd.f32 %s936, %s937
      %s939 = smul.f32 %s935, %s935
      %s940 = sadd.f32 %s938, %s939
      %s941 = scalar_select %p920, %s924, %s851
      %s942 = scalar_select %p920, %s926, %s852
      %s943 = scalar_select %p920, %s928, %s853
      %s944 = smul.f32 %s857, 0.648819
      %s945 = sadd.f32 %s944, 0.010491
      %s946 = scalar_select %p920, %s929, %s857
      %s947 = scalar_select %p907, %s945, %s946
      %s948 = smul.f32 %s861, 0.64355
      %s949 = sadd.f32 %s948, 0.024064
      %s950 = scalar_select %p920, %s930, %s861
      %s951 = scalar_select %p907, %s949, %s950
      %s952 = smul.f32 %s865, -0.807392
      %s953 = sadd.f32 %s952, 0.46811
      %s954 = scalar_select %p920, %s932, %s865
      %s955 = scalar_select %p907, %s953, %s954
      %s956 = scalar_select %p907, %s940, %s866
      %p957 = por %p867, %p907
      %p958 = por %p907, %p920
      %s959 = scalar_select %p958, 1, 0
      %s960 = sadd.s32 %s876, %s959
      %p961 = por %p879, %p917
      %p962 = por %p872, %p961
      %p963 = por %p873, %p879
      %p964 = pneg %p962
      %s965 = sadd.s32 %s960, 1
      %s966 = scalar_select %p962, %s960, %s965
      %p967 = scmp.gt.s32.totalorder %s966, 13000
      %p968 = pnand %p964, %p967
      %p969 = pneg %p968
      %p970 = pneg %p969
      %p971 = pnand %p964, %p970
      %p972 = pneg %p971
      %s973 = smul.f32 %s947, %s947
      %s974 = smul.f32 %s951, %s951
      %s975 = sadd.f32 %s973, %s974
      %s976 = smul.f32 %s955, %s955
      %s977 = sadd.f32 %s975, %s976
      %v978 = vstv %s977
      %v979 = vrsqrt.pop %v978
      %v980 = vmul.f32 %v979, %v978
      %v981 = vmul.f32 %v980, %v979
      %v982 = vmul.f32 0.5, %v981
      %v983 = vsub.f32 1.5, %v982
      %v984 = vmul.f32 %v979, %v983
      %v985 = vmul.f32 %v978, %v984
      %vm986 = vcmp.eq.f32.partialorder %v978, inf
      %v987 = vsel %vm986, %v978, %v985
      %vm988 = vcmp.eq.f32.partialorder %v978, 0.0
      %v989 = vand.u32 %v978, 2147483648
      %v990 = vsel %vm988, %v989, %v987
      %s991 = vtos %v990
      %p992 = pneg %p957
      %p993 = scmp.lt.f32.partialorder %s943, 0.0205
      %p994 = pnand %p992, %p993
      %p995 = pneg %p994
      %p996 = pnand %p972, %p995
      %p997 = pneg %p996
      %p998 = pneg %p995
      %p999 = pnand %p972, %p998
      %p1000 = pneg %p999
      %p1001 = scmp.gt.f32.partialorder %s942, 3.0
      %p1002 = scmp.lt.f32.partialorder %s943, 0.01985
      %p1003 = pnand %p957, %p1002
      %p1004 = pneg %p1003
      %p1005 = por %p1001, %p1004
      %p1006 = pnand %p1000, %p1005
      %p1007 = pneg %p1006
      %p1008 = pneg %p1007
      %p1009 = pnand %p1000, %p1008
      %p1010 = pneg %p1009
      %s1011 = smul.f32 %s991, 1.8e-05
      %s1012 = ssub.f32 1.0, %s1011
      %s1013 = smul.f32 %s947, 0.0001
      %s1014 = sadd.f32 %s941, %s1013
      %s1015 = smul.f32 %s951, 0.0001
      %s1016 = sadd.f32 %s942, %s1015
      %s1017 = smul.f32 %s955, 0.0001
      %s1018 = sadd.f32 %s943, %s1017
      %s1019 = smul.f32 %s947, %s1012
      %s1020 = smul.f32 %s951, %s1012
      %s1021 = smul.f32 %s955, %s1012
      %s1022 = ssub.f32 %s1021, 0.00098015
      %s1023 = ssub.f32 %s28, %s941
      %s1024 = ssub.f32 %s29, %s942
      %s1025 = ssub.f32 %s30, %s943
      %s1026 = smul.f32 %s1023, %s1023
      %s1027 = smul.f32 %s1024, %s1024
      %s1028 = sadd.f32 %s1026, %s1027
      %s1029 = smul.f32 %s1025, %s1025
      %s1030 = sadd.f32 %s1028, %s1029
      %s1031 = scalar_select %p1010, %s1014, %s941
      %s1032 = scalar_select %p1010, %s1016, %s942
      %s1033 = scalar_select %p1010, %s1018, %s943
      %s1034 = smul.f32 %s947, 0.648819
      %s1035 = sadd.f32 %s1034, 0.010491
      %s1036 = scalar_select %p1010, %s1019, %s947
      %s1037 = scalar_select %p997, %s1035, %s1036
      %s1038 = smul.f32 %s951, 0.64355
      %s1039 = sadd.f32 %s1038, 0.024064
      %s1040 = scalar_select %p1010, %s1020, %s951
      %s1041 = scalar_select %p997, %s1039, %s1040
      %s1042 = smul.f32 %s955, -0.807392
      %s1043 = sadd.f32 %s1042, 0.46811
      %s1044 = scalar_select %p1010, %s1022, %s955
      %s1045 = scalar_select %p997, %s1043, %s1044
      %s1046 = scalar_select %p997, %s1030, %s956
      %p1047 = por %p957, %p997
      %p1048 = por %p997, %p1010
      %s1049 = scalar_select %p1048, 1, 0
      %s1050 = sadd.s32 %s966, %s1049
      %p1051 = por %p969, %p1007
      %p1052 = por %p962, %p1051
      %p1053 = por %p963, %p969
      %p1054 = pneg %p1052
      %s1055 = sadd.s32 %s1050, 1
      %s1056 = scalar_select %p1052, %s1050, %s1055
      %p1057 = scmp.gt.s32.totalorder %s1056, 13000
      %p1058 = pnand %p1054, %p1057
      %p1059 = pneg %p1058
      %p1060 = pneg %p1059
      %p1061 = pnand %p1054, %p1060
      %p1062 = pneg %p1061
      %s1063 = smul.f32 %s1037, %s1037
      %s1064 = smul.f32 %s1041, %s1041
      %s1065 = sadd.f32 %s1063, %s1064
      %s1066 = smul.f32 %s1045, %s1045
      %s1067 = sadd.f32 %s1065, %s1066
      %v1068 = vstv %s1067
      %v1069 = vrsqrt.pop %v1068
      %v1070 = vmul.f32 %v1069, %v1068
      %v1071 = vmul.f32 %v1070, %v1069
      %v1072 = vmul.f32 0.5, %v1071
      %v1073 = vsub.f32 1.5, %v1072
      %v1074 = vmul.f32 %v1069, %v1073
      %v1075 = vmul.f32 %v1068, %v1074
      %vm1076 = vcmp.eq.f32.partialorder %v1068, inf
      %v1077 = vsel %vm1076, %v1068, %v1075
      %vm1078 = vcmp.eq.f32.partialorder %v1068, 0.0
      %v1079 = vand.u32 %v1068, 2147483648
      %v1080 = vsel %vm1078, %v1079, %v1077
      %s1081 = vtos %v1080
      %p1082 = pneg %p1047
      %p1083 = scmp.lt.f32.partialorder %s1033, 0.0205
      %p1084 = pnand %p1082, %p1083
      %p1085 = pneg %p1084
      %p1086 = pnand %p1062, %p1085
      %p1087 = pneg %p1086
      %p1088 = pneg %p1085
      %p1089 = pnand %p1062, %p1088
      %p1090 = pneg %p1089
      %p1091 = scmp.gt.f32.partialorder %s1032, 3.0
      %p1092 = scmp.lt.f32.partialorder %s1033, 0.01985
      %p1093 = pnand %p1047, %p1092
      %p1094 = pneg %p1093
      %p1095 = por %p1091, %p1094
      %p1096 = pnand %p1090, %p1095
      %p1097 = pneg %p1096
      %p1098 = pneg %p1097
      %p1099 = pnand %p1090, %p1098
      %p1100 = pneg %p1099
      %s1101 = smul.f32 %s1081, 1.8e-05
      %s1102 = ssub.f32 1.0, %s1101
      %s1103 = smul.f32 %s1037, 0.0001
      %s1104 = sadd.f32 %s1031, %s1103
      %s1105 = smul.f32 %s1041, 0.0001
      %s1106 = sadd.f32 %s1032, %s1105
      %s1107 = smul.f32 %s1045, 0.0001
      %s1108 = sadd.f32 %s1033, %s1107
      %s1109 = smul.f32 %s1037, %s1102
      %s1110 = smul.f32 %s1041, %s1102
      %s1111 = smul.f32 %s1045, %s1102
      %s1112 = ssub.f32 %s1111, 0.00098015
      %s1113 = ssub.f32 %s28, %s1031
      %s1114 = ssub.f32 %s29, %s1032
      %s1115 = ssub.f32 %s30, %s1033
      %s1116 = smul.f32 %s1113, %s1113
      %s1117 = smul.f32 %s1114, %s1114
      %s1118 = sadd.f32 %s1116, %s1117
      %s1119 = smul.f32 %s1115, %s1115
      %s1120 = sadd.f32 %s1118, %s1119
      %s1121 = scalar_select %p1100, %s1104, %s1031
      %s1122 = scalar_select %p1100, %s1106, %s1032
      %s1123 = scalar_select %p1100, %s1108, %s1033
      %s1124 = smul.f32 %s1037, 0.648819
      %s1125 = sadd.f32 %s1124, 0.010491
      %s1126 = scalar_select %p1100, %s1109, %s1037
      %s1127 = scalar_select %p1087, %s1125, %s1126
      %s1128 = smul.f32 %s1041, 0.64355
      %s1129 = sadd.f32 %s1128, 0.024064
      %s1130 = scalar_select %p1100, %s1110, %s1041
      %s1131 = scalar_select %p1087, %s1129, %s1130
      %s1132 = smul.f32 %s1045, -0.807392
      %s1133 = sadd.f32 %s1132, 0.46811
      %s1134 = scalar_select %p1100, %s1112, %s1045
      %s1135 = scalar_select %p1087, %s1133, %s1134
      %s1136 = scalar_select %p1087, %s1120, %s1046
      %p1137 = por %p1047, %p1087
      %p1138 = por %p1087, %p1100
      %s1139 = scalar_select %p1138, 1, 0
      %s1140 = sadd.s32 %s1056, %s1139
      %p1141 = por %p1059, %p1097
      %p1142 = por %p1052, %p1141
      %p1143 = por %p1053, %p1059
      %p1144 = pneg %p1142
      %s1145 = sadd.s32 %s1140, 1
      %s1146 = scalar_select %p1142, %s1140, %s1145
      %p1147 = scmp.gt.s32.totalorder %s1146, 13000
      %p1148 = pnand %p1144, %p1147
      %p1149 = pneg %p1148
      %p1150 = pneg %p1149
      %p1151 = pnand %p1144, %p1150
      %p1152 = pneg %p1151
      %s1153 = smul.f32 %s1127, %s1127
      %s1154 = smul.f32 %s1131, %s1131
      %s1155 = sadd.f32 %s1153, %s1154
      %s1156 = smul.f32 %s1135, %s1135
      %s1157 = sadd.f32 %s1155, %s1156
      %v1158 = vstv %s1157
      %v1159 = vrsqrt.pop %v1158
      %v1160 = vmul.f32 %v1159, %v1158
      %v1161 = vmul.f32 %v1160, %v1159
      %v1162 = vmul.f32 0.5, %v1161
      %v1163 = vsub.f32 1.5, %v1162
      %v1164 = vmul.f32 %v1159, %v1163
      %v1165 = vmul.f32 %v1158, %v1164
      %vm1166 = vcmp.eq.f32.partialorder %v1158, inf
      %v1167 = vsel %vm1166, %v1158, %v1165
      %vm1168 = vcmp.eq.f32.partialorder %v1158, 0.0
      %v1169 = vand.u32 %v1158, 2147483648
      %v1170 = vsel %vm1168, %v1169, %v1167
      %s1171 = vtos %v1170
      %p1172 = pneg %p1137
      %p1173 = scmp.lt.f32.partialorder %s1123, 0.0205
      %p1174 = pnand %p1172, %p1173
      %p1175 = pneg %p1174
      %p1176 = pnand %p1152, %p1175
      %p1177 = pneg %p1176
      %p1178 = pneg %p1175
      %p1179 = pnand %p1152, %p1178
      %p1180 = pneg %p1179
      %p1181 = scmp.gt.f32.partialorder %s1122, 3.0
      %p1182 = scmp.lt.f32.partialorder %s1123, 0.01985
      %p1183 = pnand %p1137, %p1182
      %p1184 = pneg %p1183
      %p1185 = por %p1181, %p1184
      %p1186 = pnand %p1180, %p1185
      %p1187 = pneg %p1186
      %p1188 = pneg %p1187
      %p1189 = pnand %p1180, %p1188
      %p1190 = pneg %p1189
      %s1191 = smul.f32 %s1171, 1.8e-05
      %s1192 = ssub.f32 1.0, %s1191
      %s1193 = smul.f32 %s1127, 0.0001
      %s1194 = sadd.f32 %s1121, %s1193
      %s1195 = smul.f32 %s1131, 0.0001
      %s1196 = sadd.f32 %s1122, %s1195
      %s1197 = smul.f32 %s1135, 0.0001
      %s1198 = sadd.f32 %s1123, %s1197
      %s1199 = smul.f32 %s1127, %s1192
      %s1200 = smul.f32 %s1131, %s1192
      %s1201 = smul.f32 %s1135, %s1192
      %s1202 = ssub.f32 %s1201, 0.00098015
      %s1203 = ssub.f32 %s28, %s1121
      %s1204 = ssub.f32 %s29, %s1122
      %s1205 = ssub.f32 %s30, %s1123
      %s1206 = smul.f32 %s1203, %s1203
      %s1207 = smul.f32 %s1204, %s1204
      %s1208 = sadd.f32 %s1206, %s1207
      %s1209 = smul.f32 %s1205, %s1205
      %s1210 = sadd.f32 %s1208, %s1209
      %s1211 = scalar_select %p1190, %s1194, %s1121
      %s1212 = scalar_select %p1190, %s1196, %s1122
      %s1213 = scalar_select %p1190, %s1198, %s1123
      %s1214 = smul.f32 %s1127, 0.648819
      %s1215 = sadd.f32 %s1214, 0.010491
      %s1216 = scalar_select %p1190, %s1199, %s1127
      %s1217 = scalar_select %p1177, %s1215, %s1216
      %s1218 = smul.f32 %s1131, 0.64355
      %s1219 = sadd.f32 %s1218, 0.024064
      %s1220 = scalar_select %p1190, %s1200, %s1131
      %s1221 = scalar_select %p1177, %s1219, %s1220
      %s1222 = smul.f32 %s1135, -0.807392
      %s1223 = sadd.f32 %s1222, 0.46811
      %s1224 = scalar_select %p1190, %s1202, %s1135
      %s1225 = scalar_select %p1177, %s1223, %s1224
      %s1226 = scalar_select %p1177, %s1210, %s1136
      %p1227 = por %p1137, %p1177
      %p1228 = por %p1177, %p1190
      %s1229 = scalar_select %p1228, 1, 0
      %s1230 = sadd.s32 %s1146, %s1229
      %p1231 = por %p1149, %p1187
      %p1232 = por %p1142, %p1231
      %p1233 = por %p1143, %p1149
      %p1234 = pneg %p1232
      %s1235 = sadd.s32 %s1230, 1
      %s1236 = scalar_select %p1232, %s1230, %s1235
      %p1237 = scmp.gt.s32.totalorder %s1236, 13000
      %p1238 = pnand %p1234, %p1237
      %p1239 = pneg %p1238
      %p1240 = pneg %p1239
      %p1241 = pnand %p1234, %p1240
      %p1242 = pneg %p1241
      %s1243 = smul.f32 %s1217, %s1217
      %s1244 = smul.f32 %s1221, %s1221
      %s1245 = sadd.f32 %s1243, %s1244
      %s1246 = smul.f32 %s1225, %s1225
      %s1247 = sadd.f32 %s1245, %s1246
      %v1248 = vstv %s1247
      %v1249 = vrsqrt.pop %v1248
      %v1250 = vmul.f32 %v1249, %v1248
      %v1251 = vmul.f32 %v1250, %v1249
      %v1252 = vmul.f32 0.5, %v1251
      %v1253 = vsub.f32 1.5, %v1252
      %v1254 = vmul.f32 %v1249, %v1253
      %v1255 = vmul.f32 %v1248, %v1254
      %vm1256 = vcmp.eq.f32.partialorder %v1248, inf
      %v1257 = vsel %vm1256, %v1248, %v1255
      %vm1258 = vcmp.eq.f32.partialorder %v1248, 0.0
      %v1259 = vand.u32 %v1248, 2147483648
      %v1260 = vsel %vm1258, %v1259, %v1257
      %s1261 = vtos %v1260
      %p1262 = pneg %p1227
      %p1263 = scmp.lt.f32.partialorder %s1213, 0.0205
      %p1264 = pnand %p1262, %p1263
      %p1265 = pneg %p1264
      %p1266 = pnand %p1242, %p1265
      %p1267 = pneg %p1266
      %p1268 = pneg %p1265
      %p1269 = pnand %p1242, %p1268
      %p1270 = pneg %p1269
      %p1271 = scmp.gt.f32.partialorder %s1212, 3.0
      %p1272 = scmp.lt.f32.partialorder %s1213, 0.01985
      %p1273 = pnand %p1227, %p1272
      %p1274 = pneg %p1273
      %p1275 = por %p1271, %p1274
      %p1276 = pnand %p1270, %p1275
      %p1277 = pneg %p1276
      %p1278 = pneg %p1277
      %p1279 = pnand %p1270, %p1278
      %p1280 = pneg %p1279
      %s1281 = smul.f32 %s1261, 1.8e-05
      %s1282 = ssub.f32 1.0, %s1281
      %s1283 = smul.f32 %s1217, 0.0001
      %s1284 = sadd.f32 %s1211, %s1283
      %s1285 = smul.f32 %s1221, 0.0001
      %s1286 = sadd.f32 %s1212, %s1285
      %s1287 = smul.f32 %s1225, 0.0001
      %s1288 = sadd.f32 %s1213, %s1287
      %s1289 = smul.f32 %s1217, %s1282
      %s1290 = smul.f32 %s1221, %s1282
      %s1291 = smul.f32 %s1225, %s1282
      %s1292 = ssub.f32 %s1291, 0.00098015
      %s1293 = ssub.f32 %s28, %s1211
      %s1294 = ssub.f32 %s29, %s1212
      %s1295 = ssub.f32 %s30, %s1213
      %s1296 = smul.f32 %s1293, %s1293
      %s1297 = smul.f32 %s1294, %s1294
      %s1298 = sadd.f32 %s1296, %s1297
      %s1299 = smul.f32 %s1295, %s1295
      %s1300 = sadd.f32 %s1298, %s1299
      %s1301 = scalar_select %p1280, %s1284, %s1211
      %s1302 = scalar_select %p1280, %s1286, %s1212
      %s1303 = scalar_select %p1280, %s1288, %s1213
      %s1304 = smul.f32 %s1217, 0.648819
      %s1305 = sadd.f32 %s1304, 0.010491
      %s1306 = scalar_select %p1280, %s1289, %s1217
      %s1307 = scalar_select %p1267, %s1305, %s1306
      %s1308 = smul.f32 %s1221, 0.64355
      %s1309 = sadd.f32 %s1308, 0.024064
      %s1310 = scalar_select %p1280, %s1290, %s1221
      %s1311 = scalar_select %p1267, %s1309, %s1310
      %s1312 = smul.f32 %s1225, -0.807392
      %s1313 = sadd.f32 %s1312, 0.46811
      %s1314 = scalar_select %p1280, %s1292, %s1225
      %s1315 = scalar_select %p1267, %s1313, %s1314
      %s1316 = scalar_select %p1267, %s1300, %s1226
      %p1317 = por %p1227, %p1267
      %p1318 = por %p1267, %p1280
      %s1319 = scalar_select %p1318, 1, 0
      %s1320 = sadd.s32 %s1236, %s1319
      %p1321 = por %p1239, %p1277
      %p1322 = por %p1232, %p1321
      %p1323 = por %p1233, %p1239
      %p1324 = pneg %p1322
      %s1325 = sadd.s32 %s1320, 1
      %s1326 = scalar_select %p1322, %s1320, %s1325
      %p1327 = scmp.gt.s32.totalorder %s1326, 13000
      %p1328 = pnand %p1324, %p1327
      %p1329 = pneg %p1328
      %p1330 = pneg %p1329
      %p1331 = pnand %p1324, %p1330
      %p1332 = pneg %p1331
      %s1333 = smul.f32 %s1307, %s1307
      %s1334 = smul.f32 %s1311, %s1311
      %s1335 = sadd.f32 %s1333, %s1334
      %s1336 = smul.f32 %s1315, %s1315
      %s1337 = sadd.f32 %s1335, %s1336
      %v1338 = vstv %s1337
      %v1339 = vrsqrt.pop %v1338
      %v1340 = vmul.f32 %v1339, %v1338
      %v1341 = vmul.f32 %v1340, %v1339
      %v1342 = vmul.f32 0.5, %v1341
      %v1343 = vsub.f32 1.5, %v1342
      %v1344 = vmul.f32 %v1339, %v1343
      %v1345 = vmul.f32 %v1338, %v1344
      %vm1346 = vcmp.eq.f32.partialorder %v1338, inf
      %v1347 = vsel %vm1346, %v1338, %v1345
      %vm1348 = vcmp.eq.f32.partialorder %v1338, 0.0
      %v1349 = vand.u32 %v1338, 2147483648
      %v1350 = vsel %vm1348, %v1349, %v1347
      %s1351 = vtos %v1350
      %p1352 = pneg %p1317
      %p1353 = scmp.lt.f32.partialorder %s1303, 0.0205
      %p1354 = pnand %p1352, %p1353
      %p1355 = pneg %p1354
      %p1356 = pnand %p1332, %p1355
      %p1357 = pneg %p1356
      %p1358 = pneg %p1355
      %p1359 = pnand %p1332, %p1358
      %p1360 = pneg %p1359
      %p1361 = scmp.gt.f32.partialorder %s1302, 3.0
      %p1362 = scmp.lt.f32.partialorder %s1303, 0.01985
      %p1363 = pnand %p1317, %p1362
      %p1364 = pneg %p1363
      %p1365 = por %p1361, %p1364
      %p1366 = pnand %p1360, %p1365
      %p1367 = pneg %p1366
      %p1368 = pneg %p1367
      %p1369 = pnand %p1360, %p1368
      %p1370 = pneg %p1369
      %s1371 = smul.f32 %s1351, 1.8e-05
      %s1372 = ssub.f32 1.0, %s1371
      %s1373 = smul.f32 %s1307, 0.0001
      %s1374 = sadd.f32 %s1301, %s1373
      %s1375 = smul.f32 %s1311, 0.0001
      %s1376 = sadd.f32 %s1302, %s1375
      %s1377 = smul.f32 %s1315, 0.0001
      %s1378 = sadd.f32 %s1303, %s1377
      %s1379 = smul.f32 %s1307, %s1372
      %s1380 = smul.f32 %s1311, %s1372
      %s1381 = smul.f32 %s1315, %s1372
      %s1382 = ssub.f32 %s1381, 0.00098015
      %s1383 = ssub.f32 %s28, %s1301
      %s1384 = ssub.f32 %s29, %s1302
      %s1385 = ssub.f32 %s30, %s1303
      %s1386 = smul.f32 %s1383, %s1383
      %s1387 = smul.f32 %s1384, %s1384
      %s1388 = sadd.f32 %s1386, %s1387
      %s1389 = smul.f32 %s1385, %s1385
      %s1390 = sadd.f32 %s1388, %s1389
      %s1391 = scalar_select %p1370, %s1374, %s1301
      %s1392 = scalar_select %p1370, %s1376, %s1302
      %s1393 = scalar_select %p1370, %s1378, %s1303
      %s1394 = smul.f32 %s1307, 0.648819
      %s1395 = sadd.f32 %s1394, 0.010491
      %s1396 = scalar_select %p1370, %s1379, %s1307
      %s1397 = scalar_select %p1357, %s1395, %s1396
      %s1398 = smul.f32 %s1311, 0.64355
      %s1399 = sadd.f32 %s1398, 0.024064
      %s1400 = scalar_select %p1370, %s1380, %s1311
      %s1401 = scalar_select %p1357, %s1399, %s1400
      %s1402 = smul.f32 %s1315, -0.807392
      %s1403 = sadd.f32 %s1402, 0.46811
      %s1404 = scalar_select %p1370, %s1382, %s1315
      %s1405 = scalar_select %p1357, %s1403, %s1404
      %s1406 = scalar_select %p1357, %s1390, %s1316
      %p1407 = por %p1317, %p1357
      %p1408 = por %p1357, %p1370
      %s1409 = scalar_select %p1408, 1, 0
      %s1410 = sadd.s32 %s1326, %s1409
      %p1411 = por %p1329, %p1367
      %p1412 = por %p1322, %p1411
      %p1413 = por %p1323, %p1329
      %p1414 = pneg %p1412
      %s1415 = sadd.s32 %s1410, 1
      %s1416 = scalar_select %p1412, %s1410, %s1415
      %p1417 = scmp.gt.s32.totalorder %s1416, 13000
      %p1418 = pnand %p1414, %p1417
      %p1419 = pneg %p1418
      %p1420 = pneg %p1419
      %p1421 = pnand %p1414, %p1420
      %p1422 = pneg %p1421
      %s1423 = smul.f32 %s1397, %s1397
      %s1424 = smul.f32 %s1401, %s1401
      %s1425 = sadd.f32 %s1423, %s1424
      %s1426 = smul.f32 %s1405, %s1405
      %s1427 = sadd.f32 %s1425, %s1426
      %v1428 = vstv %s1427
      %v1429 = vrsqrt.pop %v1428
      %v1430 = vmul.f32 %v1429, %v1428
      %v1431 = vmul.f32 %v1430, %v1429
      %v1432 = vmul.f32 0.5, %v1431
      %v1433 = vsub.f32 1.5, %v1432
      %v1434 = vmul.f32 %v1429, %v1433
      %v1435 = vmul.f32 %v1428, %v1434
      %vm1436 = vcmp.eq.f32.partialorder %v1428, inf
      %v1437 = vsel %vm1436, %v1428, %v1435
      %vm1438 = vcmp.eq.f32.partialorder %v1428, 0.0
      %v1439 = vand.u32 %v1428, 2147483648
      %v1440 = vsel %vm1438, %v1439, %v1437
      %s1441 = vtos %v1440
      %p1442 = pneg %p1407
      %p1443 = scmp.lt.f32.partialorder %s1393, 0.0205
      %p1444 = pnand %p1442, %p1443
      %p1445 = pneg %p1444
      %p1446 = pnand %p1422, %p1445
      %p1447 = pneg %p1446
      %p1448 = pneg %p1445
      %p1449 = pnand %p1422, %p1448
      %p1450 = pneg %p1449
      %p1451 = scmp.gt.f32.partialorder %s1392, 3.0
      %p1452 = scmp.lt.f32.partialorder %s1393, 0.01985
      %p1453 = pnand %p1407, %p1452
      %p1454 = pneg %p1453
      %p1455 = por %p1451, %p1454
      %p1456 = pnand %p1450, %p1455
      %p1457 = pneg %p1456
      %p1458 = pneg %p1457
      %p1459 = pnand %p1450, %p1458
      %p1460 = pneg %p1459
      %s1461 = smul.f32 %s1441, 1.8e-05
      %s1462 = ssub.f32 1.0, %s1461
      %s1463 = smul.f32 %s1397, 0.0001
      %s1464 = sadd.f32 %s1391, %s1463
      %s1465 = smul.f32 %s1401, 0.0001
      %s1466 = sadd.f32 %s1392, %s1465
      %s1467 = smul.f32 %s1405, 0.0001
      %s1468 = sadd.f32 %s1393, %s1467
      %s1469 = smul.f32 %s1397, %s1462
      %s1470 = smul.f32 %s1401, %s1462
      %s1471 = smul.f32 %s1405, %s1462
      %s1472 = ssub.f32 %s1471, 0.00098015
      %s1473 = ssub.f32 %s28, %s1391
      %s1474 = ssub.f32 %s29, %s1392
      %s1475 = ssub.f32 %s30, %s1393
      %s1476 = smul.f32 %s1473, %s1473
      %s1477 = smul.f32 %s1474, %s1474
      %s1478 = sadd.f32 %s1476, %s1477
      %s1479 = smul.f32 %s1475, %s1475
      %s1480 = sadd.f32 %s1478, %s1479
      %s1481 = scalar_select %p1460, %s1464, %s1391
      %s1482 = scalar_select %p1460, %s1466, %s1392
      %s1483 = scalar_select %p1460, %s1468, %s1393
      %s1484 = smul.f32 %s1397, 0.648819
      %s1485 = sadd.f32 %s1484, 0.010491
      %s1486 = scalar_select %p1460, %s1469, %s1397
      %s1487 = scalar_select %p1447, %s1485, %s1486
      %s1488 = smul.f32 %s1401, 0.64355
      %s1489 = sadd.f32 %s1488, 0.024064
      %s1490 = scalar_select %p1460, %s1470, %s1401
      %s1491 = scalar_select %p1447, %s1489, %s1490
      %s1492 = smul.f32 %s1405, -0.807392
      %s1493 = sadd.f32 %s1492, 0.46811
      %s1494 = scalar_select %p1460, %s1472, %s1405
      %s1495 = scalar_select %p1447, %s1493, %s1494
      %s1496 = scalar_select %p1447, %s1480, %s1406
      %p1497 = por %p1407, %p1447
      %p1498 = por %p1447, %p1460
      %s1499 = scalar_select %p1498, 1, 0
      %s1500 = sadd.s32 %s1416, %s1499
      %p1501 = por %p1419, %p1457
      %p1502 = por %p1412, %p1501
      %p1503 = por %p1413, %p1419
    $region21: #{tpu_custom_call.1} parent=1 // loop_footer
      _
    $region22: #{tpu_custom_call.1} parent=1 // loop_footer_branch
      %769 = sbr.rel target = $region18
    $region23: #{tpu_custom_call.1} parent=1 // loop_exit
      _
    %s1504 = scalar_select %p776, %s771, 2.7
    // While loop
    $region24: #{tpu_custom_call.1} parent=1 // loop_pre_header
      _
    $region25: #{tpu_custom_call.1} parent=1 // loop_header
      %s1506 = sphi %s770, %s2201
      %s1507 = sphi %s1504, %s2202
      %s1508 = sphi %s772, %s2203
      %s1509 = sphi %s773, %s2207
      %s1510 = sphi %s774, %s2211
      %s1511 = sphi %s775, %s2215
      %p1512 = pphi %p776, %p2217
      %s1513 = sphi %s777, %s2220
      %s1514 = sphi %s778, %s2216
      %p1515 = pphi %p776, %p2222
      %p1516 = pphi 0, %p2223
      %p1517 = pneg %p1515
    $region26: #{tpu_custom_call.1} parent=1 // loop_header_branch
      %1519 = sbr.rel (%p1515) target = $region30
    $region27: #{tpu_custom_call.1} parent=1 // loop_body
      %p1520 = pneg %p1515
      %p1521 = scmp.gt.s32.totalorder %s1513, 10000
      %p1522 = pnand %p1520, %p1521
      %p1523 = pneg %p1522
      %p1524 = pneg %p1523
      %p1525 = pnand %p1520, %p1524
      %p1526 = pneg %p1525
      %s1527 = smul.f32 %s1509, %s1509
      %s1528 = smul.f32 %s1510, %s1510
      %s1529 = sadd.f32 %s1527, %s1528
      %s1530 = smul.f32 %s1511, %s1511
      %s1531 = sadd.f32 %s1529, %s1530
      %v1532 = vstv %s1531
      %v1533 = vrsqrt.pop %v1532
      %v1534 = vmul.f32 %v1533, %v1532
      %v1535 = vmul.f32 %v1534, %v1533
      %v1536 = vmul.f32 0.5, %v1535
      %v1537 = vsub.f32 1.5, %v1536
      %v1538 = vmul.f32 %v1533, %v1537
      %v1539 = vmul.f32 %v1532, %v1538
      %vm1540 = vcmp.eq.f32.partialorder %v1532, inf
      %v1541 = vsel %vm1540, %v1532, %v1539
      %vm1542 = vcmp.eq.f32.partialorder %v1532, 0.0
      %v1543 = vand.u32 %v1532, 2147483648
      %v1544 = vsel %vm1542, %v1543, %v1541
      %s1545 = vtos %v1544
      %p1546 = pneg %p1512
      %p1547 = scmp.lt.f32.partialorder %s1508, 0.0205
      %p1548 = pnand %p1546, %p1547
      %p1549 = pneg %p1548
      %p1550 = pnand %p1526, %p1549
      %p1551 = pneg %p1550
      %p1552 = pneg %p1549
      %p1553 = pnand %p1526, %p1552
      %p1554 = pneg %p1553
      %p1555 = scmp.gt.f32.partialorder %s1507, 3.0
      %p1556 = scmp.lt.f32.partialorder %s1508, 0.01985
      %p1557 = pnand %p1512, %p1556
      %p1558 = pneg %p1557
      %p1559 = por %p1555, %p1558
      %p1560 = pnand %p1554, %p1559
      %p1561 = pneg %p1560
      %p1562 = pneg %p1561
      %p1563 = pnand %p1554, %p1562
      %p1564 = pneg %p1563
      %s1565 = smul.f32 %s1545, 1.8e-05
      %s1566 = ssub.f32 1.0, %s1565
      %s1567 = smul.f32 %s1509, 0.0001
      %s1568 = sadd.f32 %s1506, %s1567
      %s1569 = smul.f32 %s1510, 0.0001
      %s1570 = sadd.f32 %s1507, %s1569
      %s1571 = smul.f32 %s1511, 0.0001
      %s1572 = sadd.f32 %s1508, %s1571
      %s1573 = smul.f32 %s1509, %s1566
      %s1574 = smul.f32 %s1510, %s1566
      %s1575 = smul.f32 %s1511, %s1566
      %s1576 = ssub.f32 %s1575, 0.00098015
      %s1577 = ssub.f32 %s28, %s1506
      %s1578 = ssub.f32 %s29, %s1507
      %s1579 = ssub.f32 %s30, %s1508
      %s1580 = smul.f32 %s1577, %s1577
      %s1581 = smul.f32 %s1578, %s1578
      %s1582 = sadd.f32 %s1580, %s1581
      %s1583 = smul.f32 %s1579, %s1579
      %s1584 = sadd.f32 %s1582, %s1583
      %s1585 = scalar_select %p1564, %s1568, %s1506
      %s1586 = scalar_select %p1564, %s1570, %s1507
      %s1587 = scalar_select %p1564, %s1572, %s1508
      %s1588 = smul.f32 %s1509, 0.648819
      %s1589 = sadd.f32 %s1588, 0.010491
      %s1590 = scalar_select %p1564, %s1573, %s1509
      %s1591 = scalar_select %p1551, %s1589, %s1590
      %s1592 = smul.f32 %s1510, 0.64355
      %s1593 = sadd.f32 %s1592, 0.024064
      %s1594 = scalar_select %p1564, %s1574, %s1510
      %s1595 = scalar_select %p1551, %s1593, %s1594
      %s1596 = smul.f32 %s1511, -0.807392
      %s1597 = sadd.f32 %s1596, 0.46811
      %s1598 = scalar_select %p1564, %s1576, %s1511
      %s1599 = scalar_select %p1551, %s1597, %s1598
      %s1600 = scalar_select %p1551, %s1584, %s1514
      %p1601 = por %p1512, %p1551
      %p1602 = por %p1551, %p1564
      %s1603 = scalar_select %p1602, 1, 0
      %s1604 = sadd.s32 %s1513, %s1603
      %p1605 = por %p1523, %p1561
      %p1606 = por %p1515, %p1605
      %p1607 = por %p1516, %p1523
      %p1608 = pneg %p1606
      %p1609 = scmp.gt.s32.totalorder %s1604, 10000
      %p1610 = pnand %p1608, %p1609
      %p1611 = pneg %p1610
      %p1612 = pneg %p1611
      %p1613 = pnand %p1608, %p1612
      %p1614 = pneg %p1613
      %s1615 = smul.f32 %s1591, %s1591
      %s1616 = smul.f32 %s1595, %s1595
      %s1617 = sadd.f32 %s1615, %s1616
      %s1618 = smul.f32 %s1599, %s1599
      %s1619 = sadd.f32 %s1617, %s1618
      %v1620 = vstv %s1619
      %v1621 = vrsqrt.pop %v1620
      %v1622 = vmul.f32 %v1621, %v1620
      %v1623 = vmul.f32 %v1622, %v1621
      %v1624 = vmul.f32 0.5, %v1623
      %v1625 = vsub.f32 1.5, %v1624
      %v1626 = vmul.f32 %v1621, %v1625
      %v1627 = vmul.f32 %v1620, %v1626
      %vm1628 = vcmp.eq.f32.partialorder %v1620, inf
      %v1629 = vsel %vm1628, %v1620, %v1627
      %vm1630 = vcmp.eq.f32.partialorder %v1620, 0.0
      %v1631 = vand.u32 %v1620, 2147483648
      %v1632 = vsel %vm1630, %v1631, %v1629
      %s1633 = vtos %v1632
      %p1634 = pneg %p1601
      %p1635 = scmp.lt.f32.partialorder %s1587, 0.0205
      %p1636 = pnand %p1634, %p1635
      %p1637 = pneg %p1636
      %p1638 = pnand %p1614, %p1637
      %p1639 = pneg %p1638
      %p1640 = pneg %p1637
      %p1641 = pnand %p1614, %p1640
      %p1642 = pneg %p1641
      %p1643 = scmp.gt.f32.partialorder %s1586, 3.0
      %p1644 = scmp.lt.f32.partialorder %s1587, 0.01985
      %p1645 = pnand %p1601, %p1644
      %p1646 = pneg %p1645
      %p1647 = por %p1643, %p1646
      %p1648 = pnand %p1642, %p1647
      %p1649 = pneg %p1648
      %p1650 = pneg %p1649
      %p1651 = pnand %p1642, %p1650
      %p1652 = pneg %p1651
      %s1653 = smul.f32 %s1633, 1.8e-05
      %s1654 = ssub.f32 1.0, %s1653
      %s1655 = smul.f32 %s1591, 0.0001
      %s1656 = sadd.f32 %s1585, %s1655
      %s1657 = smul.f32 %s1595, 0.0001
      %s1658 = sadd.f32 %s1586, %s1657
      %s1659 = smul.f32 %s1599, 0.0001
      %s1660 = sadd.f32 %s1587, %s1659
      %s1661 = smul.f32 %s1591, %s1654
      %s1662 = smul.f32 %s1595, %s1654
      %s1663 = smul.f32 %s1599, %s1654
      %s1664 = ssub.f32 %s1663, 0.00098015
      %s1665 = ssub.f32 %s28, %s1585
      %s1666 = ssub.f32 %s29, %s1586
      %s1667 = ssub.f32 %s30, %s1587
      %s1668 = smul.f32 %s1665, %s1665
      %s1669 = smul.f32 %s1666, %s1666
      %s1670 = sadd.f32 %s1668, %s1669
      %s1671 = smul.f32 %s1667, %s1667
      %s1672 = sadd.f32 %s1670, %s1671
      %s1673 = scalar_select %p1652, %s1656, %s1585
      %s1674 = scalar_select %p1652, %s1658, %s1586
      %s1675 = scalar_select %p1652, %s1660, %s1587
      %s1676 = smul.f32 %s1591, 0.648819
      %s1677 = sadd.f32 %s1676, 0.010491
      %s1678 = scalar_select %p1652, %s1661, %s1591
      %s1679 = scalar_select %p1639, %s1677, %s1678
      %s1680 = smul.f32 %s1595, 0.64355
      %s1681 = sadd.f32 %s1680, 0.024064
      %s1682 = scalar_select %p1652, %s1662, %s1595
      %s1683 = scalar_select %p1639, %s1681, %s1682
      %s1684 = smul.f32 %s1599, -0.807392
      %s1685 = sadd.f32 %s1684, 0.46811
      %s1686 = scalar_select %p1652, %s1664, %s1599
      %s1687 = scalar_select %p1639, %s1685, %s1686
      %s1688 = scalar_select %p1639, %s1672, %s1600
      %p1689 = por %p1601, %p1639
      %p1690 = por %p1639, %p1652
      %s1691 = scalar_select %p1690, 1, 0
      %s1692 = sadd.s32 %s1604, %s1691
      %p1693 = por %p1611, %p1649
      %p1694 = por %p1606, %p1693
      %p1695 = por %p1607, %p1611
      %p1696 = pneg %p1694
      %p1697 = scmp.gt.s32.totalorder %s1692, 10000
      %p1698 = pnand %p1696, %p1697
      %p1699 = pneg %p1698
      %p1700 = pneg %p1699
      %p1701 = pnand %p1696, %p1700
      %p1702 = pneg %p1701
      %s1703 = smul.f32 %s1679, %s1679
      %s1704 = smul.f32 %s1683, %s1683
      %s1705 = sadd.f32 %s1703, %s1704
      %s1706 = smul.f32 %s1687, %s1687
      %s1707 = sadd.f32 %s1705, %s1706
      %v1708 = vstv %s1707
      %v1709 = vrsqrt.pop %v1708
      %v1710 = vmul.f32 %v1709, %v1708
      %v1711 = vmul.f32 %v1710, %v1709
      %v1712 = vmul.f32 0.5, %v1711
      %v1713 = vsub.f32 1.5, %v1712
      %v1714 = vmul.f32 %v1709, %v1713
      %v1715 = vmul.f32 %v1708, %v1714
      %vm1716 = vcmp.eq.f32.partialorder %v1708, inf
      %v1717 = vsel %vm1716, %v1708, %v1715
      %vm1718 = vcmp.eq.f32.partialorder %v1708, 0.0
      %v1719 = vand.u32 %v1708, 2147483648
      %v1720 = vsel %vm1718, %v1719, %v1717
      %s1721 = vtos %v1720
      %p1722 = pneg %p1689
      %p1723 = scmp.lt.f32.partialorder %s1675, 0.0205
      %p1724 = pnand %p1722, %p1723
      %p1725 = pneg %p1724
      %p1726 = pnand %p1702, %p1725
      %p1727 = pneg %p1726
      %p1728 = pneg %p1725
      %p1729 = pnand %p1702, %p1728
      %p1730 = pneg %p1729
      %p1731 = scmp.gt.f32.partialorder %s1674, 3.0
      %p1732 = scmp.lt.f32.partialorder %s1675, 0.01985
      %p1733 = pnand %p1689, %p1732
      %p1734 = pneg %p1733
      %p1735 = por %p1731, %p1734
      %p1736 = pnand %p1730, %p1735
      %p1737 = pneg %p1736
      %p1738 = pneg %p1737
      %p1739 = pnand %p1730, %p1738
      %p1740 = pneg %p1739
      %s1741 = smul.f32 %s1721, 1.8e-05
      %s1742 = ssub.f32 1.0, %s1741
      %s1743 = smul.f32 %s1679, 0.0001
      %s1744 = sadd.f32 %s1673, %s1743
      %s1745 = smul.f32 %s1683, 0.0001
      %s1746 = sadd.f32 %s1674, %s1745
      %s1747 = smul.f32 %s1687, 0.0001
      %s1748 = sadd.f32 %s1675, %s1747
      %s1749 = smul.f32 %s1679, %s1742
      %s1750 = smul.f32 %s1683, %s1742
      %s1751 = smul.f32 %s1687, %s1742
      %s1752 = ssub.f32 %s1751, 0.00098015
      %s1753 = ssub.f32 %s28, %s1673
      %s1754 = ssub.f32 %s29, %s1674
      %s1755 = ssub.f32 %s30, %s1675
      %s1756 = smul.f32 %s1753, %s1753
      %s1757 = smul.f32 %s1754, %s1754
      %s1758 = sadd.f32 %s1756, %s1757
      %s1759 = smul.f32 %s1755, %s1755
      %s1760 = sadd.f32 %s1758, %s1759
      %s1761 = scalar_select %p1740, %s1744, %s1673
      %s1762 = scalar_select %p1740, %s1746, %s1674
      %s1763 = scalar_select %p1740, %s1748, %s1675
      %s1764 = smul.f32 %s1679, 0.648819
      %s1765 = sadd.f32 %s1764, 0.010491
      %s1766 = scalar_select %p1740, %s1749, %s1679
      %s1767 = scalar_select %p1727, %s1765, %s1766
      %s1768 = smul.f32 %s1683, 0.64355
      %s1769 = sadd.f32 %s1768, 0.024064
      %s1770 = scalar_select %p1740, %s1750, %s1683
      %s1771 = scalar_select %p1727, %s1769, %s1770
      %s1772 = smul.f32 %s1687, -0.807392
      %s1773 = sadd.f32 %s1772, 0.46811
      %s1774 = scalar_select %p1740, %s1752, %s1687
      %s1775 = scalar_select %p1727, %s1773, %s1774
      %s1776 = scalar_select %p1727, %s1760, %s1688
      %p1777 = por %p1689, %p1727
      %p1778 = por %p1727, %p1740
      %s1779 = scalar_select %p1778, 1, 0
      %s1780 = sadd.s32 %s1692, %s1779
      %p1781 = por %p1699, %p1737
      %p1782 = por %p1694, %p1781
      %p1783 = por %p1695, %p1699
      %p1784 = pneg %p1782
      %p1785 = scmp.gt.s32.totalorder %s1780, 10000
      %p1786 = pnand %p1784, %p1785
      %p1787 = pneg %p1786
      %p1788 = pneg %p1787
      %p1789 = pnand %p1784, %p1788
      %p1790 = pneg %p1789
      %s1791 = smul.f32 %s1767, %s1767
      %s1792 = smul.f32 %s1771, %s1771
      %s1793 = sadd.f32 %s1791, %s1792
      %s1794 = smul.f32 %s1775, %s1775
      %s1795 = sadd.f32 %s1793, %s1794
      %v1796 = vstv %s1795
      %v1797 = vrsqrt.pop %v1796
      %v1798 = vmul.f32 %v1797, %v1796
      %v1799 = vmul.f32 %v1798, %v1797
      %v1800 = vmul.f32 0.5, %v1799
      %v1801 = vsub.f32 1.5, %v1800
      %v1802 = vmul.f32 %v1797, %v1801
      %v1803 = vmul.f32 %v1796, %v1802
      %vm1804 = vcmp.eq.f32.partialorder %v1796, inf
      %v1805 = vsel %vm1804, %v1796, %v1803
      %vm1806 = vcmp.eq.f32.partialorder %v1796, 0.0
      %v1807 = vand.u32 %v1796, 2147483648
      %v1808 = vsel %vm1806, %v1807, %v1805
      %s1809 = vtos %v1808
      %p1810 = pneg %p1777
      %p1811 = scmp.lt.f32.partialorder %s1763, 0.0205
      %p1812 = pnand %p1810, %p1811
      %p1813 = pneg %p1812
      %p1814 = pnand %p1790, %p1813
      %p1815 = pneg %p1814
      %p1816 = pneg %p1813
      %p1817 = pnand %p1790, %p1816
      %p1818 = pneg %p1817
      %p1819 = scmp.gt.f32.partialorder %s1762, 3.0
      %p1820 = scmp.lt.f32.partialorder %s1763, 0.01985
      %p1821 = pnand %p1777, %p1820
      %p1822 = pneg %p1821
      %p1823 = por %p1819, %p1822
      %p1824 = pnand %p1818, %p1823
      %p1825 = pneg %p1824
      %p1826 = pneg %p1825
      %p1827 = pnand %p1818, %p1826
      %p1828 = pneg %p1827
      %s1829 = smul.f32 %s1809, 1.8e-05
      %s1830 = ssub.f32 1.0, %s1829
      %s1831 = smul.f32 %s1767, 0.0001
      %s1832 = sadd.f32 %s1761, %s1831
      %s1833 = smul.f32 %s1771, 0.0001
      %s1834 = sadd.f32 %s1762, %s1833
      %s1835 = smul.f32 %s1775, 0.0001
      %s1836 = sadd.f32 %s1763, %s1835
      %s1837 = smul.f32 %s1767, %s1830
      %s1838 = smul.f32 %s1771, %s1830
      %s1839 = smul.f32 %s1775, %s1830
      %s1840 = ssub.f32 %s1839, 0.00098015
      %s1841 = ssub.f32 %s28, %s1761
      %s1842 = ssub.f32 %s29, %s1762
      %s1843 = ssub.f32 %s30, %s1763
      %s1844 = smul.f32 %s1841, %s1841
      %s1845 = smul.f32 %s1842, %s1842
      %s1846 = sadd.f32 %s1844, %s1845
      %s1847 = smul.f32 %s1843, %s1843
      %s1848 = sadd.f32 %s1846, %s1847
      %s1849 = scalar_select %p1828, %s1832, %s1761
      %s1850 = scalar_select %p1828, %s1834, %s1762
      %s1851 = scalar_select %p1828, %s1836, %s1763
      %s1852 = smul.f32 %s1767, 0.648819
      %s1853 = sadd.f32 %s1852, 0.010491
      %s1854 = scalar_select %p1828, %s1837, %s1767
      %s1855 = scalar_select %p1815, %s1853, %s1854
      %s1856 = smul.f32 %s1771, 0.64355
      %s1857 = sadd.f32 %s1856, 0.024064
      %s1858 = scalar_select %p1828, %s1838, %s1771
      %s1859 = scalar_select %p1815, %s1857, %s1858
      %s1860 = smul.f32 %s1775, -0.807392
      %s1861 = sadd.f32 %s1860, 0.46811
      %s1862 = scalar_select %p1828, %s1840, %s1775
      %s1863 = scalar_select %p1815, %s1861, %s1862
      %s1864 = scalar_select %p1815, %s1848, %s1776
      %p1865 = por %p1777, %p1815
      %p1866 = por %p1815, %p1828
      %s1867 = scalar_select %p1866, 1, 0
      %s1868 = sadd.s32 %s1780, %s1867
      %p1869 = por %p1787, %p1825
      %p1870 = por %p1782, %p1869
      %p1871 = por %p1783, %p1787
      %p1872 = pneg %p1870
      %p1873 = scmp.gt.s32.totalorder %s1868, 10000
      %p1874 = pnand %p1872, %p1873
      %p1875 = pneg %p1874
      %p1876 = pneg %p1875
      %p1877 = pnand %p1872, %p1876
      %p1878 = pneg %p1877
      %s1879 = smul.f32 %s1855, %s1855
      %s1880 = smul.f32 %s1859, %s1859
      %s1881 = sadd.f32 %s1879, %s1880
      %s1882 = smul.f32 %s1863, %s1863
      %s1883 = sadd.f32 %s1881, %s1882
      %v1884 = vstv %s1883
      %v1885 = vrsqrt.pop %v1884
      %v1886 = vmul.f32 %v1885, %v1884
      %v1887 = vmul.f32 %v1886, %v1885
      %v1888 = vmul.f32 0.5, %v1887
      %v1889 = vsub.f32 1.5, %v1888
      %v1890 = vmul.f32 %v1885, %v1889
      %v1891 = vmul.f32 %v1884, %v1890
      %vm1892 = vcmp.eq.f32.partialorder %v1884, inf
      %v1893 = vsel %vm1892, %v1884, %v1891
      %vm1894 = vcmp.eq.f32.partialorder %v1884, 0.0
      %v1895 = vand.u32 %v1884, 2147483648
      %v1896 = vsel %vm1894, %v1895, %v1893
      %s1897 = vtos %v1896
      %p1898 = pneg %p1865
      %p1899 = scmp.lt.f32.partialorder %s1851, 0.0205
      %p1900 = pnand %p1898, %p1899
      %p1901 = pneg %p1900
      %p1902 = pnand %p1878, %p1901
      %p1903 = pneg %p1902
      %p1904 = pneg %p1901
      %p1905 = pnand %p1878, %p1904
      %p1906 = pneg %p1905
      %p1907 = scmp.gt.f32.partialorder %s1850, 3.0
      %p1908 = scmp.lt.f32.partialorder %s1851, 0.01985
      %p1909 = pnand %p1865, %p1908
      %p1910 = pneg %p1909
      %p1911 = por %p1907, %p1910
      %p1912 = pnand %p1906, %p1911
      %p1913 = pneg %p1912
      %p1914 = pneg %p1913
      %p1915 = pnand %p1906, %p1914
      %p1916 = pneg %p1915
      %s1917 = smul.f32 %s1897, 1.8e-05
      %s1918 = ssub.f32 1.0, %s1917
      %s1919 = smul.f32 %s1855, 0.0001
      %s1920 = sadd.f32 %s1849, %s1919
      %s1921 = smul.f32 %s1859, 0.0001
      %s1922 = sadd.f32 %s1850, %s1921
      %s1923 = smul.f32 %s1863, 0.0001
      %s1924 = sadd.f32 %s1851, %s1923
      %s1925 = smul.f32 %s1855, %s1918
      %s1926 = smul.f32 %s1859, %s1918
      %s1927 = smul.f32 %s1863, %s1918
      %s1928 = ssub.f32 %s1927, 0.00098015
      %s1929 = ssub.f32 %s28, %s1849
      %s1930 = ssub.f32 %s29, %s1850
      %s1931 = ssub.f32 %s30, %s1851
      %s1932 = smul.f32 %s1929, %s1929
      %s1933 = smul.f32 %s1930, %s1930
      %s1934 = sadd.f32 %s1932, %s1933
      %s1935 = smul.f32 %s1931, %s1931
      %s1936 = sadd.f32 %s1934, %s1935
      %s1937 = scalar_select %p1916, %s1920, %s1849
      %s1938 = scalar_select %p1916, %s1922, %s1850
      %s1939 = scalar_select %p1916, %s1924, %s1851
      %s1940 = smul.f32 %s1855, 0.648819
      %s1941 = sadd.f32 %s1940, 0.010491
      %s1942 = scalar_select %p1916, %s1925, %s1855
      %s1943 = scalar_select %p1903, %s1941, %s1942
      %s1944 = smul.f32 %s1859, 0.64355
      %s1945 = sadd.f32 %s1944, 0.024064
      %s1946 = scalar_select %p1916, %s1926, %s1859
      %s1947 = scalar_select %p1903, %s1945, %s1946
      %s1948 = smul.f32 %s1863, -0.807392
      %s1949 = sadd.f32 %s1948, 0.46811
      %s1950 = scalar_select %p1916, %s1928, %s1863
      %s1951 = scalar_select %p1903, %s1949, %s1950
      %s1952 = scalar_select %p1903, %s1936, %s1864
      %p1953 = por %p1865, %p1903
      %p1954 = por %p1903, %p1916
      %s1955 = scalar_select %p1954, 1, 0
      %s1956 = sadd.s32 %s1868, %s1955
      %p1957 = por %p1875, %p1913
      %p1958 = por %p1870, %p1957
      %p1959 = por %p1871, %p1875
      %p1960 = pneg %p1958
      %p1961 = scmp.gt.s32.totalorder %s1956, 10000
      %p1962 = pnand %p1960, %p1961
      %p1963 = pneg %p1962
      %p1964 = pneg %p1963
      %p1965 = pnand %p1960, %p1964
      %p1966 = pneg %p1965
      %s1967 = smul.f32 %s1943, %s1943
      %s1968 = smul.f32 %s1947, %s1947
      %s1969 = sadd.f32 %s1967, %s1968
      %s1970 = smul.f32 %s1951, %s1951
      %s1971 = sadd.f32 %s1969, %s1970
      %v1972 = vstv %s1971
      %v1973 = vrsqrt.pop %v1972
      %v1974 = vmul.f32 %v1973, %v1972
      %v1975 = vmul.f32 %v1974, %v1973
      %v1976 = vmul.f32 0.5, %v1975
      %v1977 = vsub.f32 1.5, %v1976
      %v1978 = vmul.f32 %v1973, %v1977
      %v1979 = vmul.f32 %v1972, %v1978
      %vm1980 = vcmp.eq.f32.partialorder %v1972, inf
      %v1981 = vsel %vm1980, %v1972, %v1979
      %vm1982 = vcmp.eq.f32.partialorder %v1972, 0.0
      %v1983 = vand.u32 %v1972, 2147483648
      %v1984 = vsel %vm1982, %v1983, %v1981
      %s1985 = vtos %v1984
      %p1986 = pneg %p1953
      %p1987 = scmp.lt.f32.partialorder %s1939, 0.0205
      %p1988 = pnand %p1986, %p1987
      %p1989 = pneg %p1988
      %p1990 = pnand %p1966, %p1989
      %p1991 = pneg %p1990
      %p1992 = pneg %p1989
      %p1993 = pnand %p1966, %p1992
      %p1994 = pneg %p1993
      %p1995 = scmp.gt.f32.partialorder %s1938, 3.0
      %p1996 = scmp.lt.f32.partialorder %s1939, 0.01985
      %p1997 = pnand %p1953, %p1996
      %p1998 = pneg %p1997
      %p1999 = por %p1995, %p1998
      %p2000 = pnand %p1994, %p1999
      %p2001 = pneg %p2000
      %p2002 = pneg %p2001
      %p2003 = pnand %p1994, %p2002
      %p2004 = pneg %p2003
      %s2005 = smul.f32 %s1985, 1.8e-05
      %s2006 = ssub.f32 1.0, %s2005
      %s2007 = smul.f32 %s1943, 0.0001
      %s2008 = sadd.f32 %s1937, %s2007
      %s2009 = smul.f32 %s1947, 0.0001
      %s2010 = sadd.f32 %s1938, %s2009
      %s2011 = smul.f32 %s1951, 0.0001
      %s2012 = sadd.f32 %s1939, %s2011
      %s2013 = smul.f32 %s1943, %s2006
      %s2014 = smul.f32 %s1947, %s2006
      %s2015 = smul.f32 %s1951, %s2006
      %s2016 = ssub.f32 %s2015, 0.00098015
      %s2017 = ssub.f32 %s28, %s1937
      %s2018 = ssub.f32 %s29, %s1938
      %s2019 = ssub.f32 %s30, %s1939
      %s2020 = smul.f32 %s2017, %s2017
      %s2021 = smul.f32 %s2018, %s2018
      %s2022 = sadd.f32 %s2020, %s2021
      %s2023 = smul.f32 %s2019, %s2019
      %s2024 = sadd.f32 %s2022, %s2023
      %s2025 = scalar_select %p2004, %s2008, %s1937
      %s2026 = scalar_select %p2004, %s2010, %s1938
      %s2027 = scalar_select %p2004, %s2012, %s1939
      %s2028 = smul.f32 %s1943, 0.648819
      %s2029 = sadd.f32 %s2028, 0.010491
      %s2030 = scalar_select %p2004, %s2013, %s1943
      %s2031 = scalar_select %p1991, %s2029, %s2030
      %s2032 = smul.f32 %s1947, 0.64355
      %s2033 = sadd.f32 %s2032, 0.024064
      %s2034 = scalar_select %p2004, %s2014, %s1947
      %s2035 = scalar_select %p1991, %s2033, %s2034
      %s2036 = smul.f32 %s1951, -0.807392
      %s2037 = sadd.f32 %s2036, 0.46811
      %s2038 = scalar_select %p2004, %s2016, %s1951
      %s2039 = scalar_select %p1991, %s2037, %s2038
      %s2040 = scalar_select %p1991, %s2024, %s1952
      %p2041 = por %p1953, %p1991
      %p2042 = por %p1991, %p2004
      %s2043 = scalar_select %p2042, 1, 0
      %s2044 = sadd.s32 %s1956, %s2043
      %p2045 = por %p1963, %p2001
      %p2046 = por %p1958, %p2045
      %p2047 = por %p1959, %p1963
      %p2048 = pneg %p2046
      %p2049 = scmp.gt.s32.totalorder %s2044, 10000
      %p2050 = pnand %p2048, %p2049
      %p2051 = pneg %p2050
      %p2052 = pneg %p2051
      %p2053 = pnand %p2048, %p2052
      %p2054 = pneg %p2053
      %s2055 = smul.f32 %s2031, %s2031
      %s2056 = smul.f32 %s2035, %s2035
      %s2057 = sadd.f32 %s2055, %s2056
      %s2058 = smul.f32 %s2039, %s2039
      %s2059 = sadd.f32 %s2057, %s2058
      %v2060 = vstv %s2059
      %v2061 = vrsqrt.pop %v2060
      %v2062 = vmul.f32 %v2061, %v2060
      %v2063 = vmul.f32 %v2062, %v2061
      %v2064 = vmul.f32 0.5, %v2063
      %v2065 = vsub.f32 1.5, %v2064
      %v2066 = vmul.f32 %v2061, %v2065
      %v2067 = vmul.f32 %v2060, %v2066
      %vm2068 = vcmp.eq.f32.partialorder %v2060, inf
      %v2069 = vsel %vm2068, %v2060, %v2067
      %vm2070 = vcmp.eq.f32.partialorder %v2060, 0.0
      %v2071 = vand.u32 %v2060, 2147483648
      %v2072 = vsel %vm2070, %v2071, %v2069
      %s2073 = vtos %v2072
      %p2074 = pneg %p2041
      %p2075 = scmp.lt.f32.partialorder %s2027, 0.0205
      %p2076 = pnand %p2074, %p2075
      %p2077 = pneg %p2076
      %p2078 = pnand %p2054, %p2077
      %p2079 = pneg %p2078
      %p2080 = pneg %p2077
      %p2081 = pnand %p2054, %p2080
      %p2082 = pneg %p2081
      %p2083 = scmp.gt.f32.partialorder %s2026, 3.0
      %p2084 = scmp.lt.f32.partialorder %s2027, 0.01985
      %p2085 = pnand %p2041, %p2084
      %p2086 = pneg %p2085
      %p2087 = por %p2083, %p2086
      %p2088 = pnand %p2082, %p2087
      %p2089 = pneg %p2088
      %p2090 = pneg %p2089
      %p2091 = pnand %p2082, %p2090
      %p2092 = pneg %p2091
      %s2093 = smul.f32 %s2073, 1.8e-05
      %s2094 = ssub.f32 1.0, %s2093
      %s2095 = smul.f32 %s2031, 0.0001
      %s2096 = sadd.f32 %s2025, %s2095
      %s2097 = smul.f32 %s2035, 0.0001
      %s2098 = sadd.f32 %s2026, %s2097
      %s2099 = smul.f32 %s2039, 0.0001
      %s2100 = sadd.f32 %s2027, %s2099
      %s2101 = smul.f32 %s2031, %s2094
      %s2102 = smul.f32 %s2035, %s2094
      %s2103 = smul.f32 %s2039, %s2094
      %s2104 = ssub.f32 %s2103, 0.00098015
      %s2105 = ssub.f32 %s28, %s2025
      %s2106 = ssub.f32 %s29, %s2026
      %s2107 = ssub.f32 %s30, %s2027
      %s2108 = smul.f32 %s2105, %s2105
      %s2109 = smul.f32 %s2106, %s2106
      %s2110 = sadd.f32 %s2108, %s2109
      %s2111 = smul.f32 %s2107, %s2107
      %s2112 = sadd.f32 %s2110, %s2111
      %s2113 = scalar_select %p2092, %s2096, %s2025
      %s2114 = scalar_select %p2092, %s2098, %s2026
      %s2115 = scalar_select %p2092, %s2100, %s2027
      %s2116 = smul.f32 %s2031, 0.648819
      %s2117 = sadd.f32 %s2116, 0.010491
      %s2118 = scalar_select %p2092, %s2101, %s2031
      %s2119 = scalar_select %p2079, %s2117, %s2118
      %s2120 = smul.f32 %s2035, 0.64355
      %s2121 = sadd.f32 %s2120, 0.024064
      %s2122 = scalar_select %p2092, %s2102, %s2035
      %s2123 = scalar_select %p2079, %s2121, %s2122
      %s2124 = smul.f32 %s2039, -0.807392
      %s2125 = sadd.f32 %s2124, 0.46811
      %s2126 = scalar_select %p2092, %s2104, %s2039
      %s2127 = scalar_select %p2079, %s2125, %s2126
      %s2128 = scalar_select %p2079, %s2112, %s2040
      %p2129 = por %p2041, %p2079
      %p2130 = por %p2079, %p2092
      %s2131 = scalar_select %p2130, 1, 0
      %s2132 = sadd.s32 %s2044, %s2131
      %p2133 = por %p2051, %p2089
      %p2134 = por %p2046, %p2133
      %p2135 = por %p2047, %p2051
      %p2136 = pneg %p2134
      %p2137 = scmp.gt.s32.totalorder %s2132, 10000
      %p2138 = pnand %p2136, %p2137
      %p2139 = pneg %p2138
      %p2140 = pneg %p2139
      %p2141 = pnand %p2136, %p2140
      %p2142 = pneg %p2141
      %s2143 = smul.f32 %s2119, %s2119
      %s2144 = smul.f32 %s2123, %s2123
      %s2145 = sadd.f32 %s2143, %s2144
      %s2146 = smul.f32 %s2127, %s2127
      %s2147 = sadd.f32 %s2145, %s2146
      %v2148 = vstv %s2147
      %v2149 = vrsqrt.pop %v2148
      %v2150 = vmul.f32 %v2149, %v2148
      %v2151 = vmul.f32 %v2150, %v2149
      %v2152 = vmul.f32 0.5, %v2151
      %v2153 = vsub.f32 1.5, %v2152
      %v2154 = vmul.f32 %v2149, %v2153
      %v2155 = vmul.f32 %v2148, %v2154
      %vm2156 = vcmp.eq.f32.partialorder %v2148, inf
      %v2157 = vsel %vm2156, %v2148, %v2155
      %vm2158 = vcmp.eq.f32.partialorder %v2148, 0.0
      %v2159 = vand.u32 %v2148, 2147483648
      %v2160 = vsel %vm2158, %v2159, %v2157
      %s2161 = vtos %v2160
      %p2162 = pneg %p2129
      %p2163 = scmp.lt.f32.partialorder %s2115, 0.0205
      %p2164 = pnand %p2162, %p2163
      %p2165 = pneg %p2164
      %p2166 = pnand %p2142, %p2165
      %p2167 = pneg %p2166
      %p2168 = pneg %p2165
      %p2169 = pnand %p2142, %p2168
      %p2170 = pneg %p2169
      %p2171 = scmp.gt.f32.partialorder %s2114, 3.0
      %p2172 = scmp.lt.f32.partialorder %s2115, 0.01985
      %p2173 = pnand %p2129, %p2172
      %p2174 = pneg %p2173
      %p2175 = por %p2171, %p2174
      %p2176 = pnand %p2170, %p2175
      %p2177 = pneg %p2176
      %p2178 = pneg %p2177
      %p2179 = pnand %p2170, %p2178
      %p2180 = pneg %p2179
      %s2181 = smul.f32 %s2161, 1.8e-05
      %s2182 = ssub.f32 1.0, %s2181
      %s2183 = smul.f32 %s2119, 0.0001
      %s2184 = sadd.f32 %s2113, %s2183
      %s2185 = smul.f32 %s2123, 0.0001
      %s2186 = sadd.f32 %s2114, %s2185
      %s2187 = smul.f32 %s2127, 0.0001
      %s2188 = sadd.f32 %s2115, %s2187
      %s2189 = smul.f32 %s2119, %s2182
      %s2190 = smul.f32 %s2123, %s2182
      %s2191 = smul.f32 %s2127, %s2182
      %s2192 = ssub.f32 %s2191, 0.00098015
      %s2193 = ssub.f32 %s28, %s2113
      %s2194 = ssub.f32 %s29, %s2114
      %s2195 = ssub.f32 %s30, %s2115
      %s2196 = smul.f32 %s2193, %s2193
      %s2197 = smul.f32 %s2194, %s2194
      %s2198 = sadd.f32 %s2196, %s2197
      %s2199 = smul.f32 %s2195, %s2195
      %s2200 = sadd.f32 %s2198, %s2199
      %s2201 = scalar_select %p2180, %s2184, %s2113
      %s2202 = scalar_select %p2180, %s2186, %s2114
      %s2203 = scalar_select %p2180, %s2188, %s2115
      %s2204 = smul.f32 %s2119, 0.648819
      %s2205 = sadd.f32 %s2204, 0.010491
      %s2206 = scalar_select %p2180, %s2189, %s2119
      %s2207 = scalar_select %p2167, %s2205, %s2206
      %s2208 = smul.f32 %s2123, 0.64355
      %s2209 = sadd.f32 %s2208, 0.024064
      %s2210 = scalar_select %p2180, %s2190, %s2123
      %s2211 = scalar_select %p2167, %s2209, %s2210
      %s2212 = smul.f32 %s2127, -0.807392
      %s2213 = sadd.f32 %s2212, 0.46811
      %s2214 = scalar_select %p2180, %s2192, %s2127
      %s2215 = scalar_select %p2167, %s2213, %s2214
      %s2216 = scalar_select %p2167, %s2200, %s2128
      %p2217 = por %p2129, %p2167
      %p2218 = por %p2167, %p2180
      %s2219 = scalar_select %p2218, 1, 0
      %s2220 = sadd.s32 %s2132, %s2219
      %p2221 = por %p2139, %p2177
      %p2222 = por %p2134, %p2221
      %p2223 = por %p2135, %p2139
    $region28: #{tpu_custom_call.1} parent=1 // loop_footer
      _
    $region29: #{tpu_custom_call.1} parent=1 // loop_footer_branch
      %1505 = sbr.rel target = $region25
    $region30: #{tpu_custom_call.1} parent=1 // loop_exit
      _
    %s2224 = ssub.f32 %s1506, %s31
    %s2225 = ssub.f32 %s1507, %s32
    %s2226 = ssub.f32 %s1508, %s33
    %s2227 = smul.f32 %s2224, %s2224
    %s2228 = smul.f32 %s2225, %s2225
    %s2229 = sadd.f32 %s2227, %s2228
    %s2230 = smul.f32 %s2226, %s2226
    %s2231 = sadd.f32 %s2229, %s2230
    %v2232 = vstv %s2231
    %v2233 = vrsqrt.pop %v2232
    %v2234 = vmul.f32 %v2233, %v2232
    %v2235 = vmul.f32 %v2234, %v2233
    %v2236 = vmul.f32 0.5, %v2235
    %v2237 = vsub.f32 1.5, %v2236
    %v2238 = vmul.f32 %v2233, %v2237
    %v2239 = vmul.f32 %v2232, %v2238
    %vm2240 = vcmp.eq.f32.partialorder %v2232, inf
    %v2241 = vsel %vm2240, %v2232, %v2239
    %vm2242 = vcmp.eq.f32.partialorder %v2232, 0.0
    %v2243 = vand.u32 %v2232, 2147483648
    %v2244 = vsel %vm2242, %v2243, %v2241
    %s2245 = vtos %v2244
    %s2246 = scalar_lea.smem [#allocation5], 0
    %2247 = sst [smem:[%s2246]] %s2245
    %v2248 = vstv %s1514
    %v2249 = vrsqrt.pop %v2248
    %v2250 = vmul.f32 %v2249, %v2248
    %v2251 = vmul.f32 %v2250, %v2249
    %v2252 = vmul.f32 0.5, %v2251
    %v2253 = vsub.f32 1.5, %v2252
    %v2254 = vmul.f32 %v2249, %v2253
    %v2255 = vmul.f32 %v2248, %v2254
    %vm2256 = vcmp.eq.f32.partialorder %v2248, inf
    %v2257 = vsel %vm2256, %v2248, %v2255
    %vm2258 = vcmp.eq.f32.partialorder %v2248, 0.0
    %v2259 = vand.u32 %v2248, 2147483648
    %v2260 = vsel %vm2258, %v2259, %v2257
    %s2261 = vtos %v2260
    %s2262 = scalar_lea.smem [#allocation5], 1
    %2263 = sst [smem:[%s2262]] %s2261
    %s2264 = scvt.s32.f32 %s1513
    %s2265 = smul.f32 %s2264, 0.0001
    %s2266 = ssub.f32 %s2265, %s37
    %s2267 = sand.u32 2147483647, %s2266
    %s2268 = scalar_lea.smem [#allocation5], 2
    %2269 = sst [smem:[%s2268]] %s2267
    // Predicated region
    $region31: #{tpu_custom_call.1} parent=1 // pred_check
      _
    $region32: #{tpu_custom_call.1} parent=1 // pred_check_branch
      %2271 = sbr.rel (0) target = $region34
    $region33: #{tpu_custom_call.1} parent=1 // pred_region
      %2273 = vsyncadd [#allocation4], 0
      %s2275 = sshll.u32 %s1, 4
      %s2276 = int_to_ptr.hbm [resolvable:$true] %s2275
      %2278 = dma.smem_to_hbm [#allocation5], 16, %s2276, [#allocation4]
    $region34: #{tpu_custom_call.1} parent=1 // pred_fallthru
      _
    // Predicated region
    $region35: #{tpu_custom_call.1} parent=1 // pred_check
      _
    $region36: #{tpu_custom_call.1} parent=1 // pred_check_branch
      %2280 = sbr.rel (0) target = $region38
    $region37: #{tpu_custom_call.1} parent=1 // pred_region
      %2282 = dma.done [#allocation4], 16
    $region38: #{tpu_custom_call.1} parent=1 // pred_fallthru
      _
    %2283 = sfence
    %2284 = vsyncpa [#allocation3], 1
    %2285 = vsyncpa [#allocation4], 1

</llo_original>
